<compile_context>
chip_gen: v7x
topology: tpu7x:2x2x1
jax: 0.10.0
libtpu: 0.0.40
codegen_flags: <defaults>
</compile_context>

<pallas_src>
import jax
import jax.numpy as jnp
from jax.experimental import pallas as pl
from jax.experimental.pallas import tpu as pltpu

HIDDEN = 512        # self.hidden_dim
ENCODER_DIM = 2048  # transform_layer output is added to context => encoder_dim == 2048


def adaptive_attention_kernel(
    img_ref,      # (B, L, E)  f32   VMEM
    h_ref,        # (B, H)     f32   VMEM
    hw_ref,       # (H, 2H)    i8    VMEM   fused [U | sentinel_affine] weight (quantized)
    hs_ref,       # (1, 2H)    f32   VMEM   per-column dequant scale
    hb_ref,       # (1, 2H)    f32   VMEM   fused bias [Ub + Wb | Sb]
    ww_hbm,       # (E, H)     i8    HBM    W weight (quantized)
    ws_ref,       # (1, H)     f32   VMEM   per-column dequant scale
    tw_hbm,       # (H, E)     i8    HBM    transform_layer weight (quantized)
    ts_ref,       # (1, E)     f32   VMEM   per-column dequant scale
    tb_ref,       # (1, E)     f32   VMEM   transform_layer bias
    vw_ref,       # (1, H)     f32   VMEM   v weight (row vector)
    bw_ref,       # (1, H)     f32   VMEM   beta weight (row vector)
    scal_ref,     # (2,)       f32   SMEM   [v.bias, beta.bias]
    ctx_ref,      # (B, E)     f32   VMEM   output
    alpha_ref,    # (B, L)     f32   VMEM   output
    ww_buf,       # (E, H)     i8    VMEM   scratch (manual DMA target)
    tw_buf,       # (H, E)     i8    VMEM   scratch (manual DMA target)
    dma_sem):     # DMA((2,))
  f32 = jnp.float32
  bf16 = jnp.bfloat16
  B, L, E = img_ref.shape
  H = h_ref.shape[-1]

  # Kick off the two big weight DMAs immediately; they overlap with the
  # h-side projection, gate and softmax compute below.
  ww_cp = pltpu.make_async_copy(ww_hbm, ww_buf, dma_sem.at[0])
  tw_cp = pltpu.make_async_copy(tw_hbm, tw_buf, dma_sem.at[1])
  ww_cp.start()
  tw_cp.start()

  img = img_ref[...]                                             # (B, L, E) f32
  h = h_ref[...]                                                 # (B, H)    f32

  # --- fused h-side projections: [U(h) | sentinel_affine(h)] in one matmul ---
  hp = (jnp.dot(h.astype(bf16), hw_ref[...].astype(bf16),
                preferred_element_type=f32)
        * hs_ref[...] + hb_ref[...])                             # (B, 2H)
  U_h = hp[:, :H]                                                # (B, H)  (has Ub + Wb folded in)
  V_g = hp[:, H:]                                                # (B, H)

  # --- sentinel gate (VPU multiply + lane reduce; no N=1 matmul) ---
  v_b = scal_ref[0]
  beta_b = scal_ref[1]
  beta_logit = jnp.sum(h * bw_ref[...], axis=-1, keepdims=True) + beta_b   # (B, 1)
  g = jax.nn.sigmoid(beta_logit)                                           # (B, 1)
  sentinel = (g * V_g).astype(bf16)                                        # (B, H)

  # --- W projection of every region: single (B*L, E) @ (E, H) matmul ---
  ww_cp.wait()
  img_flat = img.reshape(B * L, E).astype(bf16)
  W_s = jnp.dot(img_flat, ww_buf[...].astype(bf16),
                preferred_element_type=f32) * ws_ref[...]        # (B*L, H), bias folded into hb
  att = jnp.tanh(W_s.reshape(B, L, H) + U_h[:, None, :])         # (B, L, H)

  # --- e = v(att): VPU multiply + lane reduce ---
  e = jnp.sum(att * vw_ref[...][None, :, :], axis=-1) + v_b      # (B, L)

  # --- softmax over [e_0 .. e_{L-1}, 0]; the appended zero logit is the sentinel ---
  m = jnp.maximum(jnp.max(e, axis=-1, keepdims=True), 0.0)       # (B, 1)
  p = jnp.exp(e - m)                                             # (B, L)
  p0 = jnp.exp(-m)                                               # (B, 1)
  inv_denom = pl.reciprocal(jnp.sum(p, axis=-1, keepdims=True) + p0,
                            approx=True)                          # (B, 1)
  alpha = p * inv_denom                                          # (B, L)
  alpha_s = p0 * inv_denom                                       # (B, 1)

  # --- transformed sentinel (needs tw) ---
  tw_cp.wait()
  sent_t = (jnp.dot(sentinel, tw_buf[...].astype(bf16),
                    preferred_element_type=f32)
            * ts_ref[...] + tb_ref[...])                          # (B, E)

  # --- context = sum_l alpha_l * img_l + alpha_sentinel * transformed sentinel ---
  # VPU multiply + sublane reduce (avoids the padded M=1/K=8 MXU einsum).
  ctx_img = jnp.sum(alpha[:, :, None] * img, axis=1)             # (B, E)
  ctx = ctx_img + alpha_s * sent_t                               # (B, E)

  ctx_ref[...] = ctx.astype(ctx_ref.dtype)
  alpha_ref[...] = alpha.astype(alpha_ref.dtype)


def _quantize_int8_per_col(w):
  """Symmetric per-output-channel int8 quantization; returns (q_int8, scale_f32 (1, out))."""
  amax = jnp.max(jnp.abs(w), axis=0, keepdims=True)
  scale = jnp.where(amax > 0, amax / 127.0, jnp.ones_like(amax))
  q = jnp.clip(jnp.round(w / scale), -127, 127).astype(jnp.int8)
  return q, scale.astype(jnp.float32)


def prepare_params(params):
  """One-time weight preparation (fuse, fold biases, quantize, cast).

  Called ONCE at init; the per-call forward only forwards these device arrays,
  so no weight re-casting / re-concatenation HBM traffic happens per call.
  """
  f32 = jnp.float32
  H = params["Uw"].shape[0]

  # Fuse the two h->H projections (U, sentinel_affine) into one lane-dense weight.
  hcat_w = jnp.concatenate([params["Uw"], params["Sw"]], axis=1)            # (H, 2H)
  hw_q, hw_s = _quantize_int8_per_col(hcat_w)
  # Fold the W bias into the U bias: att = tanh(img@Ww + h@Uw + (Ub + Wb)).
  hcat_b = jnp.concatenate([params["Ub"] + params["Wb"], params["Sb"]],
                           axis=1).astype(f32)                               # (1, 2H)

  ww_q, ww_s = _quantize_int8_per_col(params["Ww"])                          # (E, H)
  tw_q, tw_s = _quantize_int8_per_col(params["Tw"])                          # (H, E)

  prepped = dict(
      hw=hw_q, hs=hw_s, hb=hcat_b,
      ww=ww_q, ws=ww_s,
      tw=tw_q, ts=tw_s, tb=params["Tb"].astype(f32),
      vw=params["vw"].reshape(1, H).astype(f32),
      bw=params["bw"].reshape(1, H).astype(f32),
      scal=jnp.stack([params["vb"].reshape(()),
                      params["bb"].reshape(())]).astype(f32),
  )
  return jax.tree_util.tree_map(jax.block_until_ready, prepped)


def adaptive_attention(img_features, hidden_state, prepped):
  """img_features: (B, L, E) f32, hidden_state: (B, H) f32, prepped: prepare_params(...)."""
  B, L, E = img_features.shape
  H = hidden_state.shape[-1]
  assert H == HIDDEN and E == ENCODER_DIM
  f32 = jnp.float32

  vspec = pl.BlockSpec(memory_space=pltpu.MemorySpace.VMEM)
  sspec = pl.BlockSpec(memory_space=pltpu.MemorySpace.SMEM)
  anyspec = pl.BlockSpec(memory_space=pl.ANY)   # stays in HBM; manual DMA in kernel

  ctx, alpha = pl.pallas_call(
      adaptive_attention_kernel,
      out_shape=[
          jax.ShapeDtypeStruct((B, E), f32),
          jax.ShapeDtypeStruct((B, L), f32),
      ],
      in_specs=[
          vspec,            # img_features
          vspec,            # hidden_state
          vspec, vspec, vspec,   # fused h-projection weight (i8) / scale / bias
          anyspec, vspec,        # W weight (i8, HBM) / scale
          anyspec, vspec, vspec, # transform weight (i8, HBM) / scale / bias
          vspec,            # v weight row
          vspec,            # beta weight row
          sspec,            # [v.bias, beta.bias] scalars in SMEM
      ],
      out_specs=[vspec, vspec],
      scratch_shapes=[
          pltpu.VMEM((E, H), jnp.int8),       # ww double for manual DMA
          pltpu.VMEM((H, E), jnp.int8),       # tw double for manual DMA
          pltpu.SemaphoreType.DMA((2,)),
      ],
      compiler_params=pltpu.CompilerParams(vmem_limit_bytes=32 * 1024 * 1024),
  )(img_features.astype(f32), hidden_state.astype(f32),
    prepped["hw"], prepped["hs"], prepped["hb"],
    prepped["ww"], prepped["ws"],
    prepped["tw"], prepped["ts"], prepped["tb"],
    prepped["vw"], prepped["bw"], prepped["scal"])
  return ctx, alpha


def init_params(key, encoder_dim=ENCODER_DIM, hidden=HIDDEN, scale=0.02):
  """Deterministic synthetic weights, stored as (in_features, out_features), f32."""
  ks = jax.random.split(key, 12)
  f32 = jnp.float32
  def w(k, shape):
    return (scale * jax.random.normal(k, shape)).astype(f32)
  return {
      "Uw": w(ks[0], (hidden, hidden)),       "Ub": w(ks[1], (1, hidden)),
      "Ww": w(ks[2], (encoder_dim, hidden)),  "Wb": w(ks[3], (1, hidden)),
      "Sw": w(ks[4], (hidden, hidden)),       "Sb": w(ks[5], (1, hidden)),
      "vw": w(ks[6], (hidden, 1)),            "vb": w(ks[7], (1, 1)),
      "bw": w(ks[8], (hidden, 1)),            "bb": w(ks[9], (1, 1)),
      "Tw": w(ks[10], (hidden, encoder_dim)), "Tb": w(ks[11], (1, encoder_dim)),
  }


def reference(img, h, p):
  """Pure-JAX f32 reproduction of the PyTorch forward (sanity check)."""
  U_h = h @ p["Uw"] + p["Ub"][0]
  W_s = img @ p["Ww"] + p["Wb"][0]
  V_g = h @ p["Sw"] + p["Sb"][0]
  att = jnp.tanh(W_s + U_h[:, None, :])
  e = (att @ p["vw"])[..., 0] + p["vb"][0, 0]
  g = jax.nn.sigmoid(h @ p["bw"] + p["bb"][0])
  sentinel = g * V_g
  sent_t = sentinel @ p["Tw"] + p["Tb"][0]
  ext = jnp.concatenate([e, jnp.zeros((e.shape[0], 1), e.dtype)], axis=1)
  alpha_full = jax.nn.softmax(ext, axis=1)
  alpha = alpha_full[:, :-1]
  alpha_s = alpha_full[:, -1:]
  context = (img * alpha[:, :, None]).sum(1) + alpha_s * sent_t
  return context, alpha


if __name__ == "__main__":
  B, L = 2, 8
  key = jax.random.PRNGKey(0)
  k_img, k_h, k_params = jax.random.split(key, 3)

  img_features = jax.random.normal(k_img, (B, L, ENCODER_DIM), dtype=jnp.float32)
  hidden_state = jax.random.normal(k_h, (B, HIDDEN), dtype=jnp.float32)
  params = init_params(k_params)

  # One-time weight prep (fuse / fold biases / int8-quantize); NOT per forward call.
  prepped = prepare_params(params)

  context, alpha = adaptive_attention(img_features, hidden_state, prepped)
  context = jax.block_until_ready(context)
  alpha = jax.block_until_ready(alpha)

  # Sanity check against the pure-JAX f32 reference (tolerance covers
  # int8 weights + bf16 activations).
  ref_ctx, ref_alpha = reference(img_features, hidden_state, params)
  assert context.shape == (B, ENCODER_DIM) and alpha.shape == (B, L)
  assert bool(jnp.all(jnp.isfinite(context))) and bool(jnp.all(jnp.isfinite(alpha)))
  assert bool(jnp.allclose(context, ref_ctx, rtol=5e-2, atol=5e-2))
  assert bool(jnp.allclose(alpha, ref_alpha, rtol=5e-2, atol=5e-2))

  print("KERNEL_OK")
</pallas_src>

<mosaic_0001>
module attributes {stable_mosaic.version = 11 : i64} {
  func.func @adaptive_attention_kernel(%arg0: memref<2x8x2048xf32, #tpu.memory_space<vmem>>, %arg1: memref<2x512xf32, #tpu.memory_space<vmem>>, %arg2: memref<512x1024xi8, #tpu.memory_space<vmem>>, %arg3: memref<1x1024xf32, #tpu.memory_space<vmem>>, %arg4: memref<1x1024xf32, #tpu.memory_space<vmem>>, %arg5: memref<2048x512xi8, #tpu.memory_space<any>>, %arg6: memref<1x512xf32, #tpu.memory_space<vmem>>, %arg7: memref<512x2048xi8, #tpu.memory_space<any>>, %arg8: memref<1x2048xf32, #tpu.memory_space<vmem>>, %arg9: memref<1x2048xf32, #tpu.memory_space<vmem>>, %arg10: memref<1x512xf32, #tpu.memory_space<vmem>>, %arg11: memref<1x512xf32, #tpu.memory_space<vmem>>, %arg12: memref<2xf32, #tpu.memory_space<smem>>, %arg13: memref<2x2048xf32, #tpu.memory_space<vmem>>, %arg14: memref<2x8xf32, #tpu.memory_space<vmem>>, %arg15: memref<2048x512xi8, #tpu.memory_space<vmem>>, %arg16: memref<512x2048xi8, #tpu.memory_space<vmem>>, %arg17: memref<2x!tpu.dma_semaphore, #tpu.memory_space<semaphore_mem>>) attributes {dimension_semantics = [], scalar_prefetch = 0 : i64, scratch_operands = 3 : i64, tpu.core_type = #tpu.core_type<tc>} {
    %c0_i32 = arith.constant 0 : i32
    %0 = tpu.memref_slice %arg17[%c0_i32] : memref<2x!tpu.dma_semaphore, #tpu.memory_space<semaphore_mem>> -> memref<1x!tpu.dma_semaphore, #tpu.memory_space<semaphore_mem>>
    %1 = tpu.memref_squeeze %0 : memref<1x!tpu.dma_semaphore, #tpu.memory_space<semaphore_mem>> -> memref<!tpu.dma_semaphore, #tpu.memory_space<semaphore_mem>>
    tpu.enqueue_dma source(%arg5 : memref<2048x512xi8, #tpu.memory_space<any>>) target(%arg15 : memref<2048x512xi8, #tpu.memory_space<vmem>>) target_semaphore(%1 : memref<!tpu.dma_semaphore, #tpu.memory_space<semaphore_mem>>)
    %c1_i32 = arith.constant 1 : i32
    %2 = tpu.memref_slice %arg17[%c1_i32] : memref<2x!tpu.dma_semaphore, #tpu.memory_space<semaphore_mem>> -> memref<1x!tpu.dma_semaphore, #tpu.memory_space<semaphore_mem>>
    %3 = tpu.memref_squeeze %2 : memref<1x!tpu.dma_semaphore, #tpu.memory_space<semaphore_mem>> -> memref<!tpu.dma_semaphore, #tpu.memory_space<semaphore_mem>>
    tpu.enqueue_dma source(%arg7 : memref<512x2048xi8, #tpu.memory_space<any>>) target(%arg16 : memref<512x2048xi8, #tpu.memory_space<vmem>>) target_semaphore(%3 : memref<!tpu.dma_semaphore, #tpu.memory_space<semaphore_mem>>)
    %c0 = arith.constant 0 : index
    %c0_0 = arith.constant 0 : index
    %c0_1 = arith.constant 0 : index
    %4 = vector.load %arg0[%c0, %c0_0, %c0_1] : memref<2x8x2048xf32, #tpu.memory_space<vmem>>, vector<2x8x2048xf32>
    %c0_2 = arith.constant 0 : index
    %c0_3 = arith.constant 0 : index
    %5 = vector.load %arg1[%c0_2, %c0_3] : memref<2x512xf32, #tpu.memory_space<vmem>>, vector<2x512xf32>
    %6 = arith.truncf %5 : vector<2x512xf32> to vector<2x512xbf16>
    %c0_4 = arith.constant 0 : index
    %c0_5 = arith.constant 0 : index
    %7 = vector.load %arg2[%c0_4, %c0_5] : memref<512x1024xi8, #tpu.memory_space<vmem>>, vector<512x1024xi8>
    %8 = arith.sitofp %7 : vector<512x1024xi8> to vector<512x1024xbf16>
    %cst = arith.constant dense<0.000000e+00> : vector<2x1024xf32>
    %9 = tpu.matmul %6, %8, %cst {dimension_numbers = #tpu.dot_dimension_numbers<[1], [0], [0], [1], [0, 0, 1, 1], [], []>} : vector<2x512xbf16>, vector<512x1024xbf16>, vector<2x1024xf32> -> vector<2x1024xf32>
    %c0_6 = arith.constant 0 : index
    %c0_7 = arith.constant 0 : index
    %10 = vector.load %arg3[%c0_6, %c0_7] : memref<1x1024xf32, #tpu.memory_space<vmem>>, vector<1x1024xf32>
    %11 = vector.broadcast %10 : vector<1x1024xf32> to vector<2x1024xf32>
    %12 = arith.mulf %9, %11 : vector<2x1024xf32>
    %c0_8 = arith.constant 0 : index
    %c0_9 = arith.constant 0 : index
    %13 = vector.load %arg4[%c0_8, %c0_9] : memref<1x1024xf32, #tpu.memory_space<vmem>>, vector<1x1024xf32>
    %14 = vector.broadcast %13 : vector<1x1024xf32> to vector<2x1024xf32>
    %15 = arith.addf %12, %14 : vector<2x1024xf32>
    %16 = vector.extract_strided_slice %15 {offsets = [0, 0], sizes = [2, 512], strides = [1, 1]} : vector<2x1024xf32> to vector<2x512xf32>
    %17 = vector.extract_strided_slice %15 {offsets = [0, 512], sizes = [2, 512], strides = [1, 1]} : vector<2x1024xf32> to vector<2x512xf32>
    %c0_10 = arith.constant 0 : index
    %18 = memref.load %arg12[%c0_10] : memref<2xf32, #tpu.memory_space<smem>>
    %c1 = arith.constant 1 : index
    %19 = memref.load %arg12[%c1] : memref<2xf32, #tpu.memory_space<smem>>
    %c0_11 = arith.constant 0 : index
    %c0_12 = arith.constant 0 : index
    %20 = vector.load %arg11[%c0_11, %c0_12] : memref<1x512xf32, #tpu.memory_space<vmem>>, vector<1x512xf32>
    %21 = vector.broadcast %20 : vector<1x512xf32> to vector<2x512xf32>
    %22 = arith.mulf %5, %21 : vector<2x512xf32>
    %cst_13 = arith.constant dense<0.000000e+00> : vector<2xf32>
    %23 = vector.multi_reduction <add>, %22, %cst_13 [1] : vector<2x512xf32> to vector<2xf32>
    %24 = vector.shape_cast %23 : vector<2xf32> to vector<2x1xf32>
    %25 = vector.broadcast %19 : f32 to vector<2x1xf32>
    %26 = arith.addf %24, %25 : vector<2x1xf32>
    %27 = arith.negf %26 : vector<2x1xf32>
    %28 = math.exp %27 : vector<2x1xf32>
    %cst_14 = arith.constant 1.000000e+00 : f32
    %29 = vector.broadcast %cst_14 : f32 to vector<2x1xf32>
    %30 = arith.addf %29, %28 : vector<2x1xf32>
    %31 = arith.divf %29, %30 : vector<2x1xf32>
    %32 = vector.broadcast %31 : vector<2x1xf32> to vector<2x512xf32>
    %33 = arith.mulf %32, %17 : vector<2x512xf32>
    %34 = arith.truncf %33 : vector<2x512xf32> to vector<2x512xbf16>
    %c0_i32_15 = arith.constant 0 : i32
    %35 = tpu.memref_slice %arg17[%c0_i32_15] : memref<2x!tpu.dma_semaphore, #tpu.memory_space<semaphore_mem>> -> memref<1x!tpu.dma_semaphore, #tpu.memory_space<semaphore_mem>>
    %36 = tpu.memref_squeeze %35 : memref<1x!tpu.dma_semaphore, #tpu.memory_space<semaphore_mem>> -> memref<!tpu.dma_semaphore, #tpu.memory_space<semaphore_mem>>
    tpu.wait_dma2 semaphore(%36 : memref<!tpu.dma_semaphore, #tpu.memory_space<semaphore_mem>>) src(%arg5 : memref<2048x512xi8, #tpu.memory_space<any>>) dst(%arg15 : memref<2048x512xi8, #tpu.memory_space<vmem>>)
    %37 = vector.shape_cast %4 : vector<2x8x2048xf32> to vector<16x2048xf32>
    %38 = arith.truncf %37 : vector<16x2048xf32> to vector<16x2048xbf16>
    %c0_16 = arith.constant 0 : index
    %c0_17 = arith.constant 0 : index
    %39 = vector.load %arg15[%c0_16, %c0_17] : memref<2048x512xi8, #tpu.memory_space<vmem>>, vector<2048x512xi8>
    %40 = arith.sitofp %39 : vector<2048x512xi8> to vector<2048x512xbf16>
    %cst_18 = arith.constant dense<0.000000e+00> : vector<16x512xf32>
    %41 = tpu.matmul %38, %40, %cst_18 {dimension_numbers = #tpu.dot_dimension_numbers<[1], [0], [0], [1], [0, 0, 1, 1], [], []>} : vector<16x2048xbf16>, vector<2048x512xbf16>, vector<16x512xf32> -> vector<16x512xf32>
    %c0_19 = arith.constant 0 : index
    %c0_20 = arith.constant 0 : index
    %42 = vector.load %arg6[%c0_19, %c0_20] : memref<1x512xf32, #tpu.memory_space<vmem>>, vector<1x512xf32>
    %43 = vector.broadcast %42 : vector<1x512xf32> to vector<16x512xf32>
    %44 = arith.mulf %41, %43 : vector<16x512xf32>
    %45 = vector.shape_cast %44 : vector<16x512xf32> to vector<2x8x512xf32>
    %46 = vector.shape_cast %16 : vector<2x512xf32> to vector<2x1x512xf32>
    %47 = vector.broadcast %46 : vector<2x1x512xf32> to vector<2x8x512xf32>
    %48 = arith.addf %45, %47 : vector<2x8x512xf32>
    %49 = math.tanh %48 : vector<2x8x512xf32>
    %c0_21 = arith.constant 0 : index
    %c0_22 = arith.constant 0 : index
    %50 = vector.load %arg10[%c0_21, %c0_22] : memref<1x512xf32, #tpu.memory_space<vmem>>, vector<1x512xf32>
    %51 = vector.shape_cast %50 : vector<1x512xf32> to vector<1x1x512xf32>
    %52 = vector.broadcast %51 : vector<1x1x512xf32> to vector<2x8x512xf32>
    %53 = arith.mulf %49, %52 : vector<2x8x512xf32>
    %cst_23 = arith.constant dense<0.000000e+00> : vector<2x8xf32>
    %54 = vector.multi_reduction <add>, %53, %cst_23 [2] : vector<2x8x512xf32> to vector<2x8xf32>
    %55 = vector.broadcast %18 : f32 to vector<2x8xf32>
    %56 = arith.addf %54, %55 : vector<2x8xf32>
    %cst_24 = arith.constant dense<0xFF800000> : vector<2xf32>
    %57 = vector.multi_reduction <maximumf>, %56, %cst_24 [1] : vector<2x8xf32> to vector<2xf32>
    %58 = vector.shape_cast %57 : vector<2xf32> to vector<2x1xf32>
    %cst_25 = arith.constant 0.000000e+00 : f32
    %59 = vector.broadcast %cst_25 : f32 to vector<2x1xf32>
    %60 = arith.maximumf %58, %59 : vector<2x1xf32>
    %61 = vector.broadcast %60 : vector<2x1xf32> to vector<2x8xf32>
    %62 = arith.subf %56, %61 : vector<2x8xf32>
    %63 = math.exp %62 : vector<2x8xf32>
    %cst_26 = arith.constant 0.000000e+00 : f32
    %64 = vector.broadcast %cst_26 : f32 to vector<2x1xf32>
    %65 = arith.subf %64, %60 : vector<2x1xf32>
    %66 = math.exp %65 : vector<2x1xf32>
    %cst_27 = arith.constant dense<0.000000e+00> : vector<2xf32>
    %67 = vector.multi_reduction <add>, %63, %cst_27 [1] : vector<2x8xf32> to vector<2xf32>
    %68 = vector.shape_cast %67 : vector<2xf32> to vector<2x1xf32>
    %69 = arith.addf %68, %66 : vector<2x1xf32>
    %70 = tpu.reciprocal %69 {approx = true} : vector<2x1xf32> -> vector<2x1xf32>
    %71 = vector.broadcast %70 : vector<2x1xf32> to vector<2x8xf32>
    %72 = arith.mulf %63, %71 : vector<2x8xf32>
    %73 = arith.mulf %66, %70 : vector<2x1xf32>
    %c1_i32_28 = arith.constant 1 : i32
    %74 = tpu.memref_slice %arg17[%c1_i32_28] : memref<2x!tpu.dma_semaphore, #tpu.memory_space<semaphore_mem>> -> memref<1x!tpu.dma_semaphore, #tpu.memory_space<semaphore_mem>>
    %75 = tpu.memref_squeeze %74 : memref<1x!tpu.dma_semaphore, #tpu.memory_space<semaphore_mem>> -> memref<!tpu.dma_semaphore, #tpu.memory_space<semaphore_mem>>
    tpu.wait_dma2 semaphore(%75 : memref<!tpu.dma_semaphore, #tpu.memory_space<semaphore_mem>>) src(%arg7 : memref<512x2048xi8, #tpu.memory_space<any>>) dst(%arg16 : memref<512x2048xi8, #tpu.memory_space<vmem>>)
    %c0_29 = arith.constant 0 : index
    %c0_30 = arith.constant 0 : index
    %76 = vector.load %arg16[%c0_29, %c0_30] : memref<512x2048xi8, #tpu.memory_space<vmem>>, vector<512x2048xi8>
    %77 = arith.sitofp %76 : vector<512x2048xi8> to vector<512x2048xbf16>
    %cst_31 = arith.constant dense<0.000000e+00> : vector<2x2048xf32>
    %78 = tpu.matmul %34, %77, %cst_31 {dimension_numbers = #tpu.dot_dimension_numbers<[1], [0], [0], [1], [0, 0, 1, 1], [], []>} : vector<2x512xbf16>, vector<512x2048xbf16>, vector<2x2048xf32> -> vector<2x2048xf32>
    %c0_32 = arith.constant 0 : index
    %c0_33 = arith.constant 0 : index
    %79 = vector.load %arg8[%c0_32, %c0_33] : memref<1x2048xf32, #tpu.memory_space<vmem>>, vector<1x2048xf32>
    %80 = vector.broadcast %79 : vector<1x2048xf32> to vector<2x2048xf32>
    %81 = arith.mulf %78, %80 : vector<2x2048xf32>
    %c0_34 = arith.constant 0 : index
    %c0_35 = arith.constant 0 : index
    %82 = vector.load %arg9[%c0_34, %c0_35] : memref<1x2048xf32, #tpu.memory_space<vmem>>, vector<1x2048xf32>
    %83 = vector.broadcast %82 : vector<1x2048xf32> to vector<2x2048xf32>
    %84 = arith.addf %81, %83 : vector<2x2048xf32>
    %85 = vector.shape_cast %72 : vector<2x8xf32> to vector<2x8x1xf32>
    %86 = vector.broadcast %85 : vector<2x8x1xf32> to vector<2x8x2048xf32>
    %87 = arith.mulf %86, %4 : vector<2x8x2048xf32>
    %cst_36 = arith.constant dense<0.000000e+00> : vector<2x2048xf32>
    %88 = vector.multi_reduction <add>, %87, %cst_36 [1] : vector<2x8x2048xf32> to vector<2x2048xf32>
    %89 = vector.broadcast %73 : vector<2x1xf32> to vector<2x2048xf32>
    %90 = arith.mulf %89, %84 : vector<2x2048xf32>
    %91 = arith.addf %88, %90 : vector<2x2048xf32>
    %c0_37 = arith.constant 0 : index
    %c0_38 = arith.constant 0 : index
    %92 = vector.load %arg13[%c0_37, %c0_38] : memref<2x2048xf32, #tpu.memory_space<vmem>>, vector<2x2048xf32>
    tpu.vector_store %arg13[%c0_37, %c0_38], %91 {strides = array<i32>} : memref<2x2048xf32, #tpu.memory_space<vmem>>, vector<2x2048xf32>,
    %c0_39 = arith.constant 0 : index
    %c0_40 = arith.constant 0 : index
    %93 = vector.load %arg14[%c0_39, %c0_40] : memref<2x8xf32, #tpu.memory_space<vmem>>, vector<2x8xf32>
    tpu.vector_store %arg14[%c0_39, %c0_40], %72 {strides = array<i32>} : memref<2x8xf32, #tpu.memory_space<vmem>>, vector<2x8xf32>,
    return
  }
}

</mosaic_0001>

<llo_original>
// kernel: tpu_custom_call.1
$region0: #{tpu_custom_call.1}
  #allocation0 [shape = 'u32[]', space=smem, size = 0x4, offset = 0x4, fixed_abs, tag = 'smem constant byte address 0x4 - core index']
  #allocation1 [shape = 'u32[144,128]{1,0:T(1,128)}', space=vmem, size = 0x12000, scoped, tag = 'internal scratch']
  #allocation2 [shape = 's8[2048,512]{1,0:T(32,128)(4,1)}', space=vmem, size = 0x100000, scoped, tag = 'scratch operand']
  #allocation3 [shape = 's8[512,2048]{1,0:T(32,128)(4,1)}', space=vmem, size = 0x100000, scoped, tag = 'scratch operand']
  #allocation4 [shape = 's32[2]{0}', space=sflag, size = 0x8, scoped, tag = 'scratch operand']
  #allocation21 [shape = 's32[]', space=sflag, size = 0x4, offset = 0, fixed_abs, tag = 'sflag constant byte address 0x0 - dummy sync flag']
  #allocation22 [shape = 's32[]', space=sflag, size = 0x4, offset = 0, fixed_abs, tag = 'sflag constant byte address 0x0 - dummy sync flag']
  #allocation23 [shape = 'u32[]', space=smem, size = 0x4, offset = 0x44, fixed_abs, tag = 'smem constant byte address 0x44 - assertion arg 0']
  #allocation24 [shape = 'u32[]', space=smem, size = 0x4, offset = 0x48, fixed_abs, tag = 'smem constant byte address 0x48 - assertion arg 1']
  #allocation25 [shape = 's32[]', space=sflag, size = 0x4, offset = 0, fixed_abs, tag = 'sflag constant byte address 0x0 - dummy sync flag']
  #allocation26 [shape = 's32[]', space=sflag, size = 0x4, offset = 0, fixed_abs, tag = 'sflag constant byte address 0x0 - dummy sync flag']
  %s0 = inlined_call_operand.hbm [shape: f32[2,8,2048], index: 0, kind: input, shape index: {}]
  %s1 = inlined_call_operand.hbm [shape: f32[2,512], index: 1, kind: input, shape index: {}]
  %s2 = inlined_call_operand.hbm [shape: s8[512,1024], index: 2, kind: input, shape index: {}]
  %s3 = inlined_call_operand.hbm [shape: f32[1,1024], index: 3, kind: input, shape index: {}]
  %s4 = inlined_call_operand.hbm [shape: f32[1,1024], index: 4, kind: input, shape index: {}]
  %s5 = inlined_call_operand.hbm [shape: s8[2048,512], index: 5, kind: input, shape index: {}]
  %s6 = inlined_call_operand.hbm [shape: f32[1,512], index: 6, kind: input, shape index: {}]
  %s7 = inlined_call_operand.hbm [shape: s8[512,2048], index: 7, kind: input, shape index: {}]
  %s8 = inlined_call_operand.vmem [shape: f32[1,2048], index: 8, kind: input, shape index: {}]
  %s9 = inlined_call_operand.vmem [shape: f32[1,2048], index: 9, kind: input, shape index: {}]
  %s10 = inlined_call_operand.vmem [shape: f32[1,512], index: 10, kind: input, shape index: {}]
  %s11 = inlined_call_operand.vmem [shape: f32[1,512], index: 11, kind: input, shape index: {}]
  %s12 = inlined_call_operand.vmem [shape: f32[2], index: 12, kind: input, shape index: {}]
  %s13 = inlined_call_operand.hbm [shape: f32[2,2048], index: 13, kind: output, shape index: {0}]
  %s14 = inlined_call_operand.hbm [shape: f32[2,8], index: 14, kind: output, shape index: {1}]
  %15 = xla_tuple %s13, %s14
  %s16 = sld [smem:[#allocation0]]
  $region98: #{tpu_custom_call.1} parent=0
    _
  %s18 = ssub.s32 1, %s16
  %s19 = scalar_select 0, %s18, %s16
  $region1: #{tpu_custom_call.1} parent=0
    #allocation5 [shape = 'u8[131072]{0}', space=vmem, size = 0x20000, scoped, tag = 'input window, operand 0, single buffered']
    #allocation6 [shape = 's32[1]{0}', space=sflag, size = 0x4, scoped, tag = 'scoped memory for tpu_custom_call.1']
    #allocation7 [shape = 's32[1]{0}', space=sflag, size = 0x4, scoped, tag = 'scoped memory for tpu_custom_call.1']
    #allocation8 [shape = 's32[1]{0}', space=sflag, size = 0x4, scoped, tag = 'scoped memory for tpu_custom_call.1']
    #allocation9 [shape = 'u8[4096]{0}', space=vmem, size = 0x1000, scoped, tag = 'input window, operand 1, single buffered']
    #allocation10 [shape = 's32[1]{0}', space=sflag, size = 0x4, scoped, tag = 'scoped memory for tpu_custom_call.1']
    #allocation11 [shape = 'u8[524288]{0}', space=vmem, size = 0x80000, scoped, tag = 'input window, operand 2, single buffered']
    #allocation12 [shape = 'u8[4096]{0}', space=vmem, size = 0x1000, scoped, tag = 'input window, operand 3, single buffered']
    #allocation13 [shape = 's32[1]{0}', space=sflag, size = 0x4, scoped, tag = 'scoped memory for tpu_custom_call.1']
    #allocation14 [shape = 'u8[4096]{0}', space=vmem, size = 0x1000, scoped, tag = 'input window, operand 4, single buffered']
    #allocation15 [shape = 'u8[2048]{0}', space=vmem, size = 0x800, scoped, tag = 'input window, operand 6, single buffered']
    #allocation16 [shape = 's32[1]{0}', space=sflag, size = 0x4, scoped, tag = 'scoped memory for tpu_custom_call.1']
    #allocation17 [shape = 'u8[512]{0}', space=smem, size = 0x200, scoped, tag = 'input window, operand 12, single buffered']
    #allocation18 [shape = 'u8[16384]{0}', space=vmem, size = 0x4000, scoped, tag = 'output window, operand 0, single buffered']
    #allocation19 [shape = 'u8[1024]{0}', space=vmem, size = 0x400, scoped, tag = 'output window, operand 1, single buffered']
    #allocation20 [shape = 's32[1]{0}', space=sflag, size = 0x4, scoped, tag = 'scoped memory for tpu_custom_call.1']
    %20 = vsyncpa [#allocation6], 0
    %21 = vsyncpa [#allocation10], 0
    %22 = vsyncpa [#allocation13], 0
    %23 = vsyncpa [#allocation16], 0
    %24 = vsyncpa [#allocation8], 0
    %25 = vsyncpa [#allocation7], 0
    %26 = vsyncpa [#allocation20], 0
    // Predicated region
    $region2: #{tpu_custom_call.1} parent=1 // pred_check
      _
    $region3: #{tpu_custom_call.1} parent=1 // pred_check_branch
      %28 = sbr.rel (0) target = $region5
    $region4: #{tpu_custom_call.1} parent=1 // pred_region
      %s30 = ssub.s32 4096, 4096
      %31 = vsyncadd [#allocation6], %s30
      %s32 = sshll.u32 [#allocation5], 4
      %s33 = int_to_ptr.vmem [resolvable:$true] %s32
      %38 = dma.hbm_to_vmem [thread:$0]  %s0, 4096, %s33, [#allocation6], 2048, 2048, 128
    $region5: #{tpu_custom_call.1} parent=1 // pred_fallthru
      _
    // Predicated region
    $region6: #{tpu_custom_call.1} parent=1 // pred_check
      _
    $region7: #{tpu_custom_call.1} parent=1 // pred_check_branch
      %40 = sbr.rel (0) target = $region9
    $region8: #{tpu_custom_call.1} parent=1 // pred_region
      %s42 = ssub.s32 128, 128
      %43 = vsyncadd [#allocation10], %s42
      %s45 = sshll.u32 [#allocation9], 4
      %s46 = int_to_ptr.vmem [resolvable:$true] %s45
      %48 = dma.hbm_to_vmem [thread:$0]  %s1, 128, %s46, [#allocation10]
    $region9: #{tpu_custom_call.1} parent=1 // pred_fallthru
      _
    // Predicated region
    $region10: #{tpu_custom_call.1} parent=1 // pred_check
      _
    $region11: #{tpu_custom_call.1} parent=1 // pred_check_branch
      %50 = sbr.rel (0) target = $region13
    $region12: #{tpu_custom_call.1} parent=1 // pred_region
      %s52 = ssub.s32 16384, 16384
      %53 = vsyncadd [#allocation10], %s52
      %s54 = sshll.u32 [#allocation11], 4
      %s55 = int_to_ptr.vmem [resolvable:$true] %s54
      %60 = dma.hbm_to_vmem [thread:$0]  %s2, 16384, %s55, [#allocation10], 1024, 1024, 64
    $region13: #{tpu_custom_call.1} parent=1 // pred_fallthru
      _
    // Predicated region
    $region14: #{tpu_custom_call.1} parent=1 // pred_check
      _
    $region15: #{tpu_custom_call.1} parent=1 // pred_check_branch
      %62 = sbr.rel (0) target = $region17
    $region16: #{tpu_custom_call.1} parent=1 // pred_region
      %s64 = ssub.s32 128, 128
      %65 = vsyncadd [#allocation13], %s64
      %s67 = sshll.u32 [#allocation12], 4
      %s68 = int_to_ptr.vmem [resolvable:$true] %s67
      %70 = dma.hbm_to_vmem [thread:$0]  %s3, 128, %s68, [#allocation13]
    $region17: #{tpu_custom_call.1} parent=1 // pred_fallthru
      _
    // Predicated region
    $region18: #{tpu_custom_call.1} parent=1 // pred_check
      _
    $region19: #{tpu_custom_call.1} parent=1 // pred_check_branch
      %72 = sbr.rel (0) target = $region21
    $region20: #{tpu_custom_call.1} parent=1 // pred_region
      %s74 = ssub.s32 128, 128
      %75 = vsyncadd [#allocation13], %s74
      %s77 = sshll.u32 [#allocation14], 4
      %s78 = int_to_ptr.vmem [resolvable:$true] %s77
      %80 = dma.hbm_to_vmem [thread:$0]  %s4, 128, %s78, [#allocation13]
    $region21: #{tpu_custom_call.1} parent=1 // pred_fallthru
      _
    // Predicated region
    $region22: #{tpu_custom_call.1} parent=1 // pred_check
      _
    $region23: #{tpu_custom_call.1} parent=1 // pred_check_branch
      %82 = sbr.rel (0) target = $region25
    $region24: #{tpu_custom_call.1} parent=1 // pred_region
      %s84 = ssub.s32 64, 64
      %85 = vsyncadd [#allocation16], %s84
      %s87 = sshll.u32 [#allocation15], 4
      %s88 = int_to_ptr.vmem [resolvable:$true] %s87
      %90 = dma.hbm_to_vmem [thread:$0]  %s6, 64, %s88, [#allocation16]
    $region25: #{tpu_custom_call.1} parent=1 // pred_fallthru
      _
    // Predicated region
    $region26: #{tpu_custom_call.1} parent=1 // pred_check
      _
    $region27: #{tpu_custom_call.1} parent=1 // pred_check_branch
      %92 = sbr.rel (0) target = $region29
    $region28: #{tpu_custom_call.1} parent=1 // pred_region
      _
    $region29: #{tpu_custom_call.1} parent=1 // pred_fallthru
      _
    // Predicated region
    $region30: #{tpu_custom_call.1} parent=1 // pred_check
      _
    $region31: #{tpu_custom_call.1} parent=1 // pred_check_branch
      %94 = sbr.rel (0) target = $region33
    $region32: #{tpu_custom_call.1} parent=1 // pred_region
      _
    $region33: #{tpu_custom_call.1} parent=1 // pred_fallthru
      _
    // Predicated region
    $region34: #{tpu_custom_call.1} parent=1 // pred_check
      _
    $region35: #{tpu_custom_call.1} parent=1 // pred_check_branch
      %96 = sbr.rel (0) target = $region37
    $region36: #{tpu_custom_call.1} parent=1 // pred_region
      _
    $region37: #{tpu_custom_call.1} parent=1 // pred_fallthru
      _
    // Predicated region
    $region38: #{tpu_custom_call.1} parent=1 // pred_check
      _
    $region39: #{tpu_custom_call.1} parent=1 // pred_check_branch
      %98 = sbr.rel (0) target = $region41
    $region40: #{tpu_custom_call.1} parent=1 // pred_region
      _
    $region41: #{tpu_custom_call.1} parent=1 // pred_fallthru
      _
    // Predicated region
    $region42: #{tpu_custom_call.1} parent=1 // pred_check
      _
    $region43: #{tpu_custom_call.1} parent=1 // pred_check_branch
      %100 = sbr.rel (0) target = $region45
    $region44: #{tpu_custom_call.1} parent=1 // pred_region
      %s102 = ssub.s32 16, 16
      %103 = vsyncadd [#allocation8], %s102
      %s105 = sshll.u32 %s12, 4
      %s106 = int_to_ptr.vmem [resolvable:$true] %s105
      %108 = dma.vmem_to_smem %s106, 16, [#allocation17], [#allocation8]
    $region45: #{tpu_custom_call.1} parent=1 // pred_fallthru
      _
    // Predicated region
    $region46: #{tpu_custom_call.1} parent=1 // pred_check
      _
    $region47: #{tpu_custom_call.1} parent=1 // pred_check_branch
      %110 = sbr.rel (0) target = $region49
    $region48: #{tpu_custom_call.1} parent=1 // pred_region
      %111 = dma.done [#allocation6], 4096
    $region49: #{tpu_custom_call.1} parent=1 // pred_fallthru
      _
    // Predicated region
    $region50: #{tpu_custom_call.1} parent=1 // pred_check
      _
    $region51: #{tpu_custom_call.1} parent=1 // pred_check_branch
      %113 = sbr.rel (0) target = $region53
    $region52: #{tpu_custom_call.1} parent=1 // pred_region
      %114 = dma.done [#allocation10], 128
    $region53: #{tpu_custom_call.1} parent=1 // pred_fallthru
      _
    // Predicated region
    $region54: #{tpu_custom_call.1} parent=1 // pred_check
      _
    $region55: #{tpu_custom_call.1} parent=1 // pred_check_branch
      %116 = sbr.rel (0) target = $region57
    $region56: #{tpu_custom_call.1} parent=1 // pred_region
      %117 = dma.done [#allocation10], 16384
    $region57: #{tpu_custom_call.1} parent=1 // pred_fallthru
      _
    // Predicated region
    $region58: #{tpu_custom_call.1} parent=1 // pred_check
      _
    $region59: #{tpu_custom_call.1} parent=1 // pred_check_branch
      %119 = sbr.rel (0) target = $region61
    $region60: #{tpu_custom_call.1} parent=1 // pred_region
      %120 = dma.done [#allocation13], 128
    $region61: #{tpu_custom_call.1} parent=1 // pred_fallthru
      _
    // Predicated region
    $region62: #{tpu_custom_call.1} parent=1 // pred_check
      _
    $region63: #{tpu_custom_call.1} parent=1 // pred_check_branch
      %122 = sbr.rel (0) target = $region65
    $region64: #{tpu_custom_call.1} parent=1 // pred_region
      %123 = dma.done [#allocation13], 128
    $region65: #{tpu_custom_call.1} parent=1 // pred_fallthru
      _
    // Predicated region
    $region66: #{tpu_custom_call.1} parent=1 // pred_check
      _
    $region67: #{tpu_custom_call.1} parent=1 // pred_check_branch
      %125 = sbr.rel (0) target = $region69
    $region68: #{tpu_custom_call.1} parent=1 // pred_region
      %126 = dma.done [#allocation16], 64
    $region69: #{tpu_custom_call.1} parent=1 // pred_fallthru
      _
    // Predicated region
    $region70: #{tpu_custom_call.1} parent=1 // pred_check
      _
    $region71: #{tpu_custom_call.1} parent=1 // pred_check_branch
      %128 = sbr.rel (0) target = $region73
    $region72: #{tpu_custom_call.1} parent=1 // pred_region
      %129 = dma.done [#allocation8], 16
    $region73: #{tpu_custom_call.1} parent=1 // pred_fallthru
      _
    %130 = sfence
    // Predicated region
    $region74: #{tpu_custom_call.1} parent=1 // pred_check
      _
    $region75: #{tpu_custom_call.1} parent=1 // pred_check_branch
      %132 = sbr.rel target = $region77
    $region76: #{tpu_custom_call.1} parent=1 // pred_region
      %133 = sst [smem:[#allocation23]] [#allocation22]
      %134 = sst [smem:[#allocation24]] [#allocation21]
    $region77: #{tpu_custom_call.1} parent=1 // pred_fallthru
      _
    %136 = shalt.err (0)
    %s138 = sshll.u32 [#allocation2], 4
    %s139 = int_to_ptr.vmem [resolvable:$true] %s138
    %141 = dma.hbm_to_vmem [thread:$0]  %s5, 32768, %s139, [#allocation4]
    %s142 = scalar_lea.sflag [#allocation4], 1
    // Predicated region
    $region78: #{tpu_custom_call.1} parent=1 // pred_check
      _
    $region79: #{tpu_custom_call.1} parent=1 // pred_check_branch
      %144 = sbr.rel target = $region81
    $region80: #{tpu_custom_call.1} parent=1 // pred_region
      %145 = sst [smem:[#allocation23]] [#allocation26]
      %146 = sst [smem:[#allocation24]] [#allocation25]
    $region81: #{tpu_custom_call.1} parent=1 // pred_fallthru
      _
    %148 = shalt.err (0)
    %s150 = sshll.u32 [#allocation3], 4
    %s151 = int_to_ptr.vmem [resolvable:$true] %s150
    %153 = dma.hbm_to_vmem [thread:$0]  %s7, 32768, %s151, %s142
    %v154 = vld [vmem:[#allocation5] sm:$0xff]
    %v155 = vld [vmem:[#allocation5 + $0x8] sm:$0xff]
    %v156 = vld [vmem:[#allocation5 + $0x10] sm:$0xff]
    %v157 = vld [vmem:[#allocation5 + $0x18] sm:$0xff]
    %v158 = vld [vmem:[#allocation5 + $0x20] sm:$0xff]
    %v159 = vld [vmem:[#allocation5 + $0x28] sm:$0xff]
    %v160 = vld [vmem:[#allocation5 + $0x30] sm:$0xff]
    %v161 = vld [vmem:[#allocation5 + $0x38] sm:$0xff]
    %v162 = vld [vmem:[#allocation5 + $0x40] sm:$0xff]
    %v163 = vld [vmem:[#allocation5 + $0x48] sm:$0xff]
    %v164 = vld [vmem:[#allocation5 + $0x50] sm:$0xff]
    %v165 = vld [vmem:[#allocation5 + $0x58] sm:$0xff]
    %v166 = vld [vmem:[#allocation5 + $0x60] sm:$0xff]
    %v167 = vld [vmem:[#allocation5 + $0x68] sm:$0xff]
    %v168 = vld [vmem:[#allocation5 + $0x70] sm:$0xff]
    %v169 = vld [vmem:[#allocation5 + $0x78] sm:$0xff]
    %v170 = vld [vmem:[#allocation5 + $0x80] sm:$0xff]
    %v171 = vld [vmem:[#allocation5 + $0x88] sm:$0xff]
    %v172 = vld [vmem:[#allocation5 + $0x90] sm:$0xff]
    %v173 = vld [vmem:[#allocation5 + $0x98] sm:$0xff]
    %v174 = vld [vmem:[#allocation5 + $0xa0] sm:$0xff]
    %v175 = vld [vmem:[#allocation5 + $0xa8] sm:$0xff]
    %v176 = vld [vmem:[#allocation5 + $0xb0] sm:$0xff]
    %v177 = vld [vmem:[#allocation5 + $0xb8] sm:$0xff]
    %v178 = vld [vmem:[#allocation5 + $0xc0] sm:$0xff]
    %v179 = vld [vmem:[#allocation5 + $0xc8] sm:$0xff]
    %v180 = vld [vmem:[#allocation5 + $0xd0] sm:$0xff]
    %v181 = vld [vmem:[#allocation5 + $0xd8] sm:$0xff]
    %v182 = vld [vmem:[#allocation5 + $0xe0] sm:$0xff]
    %v183 = vld [vmem:[#allocation5 + $0xe8] sm:$0xff]
    %v184 = vld [vmem:[#allocation5 + $0xf0] sm:$0xff]
    %v185 = vld [vmem:[#allocation5 + $0xf8] sm:$0xff]
    %v186 = vld [vmem:[#allocation9] sm:$0xff]
    %v188 = vcombine.high %v186, %v186
    %v190 = vunpack.c.l.s4 1983009808
    %v191 = vunpack.c.0.s8 %v190
    %v192 = vlaneseq
    %v193 = vshrl.u32 %v192, 7
    %v194 = vsub.s32 %v191, %v193
    %v195 = vrot.slane %v186, %v194
    %v197 = vunpack.c.l.s4 1983009808
    %v198 = vunpack.c.0.s8 %v197
    %v199 = vlaneseq
    %v200 = vshrl.u32 %v199, 7
    %v201 = vsub.s32 %v198, %v200
    %v202 = vrot.slane %v188, %v201
    %v203 = vcombine.high %v195, %v195
    %v204 = vcombine.high %v202, %v202
    %v209 = vpack.c.bf16 %v195, %v195
    %v210 = vpack.c.bf16 %v203, %v203
    %v211 = vpack.c.bf16 %v202, %v202
    %v212 = vpack.c.bf16 %v204, %v204
    %v213 = vld [vmem:[#allocation11] sm:$0xff]
    %v214 = vld [vmem:[#allocation11 + $0x8] sm:$0xff]
    %v215 = vld [vmem:[#allocation11 + $0x10] sm:$0xff]
    %v216 = vld [vmem:[#allocation11 + $0x18] sm:$0xff]
    %v217 = vld [vmem:[#allocation11 + $0x20] sm:$0xff]
    %v218 = vld [vmem:[#allocation11 + $0x28] sm:$0xff]
    %v219 = vld [vmem:[#allocation11 + $0x30] sm:$0xff]
    %v220 = vld [vmem:[#allocation11 + $0x38] sm:$0xff]
    %v221 = vld [vmem:[#allocation11 + $0x40] sm:$0xff]
    %v222 = vld [vmem:[#allocation11 + $0x48] sm:$0xff]
    %v223 = vld [vmem:[#allocation11 + $0x50] sm:$0xff]
    %v224 = vld [vmem:[#allocation11 + $0x58] sm:$0xff]
    %v225 = vld [vmem:[#allocation11 + $0x60] sm:$0xff]
    %v226 = vld [vmem:[#allocation11 + $0x68] sm:$0xff]
    %v227 = vld [vmem:[#allocation11 + $0x70] sm:$0xff]
    %v228 = vld [vmem:[#allocation11 + $0x78] sm:$0xff]
    %v229 = vld [vmem:[#allocation11 + $0x80] sm:$0xff]
    %v230 = vld [vmem:[#allocation11 + $0x88] sm:$0xff]
    %v231 = vld [vmem:[#allocation11 + $0x90] sm:$0xff]
    %v232 = vld [vmem:[#allocation11 + $0x98] sm:$0xff]
    %v233 = vld [vmem:[#allocation11 + $0xa0] sm:$0xff]
    %v234 = vld [vmem:[#allocation11 + $0xa8] sm:$0xff]
    %v235 = vld [vmem:[#allocation11 + $0xb0] sm:$0xff]
    %v236 = vld [vmem:[#allocation11 + $0xb8] sm:$0xff]
    %v237 = vld [vmem:[#allocation11 + $0xc0] sm:$0xff]
    %v238 = vld [vmem:[#allocation11 + $0xc8] sm:$0xff]
    %v239 = vld [vmem:[#allocation11 + $0xd0] sm:$0xff]
    %v240 = vld [vmem:[#allocation11 + $0xd8] sm:$0xff]
    %v241 = vld [vmem:[#allocation11 + $0xe0] sm:$0xff]
    %v242 = vld [vmem:[#allocation11 + $0xe8] sm:$0xff]
    %v243 = vld [vmem:[#allocation11 + $0xf0] sm:$0xff]
    %v244 = vld [vmem:[#allocation11 + $0xf8] sm:$0xff]
    %v245 = vld [vmem:[#allocation11 + $0x100] sm:$0xff]
    %v246 = vld [vmem:[#allocation11 + $0x108] sm:$0xff]
    %v247 = vld [vmem:[#allocation11 + $0x110] sm:$0xff]
    %v248 = vld [vmem:[#allocation11 + $0x118] sm:$0xff]
    %v249 = vld [vmem:[#allocation11 + $0x120] sm:$0xff]
    %v250 = vld [vmem:[#allocation11 + $0x128] sm:$0xff]
    %v251 = vld [vmem:[#allocation11 + $0x130] sm:$0xff]
    %v252 = vld [vmem:[#allocation11 + $0x138] sm:$0xff]
    %v253 = vld [vmem:[#allocation11 + $0x140] sm:$0xff]
    %v254 = vld [vmem:[#allocation11 + $0x148] sm:$0xff]
    %v255 = vld [vmem:[#allocation11 + $0x150] sm:$0xff]
    %v256 = vld [vmem:[#allocation11 + $0x158] sm:$0xff]
    %v257 = vld [vmem:[#allocation11 + $0x160] sm:$0xff]
    %v258 = vld [vmem:[#allocation11 + $0x168] sm:$0xff]
    %v259 = vld [vmem:[#allocation11 + $0x170] sm:$0xff]
    %v260 = vld [vmem:[#allocation11 + $0x178] sm:$0xff]
    %v261 = vld [vmem:[#allocation11 + $0x180] sm:$0xff]
    %v262 = vld [vmem:[#allocation11 + $0x188] sm:$0xff]
    %v263 = vld [vmem:[#allocation11 + $0x190] sm:$0xff]
    %v264 = vld [vmem:[#allocation11 + $0x198] sm:$0xff]
    %v265 = vld [vmem:[#allocation11 + $0x1a0] sm:$0xff]
    %v266 = vld [vmem:[#allocation11 + $0x1a8] sm:$0xff]
    %v267 = vld [vmem:[#allocation11 + $0x1b0] sm:$0xff]
    %v268 = vld [vmem:[#allocation11 + $0x1b8] sm:$0xff]
    %v269 = vld [vmem:[#allocation11 + $0x1c0] sm:$0xff]
    %v270 = vld [vmem:[#allocation11 + $0x1c8] sm:$0xff]
    %v271 = vld [vmem:[#allocation11 + $0x1d0] sm:$0xff]
    %v272 = vld [vmem:[#allocation11 + $0x1d8] sm:$0xff]
    %v273 = vld [vmem:[#allocation11 + $0x1e0] sm:$0xff]
    %v274 = vld [vmem:[#allocation11 + $0x1e8] sm:$0xff]
    %v275 = vld [vmem:[#allocation11 + $0x1f0] sm:$0xff]
    %v276 = vld [vmem:[#allocation11 + $0x1f8] sm:$0xff]
    %v277 = vld [vmem:[#allocation11 + $0x200] sm:$0xff]
    %v278 = vld [vmem:[#allocation11 + $0x208] sm:$0xff]
    %v279 = vld [vmem:[#allocation11 + $0x210] sm:$0xff]
    %v280 = vld [vmem:[#allocation11 + $0x218] sm:$0xff]
    %v281 = vld [vmem:[#allocation11 + $0x220] sm:$0xff]
    %v282 = vld [vmem:[#allocation11 + $0x228] sm:$0xff]
    %v283 = vld [vmem:[#allocation11 + $0x230] sm:$0xff]
    %v284 = vld [vmem:[#allocation11 + $0x238] sm:$0xff]
    %v285 = vld [vmem:[#allocation11 + $0x240] sm:$0xff]
    %v286 = vld [vmem:[#allocation11 + $0x248] sm:$0xff]
    %v287 = vld [vmem:[#allocation11 + $0x250] sm:$0xff]
    %v288 = vld [vmem:[#allocation11 + $0x258] sm:$0xff]
    %v289 = vld [vmem:[#allocation11 + $0x260] sm:$0xff]
    %v290 = vld [vmem:[#allocation11 + $0x268] sm:$0xff]
    %v291 = vld [vmem:[#allocation11 + $0x270] sm:$0xff]
    %v292 = vld [vmem:[#allocation11 + $0x278] sm:$0xff]
    %v293 = vld [vmem:[#allocation11 + $0x280] sm:$0xff]
    %v294 = vld [vmem:[#allocation11 + $0x288] sm:$0xff]
    %v295 = vld [vmem:[#allocation11 + $0x290] sm:$0xff]
    %v296 = vld [vmem:[#allocation11 + $0x298] sm:$0xff]
    %v297 = vld [vmem:[#allocation11 + $0x2a0] sm:$0xff]
    %v298 = vld [vmem:[#allocation11 + $0x2a8] sm:$0xff]
    %v299 = vld [vmem:[#allocation11 + $0x2b0] sm:$0xff]
    %v300 = vld [vmem:[#allocation11 + $0x2b8] sm:$0xff]
    %v301 = vld [vmem:[#allocation11 + $0x2c0] sm:$0xff]
    %v302 = vld [vmem:[#allocation11 + $0x2c8] sm:$0xff]
    %v303 = vld [vmem:[#allocation11 + $0x2d0] sm:$0xff]
    %v304 = vld [vmem:[#allocation11 + $0x2d8] sm:$0xff]
    %v305 = vld [vmem:[#allocation11 + $0x2e0] sm:$0xff]
    %v306 = vld [vmem:[#allocation11 + $0x2e8] sm:$0xff]
    %v307 = vld [vmem:[#allocation11 + $0x2f0] sm:$0xff]
    %v308 = vld [vmem:[#allocation11 + $0x2f8] sm:$0xff]
    %v309 = vld [vmem:[#allocation11 + $0x300] sm:$0xff]
    %v310 = vld [vmem:[#allocation11 + $0x308] sm:$0xff]
    %v311 = vld [vmem:[#allocation11 + $0x310] sm:$0xff]
    %v312 = vld [vmem:[#allocation11 + $0x318] sm:$0xff]
    %v313 = vld [vmem:[#allocation11 + $0x320] sm:$0xff]
    %v314 = vld [vmem:[#allocation11 + $0x328] sm:$0xff]
    %v315 = vld [vmem:[#allocation11 + $0x330] sm:$0xff]
    %v316 = vld [vmem:[#allocation11 + $0x338] sm:$0xff]
    %v317 = vld [vmem:[#allocation11 + $0x340] sm:$0xff]
    %v318 = vld [vmem:[#allocation11 + $0x348] sm:$0xff]
    %v319 = vld [vmem:[#allocation11 + $0x350] sm:$0xff]
    %v320 = vld [vmem:[#allocation11 + $0x358] sm:$0xff]
    %v321 = vld [vmem:[#allocation11 + $0x360] sm:$0xff]
    %v322 = vld [vmem:[#allocation11 + $0x368] sm:$0xff]
    %v323 = vld [vmem:[#allocation11 + $0x370] sm:$0xff]
    %v324 = vld [vmem:[#allocation11 + $0x378] sm:$0xff]
    %v325 = vld [vmem:[#allocation11 + $0x380] sm:$0xff]
    %v326 = vld [vmem:[#allocation11 + $0x388] sm:$0xff]
    %v327 = vld [vmem:[#allocation11 + $0x390] sm:$0xff]
    %v328 = vld [vmem:[#allocation11 + $0x398] sm:$0xff]
    %v329 = vld [vmem:[#allocation11 + $0x3a0] sm:$0xff]
    %v330 = vld [vmem:[#allocation11 + $0x3a8] sm:$0xff]
    %v331 = vld [vmem:[#allocation11 + $0x3b0] sm:$0xff]
    %v332 = vld [vmem:[#allocation11 + $0x3b8] sm:$0xff]
    %v333 = vld [vmem:[#allocation11 + $0x3c0] sm:$0xff]
    %v334 = vld [vmem:[#allocation11 + $0x3c8] sm:$0xff]
    %v335 = vld [vmem:[#allocation11 + $0x3d0] sm:$0xff]
    %v336 = vld [vmem:[#allocation11 + $0x3d8] sm:$0xff]
    %v337 = vld [vmem:[#allocation11 + $0x3e0] sm:$0xff]
    %v338 = vld [vmem:[#allocation11 + $0x3e8] sm:$0xff]
    %v339 = vld [vmem:[#allocation11 + $0x3f0] sm:$0xff]
    %v340 = vld [vmem:[#allocation11 + $0x3f8] sm:$0xff]
    %v341 = vunpack.c.l.s8.bf16 %v213
    %v342 = vunpack.c.l.s8.bf16 %v214
    %v343 = vunpack.c.l.s8.bf16 %v215
    %v344 = vunpack.c.l.s8.bf16 %v216
    %v345 = vunpack.c.l.s8.bf16 %v217
    %v346 = vunpack.c.l.s8.bf16 %v218
    %v347 = vunpack.c.l.s8.bf16 %v219
    %v348 = vunpack.c.l.s8.bf16 %v220
    %v349 = vunpack.c.h.s8.bf16 %v213
    %v350 = vunpack.c.h.s8.bf16 %v214
    %v351 = vunpack.c.h.s8.bf16 %v215
    %v352 = vunpack.c.h.s8.bf16 %v216
    %v353 = vunpack.c.h.s8.bf16 %v217
    %v354 = vunpack.c.h.s8.bf16 %v218
    %v355 = vunpack.c.h.s8.bf16 %v219
    %v356 = vunpack.c.h.s8.bf16 %v220
    %v357 = vunpack.c.l.s8.bf16 %v221
    %v358 = vunpack.c.l.s8.bf16 %v222
    %v359 = vunpack.c.l.s8.bf16 %v223
    %v360 = vunpack.c.l.s8.bf16 %v224
    %v361 = vunpack.c.l.s8.bf16 %v225
    %v362 = vunpack.c.l.s8.bf16 %v226
    %v363 = vunpack.c.l.s8.bf16 %v227
    %v364 = vunpack.c.l.s8.bf16 %v228
    %v365 = vunpack.c.h.s8.bf16 %v221
    %v366 = vunpack.c.h.s8.bf16 %v222
    %v367 = vunpack.c.h.s8.bf16 %v223
    %v368 = vunpack.c.h.s8.bf16 %v224
    %v369 = vunpack.c.h.s8.bf16 %v225
    %v370 = vunpack.c.h.s8.bf16 %v226
    %v371 = vunpack.c.h.s8.bf16 %v227
    %v372 = vunpack.c.h.s8.bf16 %v228
    %v373 = vunpack.c.l.s8.bf16 %v229
    %v374 = vunpack.c.l.s8.bf16 %v230
    %v375 = vunpack.c.l.s8.bf16 %v231
    %v376 = vunpack.c.l.s8.bf16 %v232
    %v377 = vunpack.c.l.s8.bf16 %v233
    %v378 = vunpack.c.l.s8.bf16 %v234
    %v379 = vunpack.c.l.s8.bf16 %v235
    %v380 = vunpack.c.l.s8.bf16 %v236
    %v381 = vunpack.c.h.s8.bf16 %v229
    %v382 = vunpack.c.h.s8.bf16 %v230
    %v383 = vunpack.c.h.s8.bf16 %v231
    %v384 = vunpack.c.h.s8.bf16 %v232
    %v385 = vunpack.c.h.s8.bf16 %v233
    %v386 = vunpack.c.h.s8.bf16 %v234
    %v387 = vunpack.c.h.s8.bf16 %v235
    %v388 = vunpack.c.h.s8.bf16 %v236
    %v389 = vunpack.c.l.s8.bf16 %v237
    %v390 = vunpack.c.l.s8.bf16 %v238
    %v391 = vunpack.c.l.s8.bf16 %v239
    %v392 = vunpack.c.l.s8.bf16 %v240
    %v393 = vunpack.c.l.s8.bf16 %v241
    %v394 = vunpack.c.l.s8.bf16 %v242
    %v395 = vunpack.c.l.s8.bf16 %v243
    %v396 = vunpack.c.l.s8.bf16 %v244
    %v397 = vunpack.c.h.s8.bf16 %v237
    %v398 = vunpack.c.h.s8.bf16 %v238
    %v399 = vunpack.c.h.s8.bf16 %v239
    %v400 = vunpack.c.h.s8.bf16 %v240
    %v401 = vunpack.c.h.s8.bf16 %v241
    %v402 = vunpack.c.h.s8.bf16 %v242
    %v403 = vunpack.c.h.s8.bf16 %v243
    %v404 = vunpack.c.h.s8.bf16 %v244
    %v405 = vunpack.c.l.s8.bf16 %v245
    %v406 = vunpack.c.l.s8.bf16 %v246
    %v407 = vunpack.c.l.s8.bf16 %v247
    %v408 = vunpack.c.l.s8.bf16 %v248
    %v409 = vunpack.c.l.s8.bf16 %v249
    %v410 = vunpack.c.l.s8.bf16 %v250
    %v411 = vunpack.c.l.s8.bf16 %v251
    %v412 = vunpack.c.l.s8.bf16 %v252
    %v413 = vunpack.c.h.s8.bf16 %v245
    %v414 = vunpack.c.h.s8.bf16 %v246
    %v415 = vunpack.c.h.s8.bf16 %v247
    %v416 = vunpack.c.h.s8.bf16 %v248
    %v417 = vunpack.c.h.s8.bf16 %v249
    %v418 = vunpack.c.h.s8.bf16 %v250
    %v419 = vunpack.c.h.s8.bf16 %v251
    %v420 = vunpack.c.h.s8.bf16 %v252
    %v421 = vunpack.c.l.s8.bf16 %v253
    %v422 = vunpack.c.l.s8.bf16 %v254
    %v423 = vunpack.c.l.s8.bf16 %v255
    %v424 = vunpack.c.l.s8.bf16 %v256
    %v425 = vunpack.c.l.s8.bf16 %v257
    %v426 = vunpack.c.l.s8.bf16 %v258
    %v427 = vunpack.c.l.s8.bf16 %v259
    %v428 = vunpack.c.l.s8.bf16 %v260
    %v429 = vunpack.c.h.s8.bf16 %v253
    %v430 = vunpack.c.h.s8.bf16 %v254
    %v431 = vunpack.c.h.s8.bf16 %v255
    %v432 = vunpack.c.h.s8.bf16 %v256
    %v433 = vunpack.c.h.s8.bf16 %v257
    %v434 = vunpack.c.h.s8.bf16 %v258
    %v435 = vunpack.c.h.s8.bf16 %v259
    %v436 = vunpack.c.h.s8.bf16 %v260
    %v437 = vunpack.c.l.s8.bf16 %v261
    %v438 = vunpack.c.l.s8.bf16 %v262
    %v439 = vunpack.c.l.s8.bf16 %v263
    %v440 = vunpack.c.l.s8.bf16 %v264
    %v441 = vunpack.c.l.s8.bf16 %v265
    %v442 = vunpack.c.l.s8.bf16 %v266
    %v443 = vunpack.c.l.s8.bf16 %v267
    %v444 = vunpack.c.l.s8.bf16 %v268
    %v445 = vunpack.c.h.s8.bf16 %v261
    %v446 = vunpack.c.h.s8.bf16 %v262
    %v447 = vunpack.c.h.s8.bf16 %v263
    %v448 = vunpack.c.h.s8.bf16 %v264
    %v449 = vunpack.c.h.s8.bf16 %v265
    %v450 = vunpack.c.h.s8.bf16 %v266
    %v451 = vunpack.c.h.s8.bf16 %v267
    %v452 = vunpack.c.h.s8.bf16 %v268
    %v453 = vunpack.c.l.s8.bf16 %v269
    %v454 = vunpack.c.l.s8.bf16 %v270
    %v455 = vunpack.c.l.s8.bf16 %v271
    %v456 = vunpack.c.l.s8.bf16 %v272
    %v457 = vunpack.c.l.s8.bf16 %v273
    %v458 = vunpack.c.l.s8.bf16 %v274
    %v459 = vunpack.c.l.s8.bf16 %v275
    %v460 = vunpack.c.l.s8.bf16 %v276
    %v461 = vunpack.c.h.s8.bf16 %v269
    %v462 = vunpack.c.h.s8.bf16 %v270
    %v463 = vunpack.c.h.s8.bf16 %v271
    %v464 = vunpack.c.h.s8.bf16 %v272
    %v465 = vunpack.c.h.s8.bf16 %v273
    %v466 = vunpack.c.h.s8.bf16 %v274
    %v467 = vunpack.c.h.s8.bf16 %v275
    %v468 = vunpack.c.h.s8.bf16 %v276
    %v469 = vunpack.c.l.s8.bf16 %v277
    %v470 = vunpack.c.l.s8.bf16 %v278
    %v471 = vunpack.c.l.s8.bf16 %v279
    %v472 = vunpack.c.l.s8.bf16 %v280
    %v473 = vunpack.c.l.s8.bf16 %v281
    %v474 = vunpack.c.l.s8.bf16 %v282
    %v475 = vunpack.c.l.s8.bf16 %v283
    %v476 = vunpack.c.l.s8.bf16 %v284
    %v477 = vunpack.c.h.s8.bf16 %v277
    %v478 = vunpack.c.h.s8.bf16 %v278
    %v479 = vunpack.c.h.s8.bf16 %v279
    %v480 = vunpack.c.h.s8.bf16 %v280
    %v481 = vunpack.c.h.s8.bf16 %v281
    %v482 = vunpack.c.h.s8.bf16 %v282
    %v483 = vunpack.c.h.s8.bf16 %v283
    %v484 = vunpack.c.h.s8.bf16 %v284
    %v485 = vunpack.c.l.s8.bf16 %v285
    %v486 = vunpack.c.l.s8.bf16 %v286
    %v487 = vunpack.c.l.s8.bf16 %v287
    %v488 = vunpack.c.l.s8.bf16 %v288
    %v489 = vunpack.c.l.s8.bf16 %v289
    %v490 = vunpack.c.l.s8.bf16 %v290
    %v491 = vunpack.c.l.s8.bf16 %v291
    %v492 = vunpack.c.l.s8.bf16 %v292
    %v493 = vunpack.c.h.s8.bf16 %v285
    %v494 = vunpack.c.h.s8.bf16 %v286
    %v495 = vunpack.c.h.s8.bf16 %v287
    %v496 = vunpack.c.h.s8.bf16 %v288
    %v497 = vunpack.c.h.s8.bf16 %v289
    %v498 = vunpack.c.h.s8.bf16 %v290
    %v499 = vunpack.c.h.s8.bf16 %v291
    %v500 = vunpack.c.h.s8.bf16 %v292
    %v501 = vunpack.c.l.s8.bf16 %v293
    %v502 = vunpack.c.l.s8.bf16 %v294
    %v503 = vunpack.c.l.s8.bf16 %v295
    %v504 = vunpack.c.l.s8.bf16 %v296
    %v505 = vunpack.c.l.s8.bf16 %v297
    %v506 = vunpack.c.l.s8.bf16 %v298
    %v507 = vunpack.c.l.s8.bf16 %v299
    %v508 = vunpack.c.l.s8.bf16 %v300
    %v509 = vunpack.c.h.s8.bf16 %v293
    %v510 = vunpack.c.h.s8.bf16 %v294
    %v511 = vunpack.c.h.s8.bf16 %v295
    %v512 = vunpack.c.h.s8.bf16 %v296
    %v513 = vunpack.c.h.s8.bf16 %v297
    %v514 = vunpack.c.h.s8.bf16 %v298
    %v515 = vunpack.c.h.s8.bf16 %v299
    %v516 = vunpack.c.h.s8.bf16 %v300
    %v517 = vunpack.c.l.s8.bf16 %v301
    %v518 = vunpack.c.l.s8.bf16 %v302
    %v519 = vunpack.c.l.s8.bf16 %v303
    %v520 = vunpack.c.l.s8.bf16 %v304
    %v521 = vunpack.c.l.s8.bf16 %v305
    %v522 = vunpack.c.l.s8.bf16 %v306
    %v523 = vunpack.c.l.s8.bf16 %v307
    %v524 = vunpack.c.l.s8.bf16 %v308
    %v525 = vunpack.c.h.s8.bf16 %v301
    %v526 = vunpack.c.h.s8.bf16 %v302
    %v527 = vunpack.c.h.s8.bf16 %v303
    %v528 = vunpack.c.h.s8.bf16 %v304
    %v529 = vunpack.c.h.s8.bf16 %v305
    %v530 = vunpack.c.h.s8.bf16 %v306
    %v531 = vunpack.c.h.s8.bf16 %v307
    %v532 = vunpack.c.h.s8.bf16 %v308
    %v533 = vunpack.c.l.s8.bf16 %v309
    %v534 = vunpack.c.l.s8.bf16 %v310
    %v535 = vunpack.c.l.s8.bf16 %v311
    %v536 = vunpack.c.l.s8.bf16 %v312
    %v537 = vunpack.c.l.s8.bf16 %v313
    %v538 = vunpack.c.l.s8.bf16 %v314
    %v539 = vunpack.c.l.s8.bf16 %v315
    %v540 = vunpack.c.l.s8.bf16 %v316
    %v541 = vunpack.c.h.s8.bf16 %v309
    %v542 = vunpack.c.h.s8.bf16 %v310
    %v543 = vunpack.c.h.s8.bf16 %v311
    %v544 = vunpack.c.h.s8.bf16 %v312
    %v545 = vunpack.c.h.s8.bf16 %v313
    %v546 = vunpack.c.h.s8.bf16 %v314
    %v547 = vunpack.c.h.s8.bf16 %v315
    %v548 = vunpack.c.h.s8.bf16 %v316
    %v549 = vunpack.c.l.s8.bf16 %v317
    %v550 = vunpack.c.l.s8.bf16 %v318
    %v551 = vunpack.c.l.s8.bf16 %v319
    %v552 = vunpack.c.l.s8.bf16 %v320
    %v553 = vunpack.c.l.s8.bf16 %v321
    %v554 = vunpack.c.l.s8.bf16 %v322
    %v555 = vunpack.c.l.s8.bf16 %v323
    %v556 = vunpack.c.l.s8.bf16 %v324
    %v557 = vunpack.c.h.s8.bf16 %v317
    %v558 = vunpack.c.h.s8.bf16 %v318
    %v559 = vunpack.c.h.s8.bf16 %v319
    %v560 = vunpack.c.h.s8.bf16 %v320
    %v561 = vunpack.c.h.s8.bf16 %v321
    %v562 = vunpack.c.h.s8.bf16 %v322
    %v563 = vunpack.c.h.s8.bf16 %v323
    %v564 = vunpack.c.h.s8.bf16 %v324
    %v565 = vunpack.c.l.s8.bf16 %v325
    %v566 = vunpack.c.l.s8.bf16 %v326
    %v567 = vunpack.c.l.s8.bf16 %v327
    %v568 = vunpack.c.l.s8.bf16 %v328
    %v569 = vunpack.c.l.s8.bf16 %v329
    %v570 = vunpack.c.l.s8.bf16 %v330
    %v571 = vunpack.c.l.s8.bf16 %v331
    %v572 = vunpack.c.l.s8.bf16 %v332
    %v573 = vunpack.c.h.s8.bf16 %v325
    %v574 = vunpack.c.h.s8.bf16 %v326
    %v575 = vunpack.c.h.s8.bf16 %v327
    %v576 = vunpack.c.h.s8.bf16 %v328
    %v577 = vunpack.c.h.s8.bf16 %v329
    %v578 = vunpack.c.h.s8.bf16 %v330
    %v579 = vunpack.c.h.s8.bf16 %v331
    %v580 = vunpack.c.h.s8.bf16 %v332
    %v581 = vunpack.c.l.s8.bf16 %v333
    %v582 = vunpack.c.l.s8.bf16 %v334
    %v583 = vunpack.c.l.s8.bf16 %v335
    %v584 = vunpack.c.l.s8.bf16 %v336
    %v585 = vunpack.c.l.s8.bf16 %v337
    %v586 = vunpack.c.l.s8.bf16 %v338
    %v587 = vunpack.c.l.s8.bf16 %v339
    %v588 = vunpack.c.l.s8.bf16 %v340
    %v589 = vunpack.c.h.s8.bf16 %v333
    %v590 = vunpack.c.h.s8.bf16 %v334
    %v591 = vunpack.c.h.s8.bf16 %v335
    %v592 = vunpack.c.h.s8.bf16 %v336
    %v593 = vunpack.c.h.s8.bf16 %v337
    %v594 = vunpack.c.h.s8.bf16 %v338
    %v595 = vunpack.c.h.s8.bf16 %v339
    %v596 = vunpack.c.h.s8.bf16 %v340
    %597 = vmatprep.subr.bf16.mxu0 %v342
    %598 = vmatpush1.bf16.msra.mxu0 %v341
    %599 = vmatprep.subr.bf16.mxu0 %v350
    %600 = vmatpush1.bf16.msra.mxu0 %v349
    %601 = vmatprep.subr.bf16.mxu0 %v358
    %602 = vmatpush1.bf16.msra.mxu0 %v357
    %603 = vmatprep.subr.bf16.mxu0 %v366
    %604 = vmatpush1.bf16.msra.mxu0 %v365
    %605 = vmatprep.subr.bf16.mxu0 %v374
    %606 = vmatpush1.bf16.msra.mxu0 %v373
    %607 = vmatprep.subr.bf16.mxu0 %v382
    %608 = vmatpush1.bf16.msra.mxu0 %v381
    %609 = vmatprep.subr.bf16.mxu0 %v390
    %610 = vmatpush1.bf16.msra.mxu0 %v389
    %611 = vmatprep.subr.bf16.mxu0 %v398
    %612 = vmatpush1.bf16.msra.mxu0 %v397
    %613 = vmatprep.subr.bf16.mxu0 %v406
    %614 = vmatpush1.bf16.msra.mxu0 %v405
    %615 = vmatprep.subr.bf16.mxu0 %v414
    %616 = vmatpush1.bf16.msra.mxu0 %v413
    %617 = vmatprep.subr.bf16.mxu0 %v422
    %618 = vmatpush1.bf16.msra.mxu0 %v421
    %619 = vmatprep.subr.bf16.mxu0 %v430
    %620 = vmatpush1.bf16.msra.mxu0 %v429
    %621 = vmatprep.subr.bf16.mxu0 %v438
    %622 = vmatpush1.bf16.msra.mxu0 %v437
    %623 = vmatprep.subr.bf16.mxu0 %v446
    %624 = vmatpush1.bf16.msra.mxu0 %v445
    %625 = vmatprep.subr.bf16.mxu0 %v454
    %626 = vmatpush1.bf16.msra.mxu0 %v453
    %627 = vmatprep.subr.bf16.mxu0 %v462
    %628 = vmatpush1.bf16.msra.mxu0 %v461
    %629 = vmatprep.mubr.bf16.mxu0 %v210
    %630 = vmatmul.mubr.bf16.gmra.mrb[0].mxu0 %v209
    %v631 = vpop.f32.mrb[0].mxu0
    %v632 = vadd.f32 0.0, %v631
    %v633 = vpop.f32.mrb[0].mxu0
    %v634 = vadd.f32 0.0, %v633
    %v635 = vpop.f32.mrb[0].mxu0
    %v636 = vpop.f32.mrb[0].mxu0
    %637 = vdwg.mxu0
    %638 = vmatprep.subr.bf16.mxu0 %v470
    %639 = vmatpush1.bf16.msra.mxu0 %v469
    %640 = vmatprep.subr.bf16.mxu0 %v478
    %641 = vmatpush1.bf16.msra.mxu0 %v477
    %642 = vmatprep.subr.bf16.mxu0 %v486
    %643 = vmatpush1.bf16.msra.mxu0 %v485
    %644 = vmatprep.subr.bf16.mxu0 %v494
    %645 = vmatpush1.bf16.msra.mxu0 %v493
    %646 = vmatprep.subr.bf16.mxu0 %v502
    %647 = vmatpush1.bf16.msra.mxu0 %v501
    %648 = vmatprep.subr.bf16.mxu0 %v510
    %649 = vmatpush1.bf16.msra.mxu0 %v509
    %650 = vmatprep.subr.bf16.mxu0 %v518
    %651 = vmatpush1.bf16.msra.mxu0 %v517
    %652 = vmatprep.subr.bf16.mxu0 %v526
    %653 = vmatpush1.bf16.msra.mxu0 %v525
    %654 = vmatprep.subr.bf16.mxu0 %v534
    %655 = vmatpush1.bf16.msra.mxu0 %v533
    %656 = vmatprep.subr.bf16.mxu0 %v542
    %657 = vmatpush1.bf16.msra.mxu0 %v541
    %658 = vmatprep.subr.bf16.mxu0 %v550
    %659 = vmatpush1.bf16.msra.mxu0 %v549
    %660 = vmatprep.subr.bf16.mxu0 %v558
    %661 = vmatpush1.bf16.msra.mxu0 %v557
    %662 = vmatprep.subr.bf16.mxu0 %v566
    %663 = vmatpush1.bf16.msra.mxu0 %v565
    %664 = vmatprep.subr.bf16.mxu0 %v574
    %665 = vmatpush1.bf16.msra.mxu0 %v573
    %666 = vmatprep.subr.bf16.mxu0 %v582
    %667 = vmatpush1.bf16.msra.mxu0 %v581
    %668 = vmatprep.subr.bf16.mxu0 %v590
    %669 = vmatpush1.bf16.msra.mxu0 %v589
    %670 = vmatprep.mubr.bf16.mxu0 %v212
    %671 = vmatmul.mubr.bf16.gmra.mrb[0].mxu0 %v211
    %v672 = vpop.f32.mrb[0].mxu0
    %v673 = vadd.f32 %v632, %v672
    %v674 = vpop.f32.mrb[0].mxu0
    %v675 = vadd.f32 %v634, %v674
    %v676 = vpop.f32.mrb[0].mxu0
    %v677 = vpop.f32.mrb[0].mxu0
    %678 = vdwg.mxu0
    %679 = vmatprep.subr.bf16.mxu0 %v344
    %680 = vmatpush1.bf16.msra.mxu0 %v343
    %681 = vmatprep.subr.bf16.mxu0 %v352
    %682 = vmatpush1.bf16.msra.mxu0 %v351
    %683 = vmatprep.subr.bf16.mxu0 %v360
    %684 = vmatpush1.bf16.msra.mxu0 %v359
    %685 = vmatprep.subr.bf16.mxu0 %v368
    %686 = vmatpush1.bf16.msra.mxu0 %v367
    %687 = vmatprep.subr.bf16.mxu0 %v376
    %688 = vmatpush1.bf16.msra.mxu0 %v375
    %689 = vmatprep.subr.bf16.mxu0 %v384
    %690 = vmatpush1.bf16.msra.mxu0 %v383
    %691 = vmatprep.subr.bf16.mxu0 %v392
    %692 = vmatpush1.bf16.msra.mxu0 %v391
    %693 = vmatprep.subr.bf16.mxu0 %v400
    %694 = vmatpush1.bf16.msra.mxu0 %v399
    %695 = vmatprep.subr.bf16.mxu0 %v408
    %696 = vmatpush1.bf16.msra.mxu0 %v407
    %697 = vmatprep.subr.bf16.mxu0 %v416
    %698 = vmatpush1.bf16.msra.mxu0 %v415
    %699 = vmatprep.subr.bf16.mxu0 %v424
    %700 = vmatpush1.bf16.msra.mxu0 %v423
    %701 = vmatprep.subr.bf16.mxu0 %v432
    %702 = vmatpush1.bf16.msra.mxu0 %v431
    %703 = vmatprep.subr.bf16.mxu0 %v440
    %704 = vmatpush1.bf16.msra.mxu0 %v439
    %705 = vmatprep.subr.bf16.mxu0 %v448
    %706 = vmatpush1.bf16.msra.mxu0 %v447
    %707 = vmatprep.subr.bf16.mxu0 %v456
    %708 = vmatpush1.bf16.msra.mxu0 %v455
    %709 = vmatprep.subr.bf16.mxu0 %v464
    %710 = vmatpush1.bf16.msra.mxu0 %v463
    %711 = vmatprep.mubr.bf16.mxu0 %v210
    %712 = vmatmul.mubr.bf16.gmra.mrb[0].mxu0 %v209
    %v713 = vpop.f32.mrb[0].mxu0
    %v714 = vadd.f32 0.0, %v713
    %v715 = vpop.f32.mrb[0].mxu0
    %v716 = vadd.f32 0.0, %v715
    %v717 = vpop.f32.mrb[0].mxu0
    %v718 = vpop.f32.mrb[0].mxu0
    %719 = vdwg.mxu0
    %720 = vmatprep.subr.bf16.mxu0 %v472
    %721 = vmatpush1.bf16.msra.mxu0 %v471
    %722 = vmatprep.subr.bf16.mxu0 %v480
    %723 = vmatpush1.bf16.msra.mxu0 %v479
    %724 = vmatprep.subr.bf16.mxu0 %v488
    %725 = vmatpush1.bf16.msra.mxu0 %v487
    %726 = vmatprep.subr.bf16.mxu0 %v496
    %727 = vmatpush1.bf16.msra.mxu0 %v495
    %728 = vmatprep.subr.bf16.mxu0 %v504
    %729 = vmatpush1.bf16.msra.mxu0 %v503
    %730 = vmatprep.subr.bf16.mxu0 %v512
    %731 = vmatpush1.bf16.msra.mxu0 %v511
    %732 = vmatprep.subr.bf16.mxu0 %v520
    %733 = vmatpush1.bf16.msra.mxu0 %v519
    %734 = vmatprep.subr.bf16.mxu0 %v528
    %735 = vmatpush1.bf16.msra.mxu0 %v527
    %736 = vmatprep.subr.bf16.mxu0 %v536
    %737 = vmatpush1.bf16.msra.mxu0 %v535
    %738 = vmatprep.subr.bf16.mxu0 %v544
    %739 = vmatpush1.bf16.msra.mxu0 %v543
    %740 = vmatprep.subr.bf16.mxu0 %v552
    %741 = vmatpush1.bf16.msra.mxu0 %v551
    %742 = vmatprep.subr.bf16.mxu0 %v560
    %743 = vmatpush1.bf16.msra.mxu0 %v559
    %744 = vmatprep.subr.bf16.mxu0 %v568
    %745 = vmatpush1.bf16.msra.mxu0 %v567
    %746 = vmatprep.subr.bf16.mxu0 %v576
    %747 = vmatpush1.bf16.msra.mxu0 %v575
    %748 = vmatprep.subr.bf16.mxu0 %v584
    %749 = vmatpush1.bf16.msra.mxu0 %v583
    %750 = vmatprep.subr.bf16.mxu0 %v592
    %751 = vmatpush1.bf16.msra.mxu0 %v591
    %752 = vmatprep.mubr.bf16.mxu0 %v212
    %753 = vmatmul.mubr.bf16.gmra.mrb[0].mxu0 %v211
    %v754 = vpop.f32.mrb[0].mxu0
    %v755 = vadd.f32 %v714, %v754
    %v756 = vpop.f32.mrb[0].mxu0
    %v757 = vadd.f32 %v716, %v756
    %v758 = vpop.f32.mrb[0].mxu0
    %v759 = vpop.f32.mrb[0].mxu0
    %760 = vdwg.mxu0
    %761 = vmatprep.subr.bf16.mxu0 %v346
    %762 = vmatpush1.bf16.msra.mxu0 %v345
    %763 = vmatprep.subr.bf16.mxu0 %v354
    %764 = vmatpush1.bf16.msra.mxu0 %v353
    %765 = vmatprep.subr.bf16.mxu0 %v362
    %766 = vmatpush1.bf16.msra.mxu0 %v361
    %767 = vmatprep.subr.bf16.mxu0 %v370
    %768 = vmatpush1.bf16.msra.mxu0 %v369
    %769 = vmatprep.subr.bf16.mxu0 %v378
    %770 = vmatpush1.bf16.msra.mxu0 %v377
    %771 = vmatprep.subr.bf16.mxu0 %v386
    %772 = vmatpush1.bf16.msra.mxu0 %v385
    %773 = vmatprep.subr.bf16.mxu0 %v394
    %774 = vmatpush1.bf16.msra.mxu0 %v393
    %775 = vmatprep.subr.bf16.mxu0 %v402
    %776 = vmatpush1.bf16.msra.mxu0 %v401
    %777 = vmatprep.subr.bf16.mxu0 %v410
    %778 = vmatpush1.bf16.msra.mxu0 %v409
    %779 = vmatprep.subr.bf16.mxu0 %v418
    %780 = vmatpush1.bf16.msra.mxu0 %v417
    %781 = vmatprep.subr.bf16.mxu0 %v426
    %782 = vmatpush1.bf16.msra.mxu0 %v425
    %783 = vmatprep.subr.bf16.mxu0 %v434
    %784 = vmatpush1.bf16.msra.mxu0 %v433
    %785 = vmatprep.subr.bf16.mxu0 %v442
    %786 = vmatpush1.bf16.msra.mxu0 %v441
    %787 = vmatprep.subr.bf16.mxu0 %v450
    %788 = vmatpush1.bf16.msra.mxu0 %v449
    %789 = vmatprep.subr.bf16.mxu0 %v458
    %790 = vmatpush1.bf16.msra.mxu0 %v457
    %791 = vmatprep.subr.bf16.mxu0 %v466
    %792 = vmatpush1.bf16.msra.mxu0 %v465
    %793 = vmatprep.mubr.bf16.mxu0 %v210
    %794 = vmatmul.mubr.bf16.gmra.mrb[0].mxu0 %v209
    %v795 = vpop.f32.mrb[0].mxu0
    %v796 = vadd.f32 0.0, %v795
    %v797 = vpop.f32.mrb[0].mxu0
    %v798 = vadd.f32 0.0, %v797
    %v799 = vpop.f32.mrb[0].mxu0
    %v800 = vpop.f32.mrb[0].mxu0
    %801 = vdwg.mxu0
    %802 = vmatprep.subr.bf16.mxu0 %v474
    %803 = vmatpush1.bf16.msra.mxu0 %v473
    %804 = vmatprep.subr.bf16.mxu0 %v482
    %805 = vmatpush1.bf16.msra.mxu0 %v481
    %806 = vmatprep.subr.bf16.mxu0 %v490
    %807 = vmatpush1.bf16.msra.mxu0 %v489
    %808 = vmatprep.subr.bf16.mxu0 %v498
    %809 = vmatpush1.bf16.msra.mxu0 %v497
    %810 = vmatprep.subr.bf16.mxu0 %v506
    %811 = vmatpush1.bf16.msra.mxu0 %v505
    %812 = vmatprep.subr.bf16.mxu0 %v514
    %813 = vmatpush1.bf16.msra.mxu0 %v513
    %814 = vmatprep.subr.bf16.mxu0 %v522
    %815 = vmatpush1.bf16.msra.mxu0 %v521
    %816 = vmatprep.subr.bf16.mxu0 %v530
    %817 = vmatpush1.bf16.msra.mxu0 %v529
    %818 = vmatprep.subr.bf16.mxu0 %v538
    %819 = vmatpush1.bf16.msra.mxu0 %v537
    %820 = vmatprep.subr.bf16.mxu0 %v546
    %821 = vmatpush1.bf16.msra.mxu0 %v545
    %822 = vmatprep.subr.bf16.mxu0 %v554
    %823 = vmatpush1.bf16.msra.mxu0 %v553
    %824 = vmatprep.subr.bf16.mxu0 %v562
    %825 = vmatpush1.bf16.msra.mxu0 %v561
    %826 = vmatprep.subr.bf16.mxu0 %v570
    %827 = vmatpush1.bf16.msra.mxu0 %v569
    %828 = vmatprep.subr.bf16.mxu0 %v578
    %829 = vmatpush1.bf16.msra.mxu0 %v577
    %830 = vmatprep.subr.bf16.mxu0 %v586
    %831 = vmatpush1.bf16.msra.mxu0 %v585
    %832 = vmatprep.subr.bf16.mxu0 %v594
    %833 = vmatpush1.bf16.msra.mxu0 %v593
    %834 = vmatprep.mubr.bf16.mxu0 %v212
    %835 = vmatmul.mubr.bf16.gmra.mrb[0].mxu0 %v211
    %v836 = vpop.f32.mrb[0].mxu0
    %v837 = vadd.f32 %v796, %v836
    %v838 = vpop.f32.mrb[0].mxu0
    %v839 = vadd.f32 %v798, %v838
    %v840 = vpop.f32.mrb[0].mxu0
    %v841 = vpop.f32.mrb[0].mxu0
    %842 = vdwg.mxu0
    %843 = vmatprep.subr.bf16.mxu0 %v348
    %844 = vmatpush1.bf16.msra.mxu0 %v347
    %845 = vmatprep.subr.bf16.mxu0 %v356
    %846 = vmatpush1.bf16.msra.mxu0 %v355
    %847 = vmatprep.subr.bf16.mxu0 %v364
    %848 = vmatpush1.bf16.msra.mxu0 %v363
    %849 = vmatprep.subr.bf16.mxu0 %v372
    %850 = vmatpush1.bf16.msra.mxu0 %v371
    %851 = vmatprep.subr.bf16.mxu0 %v380
    %852 = vmatpush1.bf16.msra.mxu0 %v379
    %853 = vmatprep.subr.bf16.mxu0 %v388
    %854 = vmatpush1.bf16.msra.mxu0 %v387
    %855 = vmatprep.subr.bf16.mxu0 %v396
    %856 = vmatpush1.bf16.msra.mxu0 %v395
    %857 = vmatprep.subr.bf16.mxu0 %v404
    %858 = vmatpush1.bf16.msra.mxu0 %v403
    %859 = vmatprep.subr.bf16.mxu0 %v412
    %860 = vmatpush1.bf16.msra.mxu0 %v411
    %861 = vmatprep.subr.bf16.mxu0 %v420
    %862 = vmatpush1.bf16.msra.mxu0 %v419
    %863 = vmatprep.subr.bf16.mxu0 %v428
    %864 = vmatpush1.bf16.msra.mxu0 %v427
    %865 = vmatprep.subr.bf16.mxu0 %v436
    %866 = vmatpush1.bf16.msra.mxu0 %v435
    %867 = vmatprep.subr.bf16.mxu0 %v444
    %868 = vmatpush1.bf16.msra.mxu0 %v443
    %869 = vmatprep.subr.bf16.mxu0 %v452
    %870 = vmatpush1.bf16.msra.mxu0 %v451
    %871 = vmatprep.subr.bf16.mxu0 %v460
    %872 = vmatpush1.bf16.msra.mxu0 %v459
    %873 = vmatprep.subr.bf16.mxu0 %v468
    %874 = vmatpush1.bf16.msra.mxu0 %v467
    %875 = vmatprep.mubr.bf16.mxu0 %v210
    %876 = vmatmul.mubr.bf16.gmra.mrb[0].mxu0 %v209
    %v877 = vpop.f32.mrb[0].mxu0
    %v878 = vadd.f32 0.0, %v877
    %v879 = vpop.f32.mrb[0].mxu0
    %v880 = vadd.f32 0.0, %v879
    %v881 = vpop.f32.mrb[0].mxu0
    %v882 = vpop.f32.mrb[0].mxu0
    %883 = vdwg.mxu0
    %884 = vmatprep.subr.bf16.mxu0 %v476
    %885 = vmatpush1.bf16.msra.mxu0 %v475
    %886 = vmatprep.subr.bf16.mxu0 %v484
    %887 = vmatpush1.bf16.msra.mxu0 %v483
    %888 = vmatprep.subr.bf16.mxu0 %v492
    %889 = vmatpush1.bf16.msra.mxu0 %v491
    %890 = vmatprep.subr.bf16.mxu0 %v500
    %891 = vmatpush1.bf16.msra.mxu0 %v499
    %892 = vmatprep.subr.bf16.mxu0 %v508
    %893 = vmatpush1.bf16.msra.mxu0 %v507
    %894 = vmatprep.subr.bf16.mxu0 %v516
    %895 = vmatpush1.bf16.msra.mxu0 %v515
    %896 = vmatprep.subr.bf16.mxu0 %v524
    %897 = vmatpush1.bf16.msra.mxu0 %v523
    %898 = vmatprep.subr.bf16.mxu0 %v532
    %899 = vmatpush1.bf16.msra.mxu0 %v531
    %900 = vmatprep.subr.bf16.mxu0 %v540
    %901 = vmatpush1.bf16.msra.mxu0 %v539
    %902 = vmatprep.subr.bf16.mxu0 %v548
    %903 = vmatpush1.bf16.msra.mxu0 %v547
    %904 = vmatprep.subr.bf16.mxu0 %v556
    %905 = vmatpush1.bf16.msra.mxu0 %v555
    %906 = vmatprep.subr.bf16.mxu0 %v564
    %907 = vmatpush1.bf16.msra.mxu0 %v563
    %908 = vmatprep.subr.bf16.mxu0 %v572
    %909 = vmatpush1.bf16.msra.mxu0 %v571
    %910 = vmatprep.subr.bf16.mxu0 %v580
    %911 = vmatpush1.bf16.msra.mxu0 %v579
    %912 = vmatprep.subr.bf16.mxu0 %v588
    %913 = vmatpush1.bf16.msra.mxu0 %v587
    %914 = vmatprep.subr.bf16.mxu0 %v596
    %915 = vmatpush1.bf16.msra.mxu0 %v595
    %916 = vmatprep.mubr.bf16.mxu0 %v212
    %917 = vmatmul.mubr.bf16.gmra.mrb[0].mxu0 %v211
    %v918 = vpop.f32.mrb[0].mxu0
    %v919 = vadd.f32 %v878, %v918
    %v920 = vpop.f32.mrb[0].mxu0
    %v921 = vadd.f32 %v880, %v920
    %v922 = vpop.f32.mrb[0].mxu0
    %v923 = vpop.f32.mrb[0].mxu0
    %924 = vdwg.mxu0
    %v925 = vld [vmem:[#allocation12] sm:$0xff]
    %v927 = vlaneseq
    %v928 = vshrl.u32 %v927, 7
    %v929 = vsub.s32 0, %v928
    %v930 = vrot.slane %v925, %v929
    %v931 = vlaneseq
    %v932 = vshrl.u32 %v931, 7
    %v933 = vsub.s32 1, %v932
    %v934 = vrot.slane %v925, %v933
    %v935 = vlaneseq
    %v936 = vshrl.u32 %v935, 7
    %v937 = vsub.s32 2, %v936
    %v938 = vrot.slane %v925, %v937
    %v939 = vlaneseq
    %v940 = vshrl.u32 %v939, 7
    %v941 = vsub.s32 3, %v940
    %v942 = vrot.slane %v925, %v941
    %v943 = vlaneseq
    %v944 = vshrl.u32 %v943, 7
    %v945 = vsub.s32 4, %v944
    %v946 = vrot.slane %v925, %v945
    %v947 = vlaneseq
    %v948 = vshrl.u32 %v947, 7
    %v949 = vsub.s32 5, %v948
    %v950 = vrot.slane %v925, %v949
    %v951 = vlaneseq
    %v952 = vshrl.u32 %v951, 7
    %v953 = vsub.s32 6, %v952
    %v954 = vrot.slane %v925, %v953
    %v955 = vlaneseq
    %v956 = vshrl.u32 %v955, 7
    %v957 = vsub.s32 7, %v956
    %v958 = vrot.slane %v925, %v957
    %v967 = vmul.f32 %v673, %v930
    %v968 = vmul.f32 %v675, %v934
    %v969 = vmul.f32 %v755, %v938
    %v970 = vmul.f32 %v757, %v942
    %v971 = vmul.f32 %v837, %v946
    %v972 = vmul.f32 %v839, %v950
    %v973 = vmul.f32 %v919, %v954
    %v974 = vmul.f32 %v921, %v958
    %v975 = vld [vmem:[#allocation14] sm:$0xff]
    %v977 = vlaneseq
    %v978 = vshrl.u32 %v977, 7
    %v979 = vsub.s32 0, %v978
    %v980 = vrot.slane %v975, %v979
    %v981 = vlaneseq
    %v982 = vshrl.u32 %v981, 7
    %v983 = vsub.s32 1, %v982
    %v984 = vrot.slane %v975, %v983
    %v985 = vlaneseq
    %v986 = vshrl.u32 %v985, 7
    %v987 = vsub.s32 2, %v986
    %v988 = vrot.slane %v975, %v987
    %v989 = vlaneseq
    %v990 = vshrl.u32 %v989, 7
    %v991 = vsub.s32 3, %v990
    %v992 = vrot.slane %v975, %v991
    %v993 = vlaneseq
    %v994 = vshrl.u32 %v993, 7
    %v995 = vsub.s32 4, %v994
    %v996 = vrot.slane %v975, %v995
    %v997 = vlaneseq
    %v998 = vshrl.u32 %v997, 7
    %v999 = vsub.s32 5, %v998
    %v1000 = vrot.slane %v975, %v999
    %v1001 = vlaneseq
    %v1002 = vshrl.u32 %v1001, 7
    %v1003 = vsub.s32 6, %v1002
    %v1004 = vrot.slane %v975, %v1003
    %v1005 = vlaneseq
    %v1006 = vshrl.u32 %v1005, 7
    %v1007 = vsub.s32 7, %v1006
    %v1008 = vrot.slane %v975, %v1007
    %v1017 = vadd.f32 %v967, %v980
    %v1018 = vadd.f32 %v968, %v984
    %v1019 = vadd.f32 %v969, %v988
    %v1020 = vadd.f32 %v970, %v992
    %v1021 = vadd.f32 %v971, %v996
    %v1022 = vadd.f32 %v972, %v1000
    %v1023 = vadd.f32 %v973, %v1004
    %v1024 = vadd.f32 %v974, %v1008
    %s1025 = sld [smem:[#allocation17]]
    %s1026 = sld [smem:[#allocation17 + $0x1]]
    %v1027 = vld [vmem:[%s11] sm:$0xf]
    %v1029 = vlaneseq
    %v1030 = vshrl.u32 %v1029, 7
    %v1031 = vsub.s32 0, %v1030
    %v1032 = vrot.slane %v1027, %v1031
    %v1033 = vlaneseq
    %v1034 = vshrl.u32 %v1033, 7
    %v1035 = vsub.s32 1, %v1034
    %v1036 = vrot.slane %v1027, %v1035
    %v1037 = vlaneseq
    %v1038 = vshrl.u32 %v1037, 7
    %v1039 = vsub.s32 2, %v1038
    %v1040 = vrot.slane %v1027, %v1039
    %v1041 = vlaneseq
    %v1042 = vshrl.u32 %v1041, 7
    %v1043 = vsub.s32 3, %v1042
    %v1044 = vrot.slane %v1027, %v1043
    %v1045 = vcombine.low %v1032, %v1036
    %v1046 = vcombine.low %v1040, %v1044
    %v1048 = vunpack.c.l.s4 1983009808
    %v1049 = vunpack.c.0.s8 %v1048
    %v1050 = vlaneseq
    %v1051 = vshrl.u32 %v1050, 7
    %v1052 = vsub.s32 %v1049, %v1051
    %v1053 = vrot.slane %v1045, %v1052
    %v1055 = vunpack.c.l.s4 1983009808
    %v1056 = vunpack.c.0.s8 %v1055
    %v1057 = vlaneseq
    %v1058 = vshrl.u32 %v1057, 7
    %v1059 = vsub.s32 %v1056, %v1058
    %v1060 = vrot.slane %v1046, %v1059
    %v1061 = vcombine.low %v1053, %v1060
    %v1063 = vmul.f32 %v186, %v1061
    %v1065 = vcombine.high %v1063, %v1063
    %v1067 = vunpack.c.l.s4 1983009808
    %v1068 = vunpack.c.0.s8 %v1067
    %v1069 = vlaneseq
    %v1070 = vshrl.u32 %v1069, 7
    %v1071 = vsub.s32 %v1068, %v1070
    %v1072 = vrot.slane %v1063, %v1071
    %v1074 = vunpack.c.l.s4 1983009808
    %v1075 = vunpack.c.0.s8 %v1074
    %v1076 = vlaneseq
    %v1077 = vshrl.u32 %v1076, 7
    %v1078 = vsub.s32 %v1075, %v1077
    %v1079 = vrot.slane %v1065, %v1078
    %v1080 = vcombine.high %v1072, %v1072
    %v1081 = vcombine.high %v1079, %v1079
    %vm1086 = vcmask 1041408
    %v1087 = vsel %vm1086, %v1072, 0.0
    %v1088 = vsel %vm1086, %v1080, 0.0
    %v1089 = vadd.f32 %v1087, %v1088
    %v1090 = vsel %vm1086, %v1079, 0.0
    %v1091 = vadd.f32 %v1089, %v1090
    %v1092 = vsel %vm1086, %v1081, 0.0
    %v1093 = vadd.f32 %v1091, %v1092
    %1094 = vadd.xlane.f32.xlu0 %v1093
    %v1095 = vpop.xlane.xlu0 %1094
    %v1096 = vstv %s1026
    %v1097 = vadd.f32 %v1095, %v1096
    %v1098 = vxor.u32 %v1097, 2147483648
    %v1099 = vmul.f32 %v1098, 1.442695
    %v1100 = vpow.pop %v1099
    %v1101 = vadd.f32 %v1100, 1.0
    %v1102 = vrcp.pop %v1101
    %v1103 = vmul.f32 1.0, %v1102
    %v1104 = vmul.f32 %v1103, %v1021
    %v1105 = vmul.f32 %v1103, %v1022
    %v1106 = vmul.f32 %v1103, %v1023
    %v1107 = vmul.f32 %v1103, %v1024
    %v1108 = vpack.c.bf16 %v1104, %v1104
    %v1109 = vpack.c.bf16 %v1105, %v1105
    %v1110 = vpack.c.bf16 %v1106, %v1106
    %v1111 = vpack.c.bf16 %v1107, %v1107
    %s1112 = smul.u32 2, 256
    %s1113 = smul.u32 %s1112, 4
    %s1114 = sshll.u32 %s1113, 4
    %1115 = dma.done [#allocation4], %s1114
    %v1116 = vpack.c.bf16 %v170, %v154
    %v1117 = vpack.c.bf16 %v171, %v155
    %v1118 = vpack.c.bf16 %v172, %v156
    %v1119 = vpack.c.bf16 %v173, %v157
    %v1120 = vpack.c.bf16 %v174, %v158
    %v1121 = vpack.c.bf16 %v175, %v159
    %v1122 = vpack.c.bf16 %v176, %v160
    %v1123 = vpack.c.bf16 %v177, %v161
    %v1124 = vpack.c.bf16 %v178, %v162
    %v1125 = vpack.c.bf16 %v179, %v163
    %v1126 = vpack.c.bf16 %v180, %v164
    %v1127 = vpack.c.bf16 %v181, %v165
    %v1128 = vpack.c.bf16 %v182, %v166
    %v1129 = vpack.c.bf16 %v183, %v167
    %v1130 = vpack.c.bf16 %v184, %v168
    %v1131 = vpack.c.bf16 %v185, %v169
    %v1132 = vld [vmem:[#allocation2] sm:$0xff]
    %v1133 = vld [vmem:[#allocation2 + $0x8] sm:$0xff]
    %v1134 = vld [vmem:[#allocation2 + $0x10] sm:$0xff]
    %v1135 = vld [vmem:[#allocation2 + $0x18] sm:$0xff]
    %v1136 = vld [vmem:[#allocation2 + $0x20] sm:$0xff]
    %v1137 = vld [vmem:[#allocation2 + $0x28] sm:$0xff]
    %v1138 = vld [vmem:[#allocation2 + $0x30] sm:$0xff]
    %v1139 = vld [vmem:[#allocation2 + $0x38] sm:$0xff]
    %v1140 = vld [vmem:[#allocation2 + $0x40] sm:$0xff]
    %v1141 = vld [vmem:[#allocation2 + $0x48] sm:$0xff]
    %v1142 = vld [vmem:[#allocation2 + $0x50] sm:$0xff]
    %v1143 = vld [vmem:[#allocation2 + $0x58] sm:$0xff]
    %v1144 = vld [vmem:[#allocation2 + $0x60] sm:$0xff]
    %v1145 = vld [vmem:[#allocation2 + $0x68] sm:$0xff]
    %v1146 = vld [vmem:[#allocation2 + $0x70] sm:$0xff]
    %v1147 = vld [vmem:[#allocation2 + $0x78] sm:$0xff]
    %v1148 = vld [vmem:[#allocation2 + $0x80] sm:$0xff]
    %v1149 = vld [vmem:[#allocation2 + $0x88] sm:$0xff]
    %v1150 = vld [vmem:[#allocation2 + $0x90] sm:$0xff]
    %v1151 = vld [vmem:[#allocation2 + $0x98] sm:$0xff]
    %v1152 = vld [vmem:[#allocation2 + $0xa0] sm:$0xff]
    %v1153 = vld [vmem:[#allocation2 + $0xa8] sm:$0xff]
    %v1154 = vld [vmem:[#allocation2 + $0xb0] sm:$0xff]
    %v1155 = vld [vmem:[#allocation2 + $0xb8] sm:$0xff]
    %v1156 = vld [vmem:[#allocation2 + $0xc0] sm:$0xff]
    %v1157 = vld [vmem:[#allocation2 + $0xc8] sm:$0xff]
    %v1158 = vld [vmem:[#allocation2 + $0xd0] sm:$0xff]
    %v1159 = vld [vmem:[#allocation2 + $0xd8] sm:$0xff]
    %v1160 = vld [vmem:[#allocation2 + $0xe0] sm:$0xff]
    %v1161 = vld [vmem:[#allocation2 + $0xe8] sm:$0xff]
    %v1162 = vld [vmem:[#allocation2 + $0xf0] sm:$0xff]
    %v1163 = vld [vmem:[#allocation2 + $0xf8] sm:$0xff]
    %v1164 = vld [vmem:[#allocation2 + $0x100] sm:$0xff]
    %v1165 = vld [vmem:[#allocation2 + $0x108] sm:$0xff]
    %v1166 = vld [vmem:[#allocation2 + $0x110] sm:$0xff]
    %v1167 = vld [vmem:[#allocation2 + $0x118] sm:$0xff]
    %v1168 = vld [vmem:[#allocation2 + $0x120] sm:$0xff]
    %v1169 = vld [vmem:[#allocation2 + $0x128] sm:$0xff]
    %v1170 = vld [vmem:[#allocation2 + $0x130] sm:$0xff]
    %v1171 = vld [vmem:[#allocation2 + $0x138] sm:$0xff]
    %v1172 = vld [vmem:[#allocation2 + $0x140] sm:$0xff]
    %v1173 = vld [vmem:[#allocation2 + $0x148] sm:$0xff]
    %v1174 = vld [vmem:[#allocation2 + $0x150] sm:$0xff]
    %v1175 = vld [vmem:[#allocation2 + $0x158] sm:$0xff]
    %v1176 = vld [vmem:[#allocation2 + $0x160] sm:$0xff]
    %v1177 = vld [vmem:[#allocation2 + $0x168] sm:$0xff]
    %v1178 = vld [vmem:[#allocation2 + $0x170] sm:$0xff]
    %v1179 = vld [vmem:[#allocation2 + $0x178] sm:$0xff]
    %v1180 = vld [vmem:[#allocation2 + $0x180] sm:$0xff]
    %v1181 = vld [vmem:[#allocation2 + $0x188] sm:$0xff]
    %v1182 = vld [vmem:[#allocation2 + $0x190] sm:$0xff]
    %v1183 = vld [vmem:[#allocation2 + $0x198] sm:$0xff]
    %v1184 = vld [vmem:[#allocation2 + $0x1a0] sm:$0xff]
    %v1185 = vld [vmem:[#allocation2 + $0x1a8] sm:$0xff]
    %v1186 = vld [vmem:[#allocation2 + $0x1b0] sm:$0xff]
    %v1187 = vld [vmem:[#allocation2 + $0x1b8] sm:$0xff]
    %v1188 = vld [vmem:[#allocation2 + $0x1c0] sm:$0xff]
    %v1189 = vld [vmem:[#allocation2 + $0x1c8] sm:$0xff]
    %v1190 = vld [vmem:[#allocation2 + $0x1d0] sm:$0xff]
    %v1191 = vld [vmem:[#allocation2 + $0x1d8] sm:$0xff]
    %v1192 = vld [vmem:[#allocation2 + $0x1e0] sm:$0xff]
    %v1193 = vld [vmem:[#allocation2 + $0x1e8] sm:$0xff]
    %v1194 = vld [vmem:[#allocation2 + $0x1f0] sm:$0xff]
    %v1195 = vld [vmem:[#allocation2 + $0x1f8] sm:$0xff]
    %v1196 = vld [vmem:[#allocation2 + $0x200] sm:$0xff]
    %v1197 = vld [vmem:[#allocation2 + $0x208] sm:$0xff]
    %v1198 = vld [vmem:[#allocation2 + $0x210] sm:$0xff]
    %v1199 = vld [vmem:[#allocation2 + $0x218] sm:$0xff]
    %v1200 = vld [vmem:[#allocation2 + $0x220] sm:$0xff]
    %v1201 = vld [vmem:[#allocation2 + $0x228] sm:$0xff]
    %v1202 = vld [vmem:[#allocation2 + $0x230] sm:$0xff]
    %v1203 = vld [vmem:[#allocation2 + $0x238] sm:$0xff]
    %v1204 = vld [vmem:[#allocation2 + $0x240] sm:$0xff]
    %v1205 = vld [vmem:[#allocation2 + $0x248] sm:$0xff]
    %v1206 = vld [vmem:[#allocation2 + $0x250] sm:$0xff]
    %v1207 = vld [vmem:[#allocation2 + $0x258] sm:$0xff]
    %v1208 = vld [vmem:[#allocation2 + $0x260] sm:$0xff]
    %v1209 = vld [vmem:[#allocation2 + $0x268] sm:$0xff]
    %v1210 = vld [vmem:[#allocation2 + $0x270] sm:$0xff]
    %v1211 = vld [vmem:[#allocation2 + $0x278] sm:$0xff]
    %v1212 = vld [vmem:[#allocation2 + $0x280] sm:$0xff]
    %v1213 = vld [vmem:[#allocation2 + $0x288] sm:$0xff]
    %v1214 = vld [vmem:[#allocation2 + $0x290] sm:$0xff]
    %v1215 = vld [vmem:[#allocation2 + $0x298] sm:$0xff]
    %v1216 = vld [vmem:[#allocation2 + $0x2a0] sm:$0xff]
    %v1217 = vld [vmem:[#allocation2 + $0x2a8] sm:$0xff]
    %v1218 = vld [vmem:[#allocation2 + $0x2b0] sm:$0xff]
    %v1219 = vld [vmem:[#allocation2 + $0x2b8] sm:$0xff]
    %v1220 = vld [vmem:[#allocation2 + $0x2c0] sm:$0xff]
    %v1221 = vld [vmem:[#allocation2 + $0x2c8] sm:$0xff]
    %v1222 = vld [vmem:[#allocation2 + $0x2d0] sm:$0xff]
    %v1223 = vld [vmem:[#allocation2 + $0x2d8] sm:$0xff]
    %v1224 = vld [vmem:[#allocation2 + $0x2e0] sm:$0xff]
    %v1225 = vld [vmem:[#allocation2 + $0x2e8] sm:$0xff]
    %v1226 = vld [vmem:[#allocation2 + $0x2f0] sm:$0xff]
    %v1227 = vld [vmem:[#allocation2 + $0x2f8] sm:$0xff]
    %v1228 = vld [vmem:[#allocation2 + $0x300] sm:$0xff]
    %v1229 = vld [vmem:[#allocation2 + $0x308] sm:$0xff]
    %v1230 = vld [vmem:[#allocation2 + $0x310] sm:$0xff]
    %v1231 = vld [vmem:[#allocation2 + $0x318] sm:$0xff]
    %v1232 = vld [vmem:[#allocation2 + $0x320] sm:$0xff]
    %v1233 = vld [vmem:[#allocation2 + $0x328] sm:$0xff]
    %v1234 = vld [vmem:[#allocation2 + $0x330] sm:$0xff]
    %v1235 = vld [vmem:[#allocation2 + $0x338] sm:$0xff]
    %v1236 = vld [vmem:[#allocation2 + $0x340] sm:$0xff]
    %v1237 = vld [vmem:[#allocation2 + $0x348] sm:$0xff]
    %v1238 = vld [vmem:[#allocation2 + $0x350] sm:$0xff]
    %v1239 = vld [vmem:[#allocation2 + $0x358] sm:$0xff]
    %v1240 = vld [vmem:[#allocation2 + $0x360] sm:$0xff]
    %v1241 = vld [vmem:[#allocation2 + $0x368] sm:$0xff]
    %v1242 = vld [vmem:[#allocation2 + $0x370] sm:$0xff]
    %v1243 = vld [vmem:[#allocation2 + $0x378] sm:$0xff]
    %v1244 = vld [vmem:[#allocation2 + $0x380] sm:$0xff]
    %v1245 = vld [vmem:[#allocation2 + $0x388] sm:$0xff]
    %v1246 = vld [vmem:[#allocation2 + $0x390] sm:$0xff]
    %v1247 = vld [vmem:[#allocation2 + $0x398] sm:$0xff]
    %v1248 = vld [vmem:[#allocation2 + $0x3a0] sm:$0xff]
    %v1249 = vld [vmem:[#allocation2 + $0x3a8] sm:$0xff]
    %v1250 = vld [vmem:[#allocation2 + $0x3b0] sm:$0xff]
    %v1251 = vld [vmem:[#allocation2 + $0x3b8] sm:$0xff]
    %v1252 = vld [vmem:[#allocation2 + $0x3c0] sm:$0xff]
    %v1253 = vld [vmem:[#allocation2 + $0x3c8] sm:$0xff]
    %v1254 = vld [vmem:[#allocation2 + $0x3d0] sm:$0xff]
    %v1255 = vld [vmem:[#allocation2 + $0x3d8] sm:$0xff]
    %v1256 = vld [vmem:[#allocation2 + $0x3e0] sm:$0xff]
    %v1257 = vld [vmem:[#allocation2 + $0x3e8] sm:$0xff]
    %v1258 = vld [vmem:[#allocation2 + $0x3f0] sm:$0xff]
    %v1259 = vld [vmem:[#allocation2 + $0x3f8] sm:$0xff]
    %v1260 = vld [vmem:[#allocation2 + $0x400] sm:$0xff]
    %v1261 = vld [vmem:[#allocation2 + $0x408] sm:$0xff]
    %v1262 = vld [vmem:[#allocation2 + $0x410] sm:$0xff]
    %v1263 = vld [vmem:[#allocation2 + $0x418] sm:$0xff]
    %v1264 = vld [vmem:[#allocation2 + $0x420] sm:$0xff]
    %v1265 = vld [vmem:[#allocation2 + $0x428] sm:$0xff]
    %v1266 = vld [vmem:[#allocation2 + $0x430] sm:$0xff]
    %v1267 = vld [vmem:[#allocation2 + $0x438] sm:$0xff]
    %v1268 = vld [vmem:[#allocation2 + $0x440] sm:$0xff]
    %v1269 = vld [vmem:[#allocation2 + $0x448] sm:$0xff]
    %v1270 = vld [vmem:[#allocation2 + $0x450] sm:$0xff]
    %v1271 = vld [vmem:[#allocation2 + $0x458] sm:$0xff]
    %v1272 = vld [vmem:[#allocation2 + $0x460] sm:$0xff]
    %v1273 = vld [vmem:[#allocation2 + $0x468] sm:$0xff]
    %v1274 = vld [vmem:[#allocation2 + $0x470] sm:$0xff]
    %v1275 = vld [vmem:[#allocation2 + $0x478] sm:$0xff]
    %v1276 = vld [vmem:[#allocation2 + $0x480] sm:$0xff]
    %v1277 = vld [vmem:[#allocation2 + $0x488] sm:$0xff]
    %v1278 = vld [vmem:[#allocation2 + $0x490] sm:$0xff]
    %v1279 = vld [vmem:[#allocation2 + $0x498] sm:$0xff]
    %v1280 = vld [vmem:[#allocation2 + $0x4a0] sm:$0xff]
    %v1281 = vld [vmem:[#allocation2 + $0x4a8] sm:$0xff]
    %v1282 = vld [vmem:[#allocation2 + $0x4b0] sm:$0xff]
    %v1283 = vld [vmem:[#allocation2 + $0x4b8] sm:$0xff]
    %v1284 = vld [vmem:[#allocation2 + $0x4c0] sm:$0xff]
    %v1285 = vld [vmem:[#allocation2 + $0x4c8] sm:$0xff]
    %v1286 = vld [vmem:[#allocation2 + $0x4d0] sm:$0xff]
    %v1287 = vld [vmem:[#allocation2 + $0x4d8] sm:$0xff]
    %v1288 = vld [vmem:[#allocation2 + $0x4e0] sm:$0xff]
    %v1289 = vld [vmem:[#allocation2 + $0x4e8] sm:$0xff]
    %v1290 = vld [vmem:[#allocation2 + $0x4f0] sm:$0xff]
    %v1291 = vld [vmem:[#allocation2 + $0x4f8] sm:$0xff]
    %v1292 = vld [vmem:[#allocation2 + $0x500] sm:$0xff]
    %v1293 = vld [vmem:[#allocation2 + $0x508] sm:$0xff]
    %v1294 = vld [vmem:[#allocation2 + $0x510] sm:$0xff]
    %v1295 = vld [vmem:[#allocation2 + $0x518] sm:$0xff]
    %v1296 = vld [vmem:[#allocation2 + $0x520] sm:$0xff]
    %v1297 = vld [vmem:[#allocation2 + $0x528] sm:$0xff]
    %v1298 = vld [vmem:[#allocation2 + $0x530] sm:$0xff]
    %v1299 = vld [vmem:[#allocation2 + $0x538] sm:$0xff]
    %v1300 = vld [vmem:[#allocation2 + $0x540] sm:$0xff]
    %v1301 = vld [vmem:[#allocation2 + $0x548] sm:$0xff]
    %v1302 = vld [vmem:[#allocation2 + $0x550] sm:$0xff]
    %v1303 = vld [vmem:[#allocation2 + $0x558] sm:$0xff]
    %v1304 = vld [vmem:[#allocation2 + $0x560] sm:$0xff]
    %v1305 = vld [vmem:[#allocation2 + $0x568] sm:$0xff]
    %v1306 = vld [vmem:[#allocation2 + $0x570] sm:$0xff]
    %v1307 = vld [vmem:[#allocation2 + $0x578] sm:$0xff]
    %v1308 = vld [vmem:[#allocation2 + $0x580] sm:$0xff]
    %v1309 = vld [vmem:[#allocation2 + $0x588] sm:$0xff]
    %v1310 = vld [vmem:[#allocation2 + $0x590] sm:$0xff]
    %v1311 = vld [vmem:[#allocation2 + $0x598] sm:$0xff]
    %v1312 = vld [vmem:[#allocation2 + $0x5a0] sm:$0xff]
    %v1313 = vld [vmem:[#allocation2 + $0x5a8] sm:$0xff]
    %v1314 = vld [vmem:[#allocation2 + $0x5b0] sm:$0xff]
    %v1315 = vld [vmem:[#allocation2 + $0x5b8] sm:$0xff]
    %v1316 = vld [vmem:[#allocation2 + $0x5c0] sm:$0xff]
    %v1317 = vld [vmem:[#allocation2 + $0x5c8] sm:$0xff]
    %v1318 = vld [vmem:[#allocation2 + $0x5d0] sm:$0xff]
    %v1319 = vld [vmem:[#allocation2 + $0x5d8] sm:$0xff]
    %v1320 = vld [vmem:[#allocation2 + $0x5e0] sm:$0xff]
    %v1321 = vld [vmem:[#allocation2 + $0x5e8] sm:$0xff]
    %v1322 = vld [vmem:[#allocation2 + $0x5f0] sm:$0xff]
    %v1323 = vld [vmem:[#allocation2 + $0x5f8] sm:$0xff]
    %v1324 = vld [vmem:[#allocation2 + $0x600] sm:$0xff]
    %v1325 = vld [vmem:[#allocation2 + $0x608] sm:$0xff]
    %v1326 = vld [vmem:[#allocation2 + $0x610] sm:$0xff]
    %v1327 = vld [vmem:[#allocation2 + $0x618] sm:$0xff]
    %v1328 = vld [vmem:[#allocation2 + $0x620] sm:$0xff]
    %v1329 = vld [vmem:[#allocation2 + $0x628] sm:$0xff]
    %v1330 = vld [vmem:[#allocation2 + $0x630] sm:$0xff]
    %v1331 = vld [vmem:[#allocation2 + $0x638] sm:$0xff]
    %v1332 = vld [vmem:[#allocation2 + $0x640] sm:$0xff]
    %v1333 = vld [vmem:[#allocation2 + $0x648] sm:$0xff]
    %v1334 = vld [vmem:[#allocation2 + $0x650] sm:$0xff]
    %v1335 = vld [vmem:[#allocation2 + $0x658] sm:$0xff]
    %v1336 = vld [vmem:[#allocation2 + $0x660] sm:$0xff]
    %v1337 = vld [vmem:[#allocation2 + $0x668] sm:$0xff]
    %v1338 = vld [vmem:[#allocation2 + $0x670] sm:$0xff]
    %v1339 = vld [vmem:[#allocation2 + $0x678] sm:$0xff]
    %v1340 = vld [vmem:[#allocation2 + $0x680] sm:$0xff]
    %v1341 = vld [vmem:[#allocation2 + $0x688] sm:$0xff]
    %v1342 = vld [vmem:[#allocation2 + $0x690] sm:$0xff]
    %v1343 = vld [vmem:[#allocation2 + $0x698] sm:$0xff]
    %v1344 = vld [vmem:[#allocation2 + $0x6a0] sm:$0xff]
    %v1345 = vld [vmem:[#allocation2 + $0x6a8] sm:$0xff]
    %v1346 = vld [vmem:[#allocation2 + $0x6b0] sm:$0xff]
    %v1347 = vld [vmem:[#allocation2 + $0x6b8] sm:$0xff]
    %v1348 = vld [vmem:[#allocation2 + $0x6c0] sm:$0xff]
    %v1349 = vld [vmem:[#allocation2 + $0x6c8] sm:$0xff]
    %v1350 = vld [vmem:[#allocation2 + $0x6d0] sm:$0xff]
    %v1351 = vld [vmem:[#allocation2 + $0x6d8] sm:$0xff]
    %v1352 = vld [vmem:[#allocation2 + $0x6e0] sm:$0xff]
    %v1353 = vld [vmem:[#allocation2 + $0x6e8] sm:$0xff]
    %v1354 = vld [vmem:[#allocation2 + $0x6f0] sm:$0xff]
    %v1355 = vld [vmem:[#allocation2 + $0x6f8] sm:$0xff]
    %v1356 = vld [vmem:[#allocation2 + $0x700] sm:$0xff]
    %v1357 = vld [vmem:[#allocation2 + $0x708] sm:$0xff]
    %v1358 = vld [vmem:[#allocation2 + $0x710] sm:$0xff]
    %v1359 = vld [vmem:[#allocation2 + $0x718] sm:$0xff]
    %v1360 = vld [vmem:[#allocation2 + $0x720] sm:$0xff]
    %v1361 = vld [vmem:[#allocation2 + $0x728] sm:$0xff]
    %v1362 = vld [vmem:[#allocation2 + $0x730] sm:$0xff]
    %v1363 = vld [vmem:[#allocation2 + $0x738] sm:$0xff]
    %v1364 = vld [vmem:[#allocation2 + $0x740] sm:$0xff]
    %v1365 = vld [vmem:[#allocation2 + $0x748] sm:$0xff]
    %v1366 = vld [vmem:[#allocation2 + $0x750] sm:$0xff]
    %v1367 = vld [vmem:[#allocation2 + $0x758] sm:$0xff]
    %v1368 = vld [vmem:[#allocation2 + $0x760] sm:$0xff]
    %v1369 = vld [vmem:[#allocation2 + $0x768] sm:$0xff]
    %v1370 = vld [vmem:[#allocation2 + $0x770] sm:$0xff]
    %v1371 = vld [vmem:[#allocation2 + $0x778] sm:$0xff]
    %v1372 = vld [vmem:[#allocation2 + $0x780] sm:$0xff]
    %v1373 = vld [vmem:[#allocation2 + $0x788] sm:$0xff]
    %v1374 = vld [vmem:[#allocation2 + $0x790] sm:$0xff]
    %v1375 = vld [vmem:[#allocation2 + $0x798] sm:$0xff]
    %v1376 = vld [vmem:[#allocation2 + $0x7a0] sm:$0xff]
    %v1377 = vld [vmem:[#allocation2 + $0x7a8] sm:$0xff]
    %v1378 = vld [vmem:[#allocation2 + $0x7b0] sm:$0xff]
    %v1379 = vld [vmem:[#allocation2 + $0x7b8] sm:$0xff]
    %v1380 = vld [vmem:[#allocation2 + $0x7c0] sm:$0xff]
    %v1381 = vld [vmem:[#allocation2 + $0x7c8] sm:$0xff]
    %v1382 = vld [vmem:[#allocation2 + $0x7d0] sm:$0xff]
    %v1383 = vld [vmem:[#allocation2 + $0x7d8] sm:$0xff]
    %v1384 = vld [vmem:[#allocation2 + $0x7e0] sm:$0xff]
    %v1385 = vld [vmem:[#allocation2 + $0x7e8] sm:$0xff]
    %v1386 = vld [vmem:[#allocation2 + $0x7f0] sm:$0xff]
    %v1387 = vld [vmem:[#allocation2 + $0x7f8] sm:$0xff]
    %v1388 = vunpack.c.l.s8.bf16 %v1132
    %v1389 = vunpack.c.l.s8.bf16 %v1133
    %v1390 = vunpack.c.l.s8.bf16 %v1134
    %v1391 = vunpack.c.l.s8.bf16 %v1135
    %v1392 = vunpack.c.h.s8.bf16 %v1132
    %v1393 = vunpack.c.h.s8.bf16 %v1133
    %v1394 = vunpack.c.h.s8.bf16 %v1134
    %v1395 = vunpack.c.h.s8.bf16 %v1135
    %v1396 = vunpack.c.l.s8.bf16 %v1136
    %v1397 = vunpack.c.l.s8.bf16 %v1137
    %v1398 = vunpack.c.l.s8.bf16 %v1138
    %v1399 = vunpack.c.l.s8.bf16 %v1139
    %v1400 = vunpack.c.h.s8.bf16 %v1136
    %v1401 = vunpack.c.h.s8.bf16 %v1137
    %v1402 = vunpack.c.h.s8.bf16 %v1138
    %v1403 = vunpack.c.h.s8.bf16 %v1139
    %v1404 = vunpack.c.l.s8.bf16 %v1140
    %v1405 = vunpack.c.l.s8.bf16 %v1141
    %v1406 = vunpack.c.l.s8.bf16 %v1142
    %v1407 = vunpack.c.l.s8.bf16 %v1143
    %v1408 = vunpack.c.h.s8.bf16 %v1140
    %v1409 = vunpack.c.h.s8.bf16 %v1141
    %v1410 = vunpack.c.h.s8.bf16 %v1142
    %v1411 = vunpack.c.h.s8.bf16 %v1143
    %v1412 = vunpack.c.l.s8.bf16 %v1144
    %v1413 = vunpack.c.l.s8.bf16 %v1145
    %v1414 = vunpack.c.l.s8.bf16 %v1146
    %v1415 = vunpack.c.l.s8.bf16 %v1147
    %v1416 = vunpack.c.h.s8.bf16 %v1144
    %v1417 = vunpack.c.h.s8.bf16 %v1145
    %v1418 = vunpack.c.h.s8.bf16 %v1146
    %v1419 = vunpack.c.h.s8.bf16 %v1147
    %v1420 = vunpack.c.l.s8.bf16 %v1148
    %v1421 = vunpack.c.l.s8.bf16 %v1149
    %v1422 = vunpack.c.l.s8.bf16 %v1150
    %v1423 = vunpack.c.l.s8.bf16 %v1151
    %v1424 = vunpack.c.h.s8.bf16 %v1148
    %v1425 = vunpack.c.h.s8.bf16 %v1149
    %v1426 = vunpack.c.h.s8.bf16 %v1150
    %v1427 = vunpack.c.h.s8.bf16 %v1151
    %v1428 = vunpack.c.l.s8.bf16 %v1152
    %v1429 = vunpack.c.l.s8.bf16 %v1153
    %v1430 = vunpack.c.l.s8.bf16 %v1154
    %v1431 = vunpack.c.l.s8.bf16 %v1155
    %v1432 = vunpack.c.h.s8.bf16 %v1152
    %v1433 = vunpack.c.h.s8.bf16 %v1153
    %v1434 = vunpack.c.h.s8.bf16 %v1154
    %v1435 = vunpack.c.h.s8.bf16 %v1155
    %v1436 = vunpack.c.l.s8.bf16 %v1156
    %v1437 = vunpack.c.l.s8.bf16 %v1157
    %v1438 = vunpack.c.l.s8.bf16 %v1158
    %v1439 = vunpack.c.l.s8.bf16 %v1159
    %v1440 = vunpack.c.h.s8.bf16 %v1156
    %v1441 = vunpack.c.h.s8.bf16 %v1157
    %v1442 = vunpack.c.h.s8.bf16 %v1158
    %v1443 = vunpack.c.h.s8.bf16 %v1159
    %v1444 = vunpack.c.l.s8.bf16 %v1160
    %v1445 = vunpack.c.l.s8.bf16 %v1161
    %v1446 = vunpack.c.l.s8.bf16 %v1162
    %v1447 = vunpack.c.l.s8.bf16 %v1163
    %v1448 = vunpack.c.h.s8.bf16 %v1160
    %v1449 = vunpack.c.h.s8.bf16 %v1161
    %v1450 = vunpack.c.h.s8.bf16 %v1162
    %v1451 = vunpack.c.h.s8.bf16 %v1163
    %v1452 = vunpack.c.l.s8.bf16 %v1164
    %v1453 = vunpack.c.l.s8.bf16 %v1165
    %v1454 = vunpack.c.l.s8.bf16 %v1166
    %v1455 = vunpack.c.l.s8.bf16 %v1167
    %v1456 = vunpack.c.h.s8.bf16 %v1164
    %v1457 = vunpack.c.h.s8.bf16 %v1165
    %v1458 = vunpack.c.h.s8.bf16 %v1166
    %v1459 = vunpack.c.h.s8.bf16 %v1167
    %v1460 = vunpack.c.l.s8.bf16 %v1168
    %v1461 = vunpack.c.l.s8.bf16 %v1169
    %v1462 = vunpack.c.l.s8.bf16 %v1170
    %v1463 = vunpack.c.l.s8.bf16 %v1171
    %v1464 = vunpack.c.h.s8.bf16 %v1168
    %v1465 = vunpack.c.h.s8.bf16 %v1169
    %v1466 = vunpack.c.h.s8.bf16 %v1170
    %v1467 = vunpack.c.h.s8.bf16 %v1171
    %v1468 = vunpack.c.l.s8.bf16 %v1172
    %v1469 = vunpack.c.l.s8.bf16 %v1173
    %v1470 = vunpack.c.l.s8.bf16 %v1174
    %v1471 = vunpack.c.l.s8.bf16 %v1175
    %v1472 = vunpack.c.h.s8.bf16 %v1172
    %v1473 = vunpack.c.h.s8.bf16 %v1173
    %v1474 = vunpack.c.h.s8.bf16 %v1174
    %v1475 = vunpack.c.h.s8.bf16 %v1175
    %v1476 = vunpack.c.l.s8.bf16 %v1176
    %v1477 = vunpack.c.l.s8.bf16 %v1177
    %v1478 = vunpack.c.l.s8.bf16 %v1178
    %v1479 = vunpack.c.l.s8.bf16 %v1179
    %v1480 = vunpack.c.h.s8.bf16 %v1176
    %v1481 = vunpack.c.h.s8.bf16 %v1177
    %v1482 = vunpack.c.h.s8.bf16 %v1178
    %v1483 = vunpack.c.h.s8.bf16 %v1179
    %v1484 = vunpack.c.l.s8.bf16 %v1180
    %v1485 = vunpack.c.l.s8.bf16 %v1181
    %v1486 = vunpack.c.l.s8.bf16 %v1182
    %v1487 = vunpack.c.l.s8.bf16 %v1183
    %v1488 = vunpack.c.h.s8.bf16 %v1180
    %v1489 = vunpack.c.h.s8.bf16 %v1181
    %v1490 = vunpack.c.h.s8.bf16 %v1182
    %v1491 = vunpack.c.h.s8.bf16 %v1183
    %v1492 = vunpack.c.l.s8.bf16 %v1184
    %v1493 = vunpack.c.l.s8.bf16 %v1185
    %v1494 = vunpack.c.l.s8.bf16 %v1186
    %v1495 = vunpack.c.l.s8.bf16 %v1187
    %v1496 = vunpack.c.h.s8.bf16 %v1184
    %v1497 = vunpack.c.h.s8.bf16 %v1185
    %v1498 = vunpack.c.h.s8.bf16 %v1186
    %v1499 = vunpack.c.h.s8.bf16 %v1187
    %v1500 = vunpack.c.l.s8.bf16 %v1188
    %v1501 = vunpack.c.l.s8.bf16 %v1189
    %v1502 = vunpack.c.l.s8.bf16 %v1190
    %v1503 = vunpack.c.l.s8.bf16 %v1191
    %v1504 = vunpack.c.h.s8.bf16 %v1188
    %v1505 = vunpack.c.h.s8.bf16 %v1189
    %v1506 = vunpack.c.h.s8.bf16 %v1190
    %v1507 = vunpack.c.h.s8.bf16 %v1191
    %v1508 = vunpack.c.l.s8.bf16 %v1192
    %v1509 = vunpack.c.l.s8.bf16 %v1193
    %v1510 = vunpack.c.l.s8.bf16 %v1194
    %v1511 = vunpack.c.l.s8.bf16 %v1195
    %v1512 = vunpack.c.h.s8.bf16 %v1192
    %v1513 = vunpack.c.h.s8.bf16 %v1193
    %v1514 = vunpack.c.h.s8.bf16 %v1194
    %v1515 = vunpack.c.h.s8.bf16 %v1195
    %v1516 = vunpack.c.l.s8.bf16 %v1196
    %v1517 = vunpack.c.l.s8.bf16 %v1197
    %v1518 = vunpack.c.l.s8.bf16 %v1198
    %v1519 = vunpack.c.l.s8.bf16 %v1199
    %v1520 = vunpack.c.h.s8.bf16 %v1196
    %v1521 = vunpack.c.h.s8.bf16 %v1197
    %v1522 = vunpack.c.h.s8.bf16 %v1198
    %v1523 = vunpack.c.h.s8.bf16 %v1199
    %v1524 = vunpack.c.l.s8.bf16 %v1200
    %v1525 = vunpack.c.l.s8.bf16 %v1201
    %v1526 = vunpack.c.l.s8.bf16 %v1202
    %v1527 = vunpack.c.l.s8.bf16 %v1203
    %v1528 = vunpack.c.h.s8.bf16 %v1200
    %v1529 = vunpack.c.h.s8.bf16 %v1201
    %v1530 = vunpack.c.h.s8.bf16 %v1202
    %v1531 = vunpack.c.h.s8.bf16 %v1203
    %v1532 = vunpack.c.l.s8.bf16 %v1204
    %v1533 = vunpack.c.l.s8.bf16 %v1205
    %v1534 = vunpack.c.l.s8.bf16 %v1206
    %v1535 = vunpack.c.l.s8.bf16 %v1207
    %v1536 = vunpack.c.h.s8.bf16 %v1204
    %v1537 = vunpack.c.h.s8.bf16 %v1205
    %v1538 = vunpack.c.h.s8.bf16 %v1206
    %v1539 = vunpack.c.h.s8.bf16 %v1207
    %v1540 = vunpack.c.l.s8.bf16 %v1208
    %v1541 = vunpack.c.l.s8.bf16 %v1209
    %v1542 = vunpack.c.l.s8.bf16 %v1210
    %v1543 = vunpack.c.l.s8.bf16 %v1211
    %v1544 = vunpack.c.h.s8.bf16 %v1208
    %v1545 = vunpack.c.h.s8.bf16 %v1209
    %v1546 = vunpack.c.h.s8.bf16 %v1210
    %v1547 = vunpack.c.h.s8.bf16 %v1211
    %v1548 = vunpack.c.l.s8.bf16 %v1212
    %v1549 = vunpack.c.l.s8.bf16 %v1213
    %v1550 = vunpack.c.l.s8.bf16 %v1214
    %v1551 = vunpack.c.l.s8.bf16 %v1215
    %v1552 = vunpack.c.h.s8.bf16 %v1212
    %v1553 = vunpack.c.h.s8.bf16 %v1213
    %v1554 = vunpack.c.h.s8.bf16 %v1214
    %v1555 = vunpack.c.h.s8.bf16 %v1215
    %v1556 = vunpack.c.l.s8.bf16 %v1216
    %v1557 = vunpack.c.l.s8.bf16 %v1217
    %v1558 = vunpack.c.l.s8.bf16 %v1218
    %v1559 = vunpack.c.l.s8.bf16 %v1219
    %v1560 = vunpack.c.h.s8.bf16 %v1216
    %v1561 = vunpack.c.h.s8.bf16 %v1217
    %v1562 = vunpack.c.h.s8.bf16 %v1218
    %v1563 = vunpack.c.h.s8.bf16 %v1219
    %v1564 = vunpack.c.l.s8.bf16 %v1220
    %v1565 = vunpack.c.l.s8.bf16 %v1221
    %v1566 = vunpack.c.l.s8.bf16 %v1222
    %v1567 = vunpack.c.l.s8.bf16 %v1223
    %v1568 = vunpack.c.h.s8.bf16 %v1220
    %v1569 = vunpack.c.h.s8.bf16 %v1221
    %v1570 = vunpack.c.h.s8.bf16 %v1222
    %v1571 = vunpack.c.h.s8.bf16 %v1223
    %v1572 = vunpack.c.l.s8.bf16 %v1224
    %v1573 = vunpack.c.l.s8.bf16 %v1225
    %v1574 = vunpack.c.l.s8.bf16 %v1226
    %v1575 = vunpack.c.l.s8.bf16 %v1227
    %v1576 = vunpack.c.h.s8.bf16 %v1224
    %v1577 = vunpack.c.h.s8.bf16 %v1225
    %v1578 = vunpack.c.h.s8.bf16 %v1226
    %v1579 = vunpack.c.h.s8.bf16 %v1227
    %v1580 = vunpack.c.l.s8.bf16 %v1228
    %v1581 = vunpack.c.l.s8.bf16 %v1229
    %v1582 = vunpack.c.l.s8.bf16 %v1230
    %v1583 = vunpack.c.l.s8.bf16 %v1231
    %v1584 = vunpack.c.h.s8.bf16 %v1228
    %v1585 = vunpack.c.h.s8.bf16 %v1229
    %v1586 = vunpack.c.h.s8.bf16 %v1230
    %v1587 = vunpack.c.h.s8.bf16 %v1231
    %v1588 = vunpack.c.l.s8.bf16 %v1232
    %v1589 = vunpack.c.l.s8.bf16 %v1233
    %v1590 = vunpack.c.l.s8.bf16 %v1234
    %v1591 = vunpack.c.l.s8.bf16 %v1235
    %v1592 = vunpack.c.h.s8.bf16 %v1232
    %v1593 = vunpack.c.h.s8.bf16 %v1233
    %v1594 = vunpack.c.h.s8.bf16 %v1234
    %v1595 = vunpack.c.h.s8.bf16 %v1235
    %v1596 = vunpack.c.l.s8.bf16 %v1236
    %v1597 = vunpack.c.l.s8.bf16 %v1237
    %v1598 = vunpack.c.l.s8.bf16 %v1238
    %v1599 = vunpack.c.l.s8.bf16 %v1239
    %v1600 = vunpack.c.h.s8.bf16 %v1236
    %v1601 = vunpack.c.h.s8.bf16 %v1237
    %v1602 = vunpack.c.h.s8.bf16 %v1238
    %v1603 = vunpack.c.h.s8.bf16 %v1239
    %v1604 = vunpack.c.l.s8.bf16 %v1240
    %v1605 = vunpack.c.l.s8.bf16 %v1241
    %v1606 = vunpack.c.l.s8.bf16 %v1242
    %v1607 = vunpack.c.l.s8.bf16 %v1243
    %v1608 = vunpack.c.h.s8.bf16 %v1240
    %v1609 = vunpack.c.h.s8.bf16 %v1241
    %v1610 = vunpack.c.h.s8.bf16 %v1242
    %v1611 = vunpack.c.h.s8.bf16 %v1243
    %v1612 = vunpack.c.l.s8.bf16 %v1244
    %v1613 = vunpack.c.l.s8.bf16 %v1245
    %v1614 = vunpack.c.l.s8.bf16 %v1246
    %v1615 = vunpack.c.l.s8.bf16 %v1247
    %v1616 = vunpack.c.h.s8.bf16 %v1244
    %v1617 = vunpack.c.h.s8.bf16 %v1245
    %v1618 = vunpack.c.h.s8.bf16 %v1246
    %v1619 = vunpack.c.h.s8.bf16 %v1247
    %v1620 = vunpack.c.l.s8.bf16 %v1248
    %v1621 = vunpack.c.l.s8.bf16 %v1249
    %v1622 = vunpack.c.l.s8.bf16 %v1250
    %v1623 = vunpack.c.l.s8.bf16 %v1251
    %v1624 = vunpack.c.h.s8.bf16 %v1248
    %v1625 = vunpack.c.h.s8.bf16 %v1249
    %v1626 = vunpack.c.h.s8.bf16 %v1250
    %v1627 = vunpack.c.h.s8.bf16 %v1251
    %v1628 = vunpack.c.l.s8.bf16 %v1252
    %v1629 = vunpack.c.l.s8.bf16 %v1253
    %v1630 = vunpack.c.l.s8.bf16 %v1254
    %v1631 = vunpack.c.l.s8.bf16 %v1255
    %v1632 = vunpack.c.h.s8.bf16 %v1252
    %v1633 = vunpack.c.h.s8.bf16 %v1253
    %v1634 = vunpack.c.h.s8.bf16 %v1254
    %v1635 = vunpack.c.h.s8.bf16 %v1255
    %v1636 = vunpack.c.l.s8.bf16 %v1256
    %v1637 = vunpack.c.l.s8.bf16 %v1257
    %v1638 = vunpack.c.l.s8.bf16 %v1258
    %v1639 = vunpack.c.l.s8.bf16 %v1259
    %v1640 = vunpack.c.h.s8.bf16 %v1256
    %v1641 = vunpack.c.h.s8.bf16 %v1257
    %v1642 = vunpack.c.h.s8.bf16 %v1258
    %v1643 = vunpack.c.h.s8.bf16 %v1259
    %v1644 = vunpack.c.l.s8.bf16 %v1260
    %v1645 = vunpack.c.l.s8.bf16 %v1261
    %v1646 = vunpack.c.l.s8.bf16 %v1262
    %v1647 = vunpack.c.l.s8.bf16 %v1263
    %v1648 = vunpack.c.h.s8.bf16 %v1260
    %v1649 = vunpack.c.h.s8.bf16 %v1261
    %v1650 = vunpack.c.h.s8.bf16 %v1262
    %v1651 = vunpack.c.h.s8.bf16 %v1263
    %v1652 = vunpack.c.l.s8.bf16 %v1264
    %v1653 = vunpack.c.l.s8.bf16 %v1265
    %v1654 = vunpack.c.l.s8.bf16 %v1266
    %v1655 = vunpack.c.l.s8.bf16 %v1267
    %v1656 = vunpack.c.h.s8.bf16 %v1264
    %v1657 = vunpack.c.h.s8.bf16 %v1265
    %v1658 = vunpack.c.h.s8.bf16 %v1266
    %v1659 = vunpack.c.h.s8.bf16 %v1267
    %v1660 = vunpack.c.l.s8.bf16 %v1268
    %v1661 = vunpack.c.l.s8.bf16 %v1269
    %v1662 = vunpack.c.l.s8.bf16 %v1270
    %v1663 = vunpack.c.l.s8.bf16 %v1271
    %v1664 = vunpack.c.h.s8.bf16 %v1268
    %v1665 = vunpack.c.h.s8.bf16 %v1269
    %v1666 = vunpack.c.h.s8.bf16 %v1270
    %v1667 = vunpack.c.h.s8.bf16 %v1271
    %v1668 = vunpack.c.l.s8.bf16 %v1272
    %v1669 = vunpack.c.l.s8.bf16 %v1273
    %v1670 = vunpack.c.l.s8.bf16 %v1274
    %v1671 = vunpack.c.l.s8.bf16 %v1275
    %v1672 = vunpack.c.h.s8.bf16 %v1272
    %v1673 = vunpack.c.h.s8.bf16 %v1273
    %v1674 = vunpack.c.h.s8.bf16 %v1274
    %v1675 = vunpack.c.h.s8.bf16 %v1275
    %v1676 = vunpack.c.l.s8.bf16 %v1276
    %v1677 = vunpack.c.l.s8.bf16 %v1277
    %v1678 = vunpack.c.l.s8.bf16 %v1278
    %v1679 = vunpack.c.l.s8.bf16 %v1279
    %v1680 = vunpack.c.h.s8.bf16 %v1276
    %v1681 = vunpack.c.h.s8.bf16 %v1277
    %v1682 = vunpack.c.h.s8.bf16 %v1278
    %v1683 = vunpack.c.h.s8.bf16 %v1279
    %v1684 = vunpack.c.l.s8.bf16 %v1280
    %v1685 = vunpack.c.l.s8.bf16 %v1281
    %v1686 = vunpack.c.l.s8.bf16 %v1282
    %v1687 = vunpack.c.l.s8.bf16 %v1283
    %v1688 = vunpack.c.h.s8.bf16 %v1280
    %v1689 = vunpack.c.h.s8.bf16 %v1281
    %v1690 = vunpack.c.h.s8.bf16 %v1282
    %v1691 = vunpack.c.h.s8.bf16 %v1283
    %v1692 = vunpack.c.l.s8.bf16 %v1284
    %v1693 = vunpack.c.l.s8.bf16 %v1285
    %v1694 = vunpack.c.l.s8.bf16 %v1286
    %v1695 = vunpack.c.l.s8.bf16 %v1287
    %v1696 = vunpack.c.h.s8.bf16 %v1284
    %v1697 = vunpack.c.h.s8.bf16 %v1285
    %v1698 = vunpack.c.h.s8.bf16 %v1286
    %v1699 = vunpack.c.h.s8.bf16 %v1287
    %v1700 = vunpack.c.l.s8.bf16 %v1288
    %v1701 = vunpack.c.l.s8.bf16 %v1289
    %v1702 = vunpack.c.l.s8.bf16 %v1290
    %v1703 = vunpack.c.l.s8.bf16 %v1291
    %v1704 = vunpack.c.h.s8.bf16 %v1288
    %v1705 = vunpack.c.h.s8.bf16 %v1289
    %v1706 = vunpack.c.h.s8.bf16 %v1290
    %v1707 = vunpack.c.h.s8.bf16 %v1291
    %v1708 = vunpack.c.l.s8.bf16 %v1292
    %v1709 = vunpack.c.l.s8.bf16 %v1293
    %v1710 = vunpack.c.l.s8.bf16 %v1294
    %v1711 = vunpack.c.l.s8.bf16 %v1295
    %v1712 = vunpack.c.h.s8.bf16 %v1292
    %v1713 = vunpack.c.h.s8.bf16 %v1293
    %v1714 = vunpack.c.h.s8.bf16 %v1294
    %v1715 = vunpack.c.h.s8.bf16 %v1295
    %v1716 = vunpack.c.l.s8.bf16 %v1296
    %v1717 = vunpack.c.l.s8.bf16 %v1297
    %v1718 = vunpack.c.l.s8.bf16 %v1298
    %v1719 = vunpack.c.l.s8.bf16 %v1299
    %v1720 = vunpack.c.h.s8.bf16 %v1296
    %v1721 = vunpack.c.h.s8.bf16 %v1297
    %v1722 = vunpack.c.h.s8.bf16 %v1298
    %v1723 = vunpack.c.h.s8.bf16 %v1299
    %v1724 = vunpack.c.l.s8.bf16 %v1300
    %v1725 = vunpack.c.l.s8.bf16 %v1301
    %v1726 = vunpack.c.l.s8.bf16 %v1302
    %v1727 = vunpack.c.l.s8.bf16 %v1303
    %v1728 = vunpack.c.h.s8.bf16 %v1300
    %v1729 = vunpack.c.h.s8.bf16 %v1301
    %v1730 = vunpack.c.h.s8.bf16 %v1302
    %v1731 = vunpack.c.h.s8.bf16 %v1303
    %v1732 = vunpack.c.l.s8.bf16 %v1304
    %v1733 = vunpack.c.l.s8.bf16 %v1305
    %v1734 = vunpack.c.l.s8.bf16 %v1306
    %v1735 = vunpack.c.l.s8.bf16 %v1307
    %v1736 = vunpack.c.h.s8.bf16 %v1304
    %v1737 = vunpack.c.h.s8.bf16 %v1305
    %v1738 = vunpack.c.h.s8.bf16 %v1306
    %v1739 = vunpack.c.h.s8.bf16 %v1307
    %v1740 = vunpack.c.l.s8.bf16 %v1308
    %v1741 = vunpack.c.l.s8.bf16 %v1309
    %v1742 = vunpack.c.l.s8.bf16 %v1310
    %v1743 = vunpack.c.l.s8.bf16 %v1311
    %v1744 = vunpack.c.h.s8.bf16 %v1308
    %v1745 = vunpack.c.h.s8.bf16 %v1309
    %v1746 = vunpack.c.h.s8.bf16 %v1310
    %v1747 = vunpack.c.h.s8.bf16 %v1311
    %v1748 = vunpack.c.l.s8.bf16 %v1312
    %v1749 = vunpack.c.l.s8.bf16 %v1313
    %v1750 = vunpack.c.l.s8.bf16 %v1314
    %v1751 = vunpack.c.l.s8.bf16 %v1315
    %v1752 = vunpack.c.h.s8.bf16 %v1312
    %v1753 = vunpack.c.h.s8.bf16 %v1313
    %v1754 = vunpack.c.h.s8.bf16 %v1314
    %v1755 = vunpack.c.h.s8.bf16 %v1315
    %v1756 = vunpack.c.l.s8.bf16 %v1316
    %v1757 = vunpack.c.l.s8.bf16 %v1317
    %v1758 = vunpack.c.l.s8.bf16 %v1318
    %v1759 = vunpack.c.l.s8.bf16 %v1319
    %v1760 = vunpack.c.h.s8.bf16 %v1316
    %v1761 = vunpack.c.h.s8.bf16 %v1317
    %v1762 = vunpack.c.h.s8.bf16 %v1318
    %v1763 = vunpack.c.h.s8.bf16 %v1319
    %v1764 = vunpack.c.l.s8.bf16 %v1320
    %v1765 = vunpack.c.l.s8.bf16 %v1321
    %v1766 = vunpack.c.l.s8.bf16 %v1322
    %v1767 = vunpack.c.l.s8.bf16 %v1323
    %v1768 = vunpack.c.h.s8.bf16 %v1320
    %v1769 = vunpack.c.h.s8.bf16 %v1321
    %v1770 = vunpack.c.h.s8.bf16 %v1322
    %v1771 = vunpack.c.h.s8.bf16 %v1323
    %v1772 = vunpack.c.l.s8.bf16 %v1324
    %v1773 = vunpack.c.l.s8.bf16 %v1325
    %v1774 = vunpack.c.l.s8.bf16 %v1326
    %v1775 = vunpack.c.l.s8.bf16 %v1327
    %v1776 = vunpack.c.h.s8.bf16 %v1324
    %v1777 = vunpack.c.h.s8.bf16 %v1325
    %v1778 = vunpack.c.h.s8.bf16 %v1326
    %v1779 = vunpack.c.h.s8.bf16 %v1327
    %v1780 = vunpack.c.l.s8.bf16 %v1328
    %v1781 = vunpack.c.l.s8.bf16 %v1329
    %v1782 = vunpack.c.l.s8.bf16 %v1330
    %v1783 = vunpack.c.l.s8.bf16 %v1331
    %v1784 = vunpack.c.h.s8.bf16 %v1328
    %v1785 = vunpack.c.h.s8.bf16 %v1329
    %v1786 = vunpack.c.h.s8.bf16 %v1330
    %v1787 = vunpack.c.h.s8.bf16 %v1331
    %v1788 = vunpack.c.l.s8.bf16 %v1332
    %v1789 = vunpack.c.l.s8.bf16 %v1333
    %v1790 = vunpack.c.l.s8.bf16 %v1334
    %v1791 = vunpack.c.l.s8.bf16 %v1335
    %v1792 = vunpack.c.h.s8.bf16 %v1332
    %v1793 = vunpack.c.h.s8.bf16 %v1333
    %v1794 = vunpack.c.h.s8.bf16 %v1334
    %v1795 = vunpack.c.h.s8.bf16 %v1335
    %v1796 = vunpack.c.l.s8.bf16 %v1336
    %v1797 = vunpack.c.l.s8.bf16 %v1337
    %v1798 = vunpack.c.l.s8.bf16 %v1338
    %v1799 = vunpack.c.l.s8.bf16 %v1339
    %v1800 = vunpack.c.h.s8.bf16 %v1336
    %v1801 = vunpack.c.h.s8.bf16 %v1337
    %v1802 = vunpack.c.h.s8.bf16 %v1338
    %v1803 = vunpack.c.h.s8.bf16 %v1339
    %v1804 = vunpack.c.l.s8.bf16 %v1340
    %v1805 = vunpack.c.l.s8.bf16 %v1341
    %v1806 = vunpack.c.l.s8.bf16 %v1342
    %v1807 = vunpack.c.l.s8.bf16 %v1343
    %v1808 = vunpack.c.h.s8.bf16 %v1340
    %v1809 = vunpack.c.h.s8.bf16 %v1341
    %v1810 = vunpack.c.h.s8.bf16 %v1342
    %v1811 = vunpack.c.h.s8.bf16 %v1343
    %v1812 = vunpack.c.l.s8.bf16 %v1344
    %v1813 = vunpack.c.l.s8.bf16 %v1345
    %v1814 = vunpack.c.l.s8.bf16 %v1346
    %v1815 = vunpack.c.l.s8.bf16 %v1347
    %v1816 = vunpack.c.h.s8.bf16 %v1344
    %v1817 = vunpack.c.h.s8.bf16 %v1345
    %v1818 = vunpack.c.h.s8.bf16 %v1346
    %v1819 = vunpack.c.h.s8.bf16 %v1347
    %v1820 = vunpack.c.l.s8.bf16 %v1348
    %v1821 = vunpack.c.l.s8.bf16 %v1349
    %v1822 = vunpack.c.l.s8.bf16 %v1350
    %v1823 = vunpack.c.l.s8.bf16 %v1351
    %v1824 = vunpack.c.h.s8.bf16 %v1348
    %v1825 = vunpack.c.h.s8.bf16 %v1349
    %v1826 = vunpack.c.h.s8.bf16 %v1350
    %v1827 = vunpack.c.h.s8.bf16 %v1351
    %v1828 = vunpack.c.l.s8.bf16 %v1352
    %v1829 = vunpack.c.l.s8.bf16 %v1353
    %v1830 = vunpack.c.l.s8.bf16 %v1354
    %v1831 = vunpack.c.l.s8.bf16 %v1355
    %v1832 = vunpack.c.h.s8.bf16 %v1352
    %v1833 = vunpack.c.h.s8.bf16 %v1353
    %v1834 = vunpack.c.h.s8.bf16 %v1354
    %v1835 = vunpack.c.h.s8.bf16 %v1355
    %v1836 = vunpack.c.l.s8.bf16 %v1356
    %v1837 = vunpack.c.l.s8.bf16 %v1357
    %v1838 = vunpack.c.l.s8.bf16 %v1358
    %v1839 = vunpack.c.l.s8.bf16 %v1359
    %v1840 = vunpack.c.h.s8.bf16 %v1356
    %v1841 = vunpack.c.h.s8.bf16 %v1357
    %v1842 = vunpack.c.h.s8.bf16 %v1358
    %v1843 = vunpack.c.h.s8.bf16 %v1359
    %v1844 = vunpack.c.l.s8.bf16 %v1360
    %v1845 = vunpack.c.l.s8.bf16 %v1361
    %v1846 = vunpack.c.l.s8.bf16 %v1362
    %v1847 = vunpack.c.l.s8.bf16 %v1363
    %v1848 = vunpack.c.h.s8.bf16 %v1360
    %v1849 = vunpack.c.h.s8.bf16 %v1361
    %v1850 = vunpack.c.h.s8.bf16 %v1362
    %v1851 = vunpack.c.h.s8.bf16 %v1363
    %v1852 = vunpack.c.l.s8.bf16 %v1364
    %v1853 = vunpack.c.l.s8.bf16 %v1365
    %v1854 = vunpack.c.l.s8.bf16 %v1366
    %v1855 = vunpack.c.l.s8.bf16 %v1367
    %v1856 = vunpack.c.h.s8.bf16 %v1364
    %v1857 = vunpack.c.h.s8.bf16 %v1365
    %v1858 = vunpack.c.h.s8.bf16 %v1366
    %v1859 = vunpack.c.h.s8.bf16 %v1367
    %v1860 = vunpack.c.l.s8.bf16 %v1368
    %v1861 = vunpack.c.l.s8.bf16 %v1369
    %v1862 = vunpack.c.l.s8.bf16 %v1370
    %v1863 = vunpack.c.l.s8.bf16 %v1371
    %v1864 = vunpack.c.h.s8.bf16 %v1368
    %v1865 = vunpack.c.h.s8.bf16 %v1369
    %v1866 = vunpack.c.h.s8.bf16 %v1370
    %v1867 = vunpack.c.h.s8.bf16 %v1371
    %v1868 = vunpack.c.l.s8.bf16 %v1372
    %v1869 = vunpack.c.l.s8.bf16 %v1373
    %v1870 = vunpack.c.l.s8.bf16 %v1374
    %v1871 = vunpack.c.l.s8.bf16 %v1375
    %v1872 = vunpack.c.h.s8.bf16 %v1372
    %v1873 = vunpack.c.h.s8.bf16 %v1373
    %v1874 = vunpack.c.h.s8.bf16 %v1374
    %v1875 = vunpack.c.h.s8.bf16 %v1375
    %v1876 = vunpack.c.l.s8.bf16 %v1376
    %v1877 = vunpack.c.l.s8.bf16 %v1377
    %v1878 = vunpack.c.l.s8.bf16 %v1378
    %v1879 = vunpack.c.l.s8.bf16 %v1379
    %v1880 = vunpack.c.h.s8.bf16 %v1376
    %v1881 = vunpack.c.h.s8.bf16 %v1377
    %v1882 = vunpack.c.h.s8.bf16 %v1378
    %v1883 = vunpack.c.h.s8.bf16 %v1379
    %v1884 = vunpack.c.l.s8.bf16 %v1380
    %v1885 = vunpack.c.l.s8.bf16 %v1381
    %v1886 = vunpack.c.l.s8.bf16 %v1382
    %v1887 = vunpack.c.l.s8.bf16 %v1383
    %v1888 = vunpack.c.h.s8.bf16 %v1380
    %v1889 = vunpack.c.h.s8.bf16 %v1381
    %v1890 = vunpack.c.h.s8.bf16 %v1382
    %v1891 = vunpack.c.h.s8.bf16 %v1383
    %v1892 = vunpack.c.l.s8.bf16 %v1384
    %v1893 = vunpack.c.l.s8.bf16 %v1385
    %v1894 = vunpack.c.l.s8.bf16 %v1386
    %v1895 = vunpack.c.l.s8.bf16 %v1387
    %v1896 = vunpack.c.h.s8.bf16 %v1384
    %v1897 = vunpack.c.h.s8.bf16 %v1385
    %v1898 = vunpack.c.h.s8.bf16 %v1386
    %v1899 = vunpack.c.h.s8.bf16 %v1387
    %1900 = vmatprep.subr.bf16.mxu0 %v1389
    %1901 = vmatpush1.bf16.msra.mxu0 %v1388
    %1902 = vmatprep.subr.bf16.mxu0 %v1393
    %1903 = vmatpush1.bf16.msra.mxu0 %v1392
    %1904 = vmatprep.subr.bf16.mxu0 %v1397
    %1905 = vmatpush1.bf16.msra.mxu0 %v1396
    %1906 = vmatprep.subr.bf16.mxu0 %v1401
    %1907 = vmatpush1.bf16.msra.mxu0 %v1400
    %1908 = vmatprep.subr.bf16.mxu0 %v1405
    %1909 = vmatpush1.bf16.msra.mxu0 %v1404
    %1910 = vmatprep.subr.bf16.mxu0 %v1409
    %1911 = vmatpush1.bf16.msra.mxu0 %v1408
    %1912 = vmatprep.subr.bf16.mxu0 %v1413
    %1913 = vmatpush1.bf16.msra.mxu0 %v1412
    %1914 = vmatprep.subr.bf16.mxu0 %v1417
    %1915 = vmatpush1.bf16.msra.mxu0 %v1416
    %1916 = vmatprep.subr.bf16.mxu0 %v1421
    %1917 = vmatpush1.bf16.msra.mxu0 %v1420
    %1918 = vmatprep.subr.bf16.mxu0 %v1425
    %1919 = vmatpush1.bf16.msra.mxu0 %v1424
    %1920 = vmatprep.subr.bf16.mxu0 %v1429
    %1921 = vmatpush1.bf16.msra.mxu0 %v1428
    %1922 = vmatprep.subr.bf16.mxu0 %v1433
    %1923 = vmatpush1.bf16.msra.mxu0 %v1432
    %1924 = vmatprep.subr.bf16.mxu0 %v1437
    %1925 = vmatpush1.bf16.msra.mxu0 %v1436
    %1926 = vmatprep.subr.bf16.mxu0 %v1441
    %1927 = vmatpush1.bf16.msra.mxu0 %v1440
    %1928 = vmatprep.subr.bf16.mxu0 %v1445
    %1929 = vmatpush1.bf16.msra.mxu0 %v1444
    %1930 = vmatprep.subr.bf16.mxu0 %v1449
    %1931 = vmatpush1.bf16.msra.mxu0 %v1448
    %1932 = vmatprep.mubr.bf16.mxu0 %v1117
    %1933 = vmatmul.mubr.bf16.gmra.mrb[0].mxu0 %v1116
    %v1934 = vpop.f32.mrb[0].mxu0
    %v1935 = vadd.f32 0.0, %v1934
    %v1936 = vpop.f32.mrb[0].mxu0
    %v1937 = vadd.f32 0.0, %v1936
    %v1938 = vpop.f32.mrb[0].mxu0
    %v1939 = vadd.f32 0.0, %v1938
    %v1940 = vpop.f32.mrb[0].mxu0
    %v1941 = vadd.f32 0.0, %v1940
    %1942 = vdwg.mxu0
    %1943 = vmatprep.subr.bf16.mxu0 %v1453
    %1944 = vmatpush1.bf16.msra.mxu0 %v1452
    %1945 = vmatprep.subr.bf16.mxu0 %v1457
    %1946 = vmatpush1.bf16.msra.mxu0 %v1456
    %1947 = vmatprep.subr.bf16.mxu0 %v1461
    %1948 = vmatpush1.bf16.msra.mxu0 %v1460
    %1949 = vmatprep.subr.bf16.mxu0 %v1465
    %1950 = vmatpush1.bf16.msra.mxu0 %v1464
    %1951 = vmatprep.subr.bf16.mxu0 %v1469
    %1952 = vmatpush1.bf16.msra.mxu0 %v1468
    %1953 = vmatprep.subr.bf16.mxu0 %v1473
    %1954 = vmatpush1.bf16.msra.mxu0 %v1472
    %1955 = vmatprep.subr.bf16.mxu0 %v1477
    %1956 = vmatpush1.bf16.msra.mxu0 %v1476
    %1957 = vmatprep.subr.bf16.mxu0 %v1481
    %1958 = vmatpush1.bf16.msra.mxu0 %v1480
    %1959 = vmatprep.subr.bf16.mxu0 %v1485
    %1960 = vmatpush1.bf16.msra.mxu0 %v1484
    %1961 = vmatprep.subr.bf16.mxu0 %v1489
    %1962 = vmatpush1.bf16.msra.mxu0 %v1488
    %1963 = vmatprep.subr.bf16.mxu0 %v1493
    %1964 = vmatpush1.bf16.msra.mxu0 %v1492
    %1965 = vmatprep.subr.bf16.mxu0 %v1497
    %1966 = vmatpush1.bf16.msra.mxu0 %v1496
    %1967 = vmatprep.subr.bf16.mxu0 %v1501
    %1968 = vmatpush1.bf16.msra.mxu0 %v1500
    %1969 = vmatprep.subr.bf16.mxu0 %v1505
    %1970 = vmatpush1.bf16.msra.mxu0 %v1504
    %1971 = vmatprep.subr.bf16.mxu0 %v1509
    %1972 = vmatpush1.bf16.msra.mxu0 %v1508
    %1973 = vmatprep.subr.bf16.mxu0 %v1513
    %1974 = vmatpush1.bf16.msra.mxu0 %v1512
    %1975 = vmatprep.mubr.bf16.mxu0 %v1119
    %1976 = vmatmul.mubr.bf16.gmra.mrb[0].mxu0 %v1118
    %v1977 = vpop.f32.mrb[0].mxu0
    %v1978 = vadd.f32 %v1935, %v1977
    %v1979 = vpop.f32.mrb[0].mxu0
    %v1980 = vadd.f32 %v1937, %v1979
    %v1981 = vpop.f32.mrb[0].mxu0
    %v1982 = vadd.f32 %v1939, %v1981
    %v1983 = vpop.f32.mrb[0].mxu0
    %v1984 = vadd.f32 %v1941, %v1983
    %1985 = vdwg.mxu0
    %1986 = vmatprep.subr.bf16.mxu0 %v1517
    %1987 = vmatpush1.bf16.msra.mxu0 %v1516
    %1988 = vmatprep.subr.bf16.mxu0 %v1521
    %1989 = vmatpush1.bf16.msra.mxu0 %v1520
    %1990 = vmatprep.subr.bf16.mxu0 %v1525
    %1991 = vmatpush1.bf16.msra.mxu0 %v1524
    %1992 = vmatprep.subr.bf16.mxu0 %v1529
    %1993 = vmatpush1.bf16.msra.mxu0 %v1528
    %1994 = vmatprep.subr.bf16.mxu0 %v1533
    %1995 = vmatpush1.bf16.msra.mxu0 %v1532
    %1996 = vmatprep.subr.bf16.mxu0 %v1537
    %1997 = vmatpush1.bf16.msra.mxu0 %v1536
    %1998 = vmatprep.subr.bf16.mxu0 %v1541
    %1999 = vmatpush1.bf16.msra.mxu0 %v1540
    %2000 = vmatprep.subr.bf16.mxu0 %v1545
    %2001 = vmatpush1.bf16.msra.mxu0 %v1544
    %2002 = vmatprep.subr.bf16.mxu0 %v1549
    %2003 = vmatpush1.bf16.msra.mxu0 %v1548
    %2004 = vmatprep.subr.bf16.mxu0 %v1553
    %2005 = vmatpush1.bf16.msra.mxu0 %v1552
    %2006 = vmatprep.subr.bf16.mxu0 %v1557
    %2007 = vmatpush1.bf16.msra.mxu0 %v1556
    %2008 = vmatprep.subr.bf16.mxu0 %v1561
    %2009 = vmatpush1.bf16.msra.mxu0 %v1560
    %2010 = vmatprep.subr.bf16.mxu0 %v1565
    %2011 = vmatpush1.bf16.msra.mxu0 %v1564
    %2012 = vmatprep.subr.bf16.mxu0 %v1569
    %2013 = vmatpush1.bf16.msra.mxu0 %v1568
    %2014 = vmatprep.subr.bf16.mxu0 %v1573
    %2015 = vmatpush1.bf16.msra.mxu0 %v1572
    %2016 = vmatprep.subr.bf16.mxu0 %v1577
    %2017 = vmatpush1.bf16.msra.mxu0 %v1576
    %2018 = vmatprep.mubr.bf16.mxu0 %v1121
    %2019 = vmatmul.mubr.bf16.gmra.mrb[0].mxu0 %v1120
    %v2020 = vpop.f32.mrb[0].mxu0
    %v2021 = vadd.f32 %v1978, %v2020
    %v2022 = vpop.f32.mrb[0].mxu0
    %v2023 = vadd.f32 %v1980, %v2022
    %v2024 = vpop.f32.mrb[0].mxu0
    %v2025 = vadd.f32 %v1982, %v2024
    %v2026 = vpop.f32.mrb[0].mxu0
    %v2027 = vadd.f32 %v1984, %v2026
    %2028 = vdwg.mxu0
    %2029 = vmatprep.subr.bf16.mxu0 %v1581
    %2030 = vmatpush1.bf16.msra.mxu0 %v1580
    %2031 = vmatprep.subr.bf16.mxu0 %v1585
    %2032 = vmatpush1.bf16.msra.mxu0 %v1584
    %2033 = vmatprep.subr.bf16.mxu0 %v1589
    %2034 = vmatpush1.bf16.msra.mxu0 %v1588
    %2035 = vmatprep.subr.bf16.mxu0 %v1593
    %2036 = vmatpush1.bf16.msra.mxu0 %v1592
    %2037 = vmatprep.subr.bf16.mxu0 %v1597
    %2038 = vmatpush1.bf16.msra.mxu0 %v1596
    %2039 = vmatprep.subr.bf16.mxu0 %v1601
    %2040 = vmatpush1.bf16.msra.mxu0 %v1600
    %2041 = vmatprep.subr.bf16.mxu0 %v1605
    %2042 = vmatpush1.bf16.msra.mxu0 %v1604
    %2043 = vmatprep.subr.bf16.mxu0 %v1609
    %2044 = vmatpush1.bf16.msra.mxu0 %v1608
    %2045 = vmatprep.subr.bf16.mxu0 %v1613
    %2046 = vmatpush1.bf16.msra.mxu0 %v1612
    %2047 = vmatprep.subr.bf16.mxu0 %v1617
    %2048 = vmatpush1.bf16.msra.mxu0 %v1616
    %2049 = vmatprep.subr.bf16.mxu0 %v1621
    %2050 = vmatpush1.bf16.msra.mxu0 %v1620
    %2051 = vmatprep.subr.bf16.mxu0 %v1625
    %2052 = vmatpush1.bf16.msra.mxu0 %v1624
    %2053 = vmatprep.subr.bf16.mxu0 %v1629
    %2054 = vmatpush1.bf16.msra.mxu0 %v1628
    %2055 = vmatprep.subr.bf16.mxu0 %v1633
    %2056 = vmatpush1.bf16.msra.mxu0 %v1632
    %2057 = vmatprep.subr.bf16.mxu0 %v1637
    %2058 = vmatpush1.bf16.msra.mxu0 %v1636
    %2059 = vmatprep.subr.bf16.mxu0 %v1641
    %2060 = vmatpush1.bf16.msra.mxu0 %v1640
    %2061 = vmatprep.mubr.bf16.mxu0 %v1123
    %2062 = vmatmul.mubr.bf16.gmra.mrb[0].mxu0 %v1122
    %v2063 = vpop.f32.mrb[0].mxu0
    %v2064 = vadd.f32 %v2021, %v2063
    %v2065 = vpop.f32.mrb[0].mxu0
    %v2066 = vadd.f32 %v2023, %v2065
    %v2067 = vpop.f32.mrb[0].mxu0
    %v2068 = vadd.f32 %v2025, %v2067
    %v2069 = vpop.f32.mrb[0].mxu0
    %v2070 = vadd.f32 %v2027, %v2069
    %2071 = vdwg.mxu0
    %2072 = vmatprep.subr.bf16.mxu0 %v1645
    %2073 = vmatpush1.bf16.msra.mxu0 %v1644
    %2074 = vmatprep.subr.bf16.mxu0 %v1649
    %2075 = vmatpush1.bf16.msra.mxu0 %v1648
    %2076 = vmatprep.subr.bf16.mxu0 %v1653
    %2077 = vmatpush1.bf16.msra.mxu0 %v1652
    %2078 = vmatprep.subr.bf16.mxu0 %v1657
    %2079 = vmatpush1.bf16.msra.mxu0 %v1656
    %2080 = vmatprep.subr.bf16.mxu0 %v1661
    %2081 = vmatpush1.bf16.msra.mxu0 %v1660
    %2082 = vmatprep.subr.bf16.mxu0 %v1665
    %2083 = vmatpush1.bf16.msra.mxu0 %v1664
    %2084 = vmatprep.subr.bf16.mxu0 %v1669
    %2085 = vmatpush1.bf16.msra.mxu0 %v1668
    %2086 = vmatprep.subr.bf16.mxu0 %v1673
    %2087 = vmatpush1.bf16.msra.mxu0 %v1672
    %2088 = vmatprep.subr.bf16.mxu0 %v1677
    %2089 = vmatpush1.bf16.msra.mxu0 %v1676
    %2090 = vmatprep.subr.bf16.mxu0 %v1681
    %2091 = vmatpush1.bf16.msra.mxu0 %v1680
    %2092 = vmatprep.subr.bf16.mxu0 %v1685
    %2093 = vmatpush1.bf16.msra.mxu0 %v1684
    %2094 = vmatprep.subr.bf16.mxu0 %v1689
    %2095 = vmatpush1.bf16.msra.mxu0 %v1688
    %2096 = vmatprep.subr.bf16.mxu0 %v1693
    %2097 = vmatpush1.bf16.msra.mxu0 %v1692
    %2098 = vmatprep.subr.bf16.mxu0 %v1697
    %2099 = vmatpush1.bf16.msra.mxu0 %v1696
    %2100 = vmatprep.subr.bf16.mxu0 %v1701
    %2101 = vmatpush1.bf16.msra.mxu0 %v1700
    %2102 = vmatprep.subr.bf16.mxu0 %v1705
    %2103 = vmatpush1.bf16.msra.mxu0 %v1704
    %2104 = vmatprep.mubr.bf16.mxu0 %v1125
    %2105 = vmatmul.mubr.bf16.gmra.mrb[0].mxu0 %v1124
    %v2106 = vpop.f32.mrb[0].mxu0
    %v2107 = vadd.f32 %v2064, %v2106
    %v2108 = vpop.f32.mrb[0].mxu0
    %v2109 = vadd.f32 %v2066, %v2108
    %v2110 = vpop.f32.mrb[0].mxu0
    %v2111 = vadd.f32 %v2068, %v2110
    %v2112 = vpop.f32.mrb[0].mxu0
    %v2113 = vadd.f32 %v2070, %v2112
    %2114 = vdwg.mxu0
    %2115 = vmatprep.subr.bf16.mxu0 %v1709
    %2116 = vmatpush1.bf16.msra.mxu0 %v1708
    %2117 = vmatprep.subr.bf16.mxu0 %v1713
    %2118 = vmatpush1.bf16.msra.mxu0 %v1712
    %2119 = vmatprep.subr.bf16.mxu0 %v1717
    %2120 = vmatpush1.bf16.msra.mxu0 %v1716
    %2121 = vmatprep.subr.bf16.mxu0 %v1721
    %2122 = vmatpush1.bf16.msra.mxu0 %v1720
    %2123 = vmatprep.subr.bf16.mxu0 %v1725
    %2124 = vmatpush1.bf16.msra.mxu0 %v1724
    %2125 = vmatprep.subr.bf16.mxu0 %v1729
    %2126 = vmatpush1.bf16.msra.mxu0 %v1728
    %2127 = vmatprep.subr.bf16.mxu0 %v1733
    %2128 = vmatpush1.bf16.msra.mxu0 %v1732
    %2129 = vmatprep.subr.bf16.mxu0 %v1737
    %2130 = vmatpush1.bf16.msra.mxu0 %v1736
    %2131 = vmatprep.subr.bf16.mxu0 %v1741
    %2132 = vmatpush1.bf16.msra.mxu0 %v1740
    %2133 = vmatprep.subr.bf16.mxu0 %v1745
    %2134 = vmatpush1.bf16.msra.mxu0 %v1744
    %2135 = vmatprep.subr.bf16.mxu0 %v1749
    %2136 = vmatpush1.bf16.msra.mxu0 %v1748
    %2137 = vmatprep.subr.bf16.mxu0 %v1753
    %2138 = vmatpush1.bf16.msra.mxu0 %v1752
    %2139 = vmatprep.subr.bf16.mxu0 %v1757
    %2140 = vmatpush1.bf16.msra.mxu0 %v1756
    %2141 = vmatprep.subr.bf16.mxu0 %v1761
    %2142 = vmatpush1.bf16.msra.mxu0 %v1760
    %2143 = vmatprep.subr.bf16.mxu0 %v1765
    %2144 = vmatpush1.bf16.msra.mxu0 %v1764
    %2145 = vmatprep.subr.bf16.mxu0 %v1769
    %2146 = vmatpush1.bf16.msra.mxu0 %v1768
    %2147 = vmatprep.mubr.bf16.mxu0 %v1127
    %2148 = vmatmul.mubr.bf16.gmra.mrb[0].mxu0 %v1126
    %v2149 = vpop.f32.mrb[0].mxu0
    %v2150 = vadd.f32 %v2107, %v2149
    %v2151 = vpop.f32.mrb[0].mxu0
    %v2152 = vadd.f32 %v2109, %v2151
    %v2153 = vpop.f32.mrb[0].mxu0
    %v2154 = vadd.f32 %v2111, %v2153
    %v2155 = vpop.f32.mrb[0].mxu0
    %v2156 = vadd.f32 %v2113, %v2155
    %2157 = vdwg.mxu0
    %2158 = vmatprep.subr.bf16.mxu0 %v1773
    %2159 = vmatpush1.bf16.msra.mxu0 %v1772
    %2160 = vmatprep.subr.bf16.mxu0 %v1777
    %2161 = vmatpush1.bf16.msra.mxu0 %v1776
    %2162 = vmatprep.subr.bf16.mxu0 %v1781
    %2163 = vmatpush1.bf16.msra.mxu0 %v1780
    %2164 = vmatprep.subr.bf16.mxu0 %v1785
    %2165 = vmatpush1.bf16.msra.mxu0 %v1784
    %2166 = vmatprep.subr.bf16.mxu0 %v1789
    %2167 = vmatpush1.bf16.msra.mxu0 %v1788
    %2168 = vmatprep.subr.bf16.mxu0 %v1793
    %2169 = vmatpush1.bf16.msra.mxu0 %v1792
    %2170 = vmatprep.subr.bf16.mxu0 %v1797
    %2171 = vmatpush1.bf16.msra.mxu0 %v1796
    %2172 = vmatprep.subr.bf16.mxu0 %v1801
    %2173 = vmatpush1.bf16.msra.mxu0 %v1800
    %2174 = vmatprep.subr.bf16.mxu0 %v1805
    %2175 = vmatpush1.bf16.msra.mxu0 %v1804
    %2176 = vmatprep.subr.bf16.mxu0 %v1809
    %2177 = vmatpush1.bf16.msra.mxu0 %v1808
    %2178 = vmatprep.subr.bf16.mxu0 %v1813
    %2179 = vmatpush1.bf16.msra.mxu0 %v1812
    %2180 = vmatprep.subr.bf16.mxu0 %v1817
    %2181 = vmatpush1.bf16.msra.mxu0 %v1816
    %2182 = vmatprep.subr.bf16.mxu0 %v1821
    %2183 = vmatpush1.bf16.msra.mxu0 %v1820
    %2184 = vmatprep.subr.bf16.mxu0 %v1825
    %2185 = vmatpush1.bf16.msra.mxu0 %v1824
    %2186 = vmatprep.subr.bf16.mxu0 %v1829
    %2187 = vmatpush1.bf16.msra.mxu0 %v1828
    %2188 = vmatprep.subr.bf16.mxu0 %v1833
    %2189 = vmatpush1.bf16.msra.mxu0 %v1832
    %2190 = vmatprep.mubr.bf16.mxu0 %v1129
    %2191 = vmatmul.mubr.bf16.gmra.mrb[0].mxu0 %v1128
    %v2192 = vpop.f32.mrb[0].mxu0
    %v2193 = vadd.f32 %v2150, %v2192
    %v2194 = vpop.f32.mrb[0].mxu0
    %v2195 = vadd.f32 %v2152, %v2194
    %v2196 = vpop.f32.mrb[0].mxu0
    %v2197 = vadd.f32 %v2154, %v2196
    %v2198 = vpop.f32.mrb[0].mxu0
    %v2199 = vadd.f32 %v2156, %v2198
    %2200 = vdwg.mxu0
    %2201 = vmatprep.subr.bf16.mxu0 %v1837
    %2202 = vmatpush1.bf16.msra.mxu0 %v1836
    %2203 = vmatprep.subr.bf16.mxu0 %v1841
    %2204 = vmatpush1.bf16.msra.mxu0 %v1840
    %2205 = vmatprep.subr.bf16.mxu0 %v1845
    %2206 = vmatpush1.bf16.msra.mxu0 %v1844
    %2207 = vmatprep.subr.bf16.mxu0 %v1849
    %2208 = vmatpush1.bf16.msra.mxu0 %v1848
    %2209 = vmatprep.subr.bf16.mxu0 %v1853
    %2210 = vmatpush1.bf16.msra.mxu0 %v1852
    %2211 = vmatprep.subr.bf16.mxu0 %v1857
    %2212 = vmatpush1.bf16.msra.mxu0 %v1856
    %2213 = vmatprep.subr.bf16.mxu0 %v1861
    %2214 = vmatpush1.bf16.msra.mxu0 %v1860
    %2215 = vmatprep.subr.bf16.mxu0 %v1865
    %2216 = vmatpush1.bf16.msra.mxu0 %v1864
    %2217 = vmatprep.subr.bf16.mxu0 %v1869
    %2218 = vmatpush1.bf16.msra.mxu0 %v1868
    %2219 = vmatprep.subr.bf16.mxu0 %v1873
    %2220 = vmatpush1.bf16.msra.mxu0 %v1872
    %2221 = vmatprep.subr.bf16.mxu0 %v1877
    %2222 = vmatpush1.bf16.msra.mxu0 %v1876
    %2223 = vmatprep.subr.bf16.mxu0 %v1881
    %2224 = vmatpush1.bf16.msra.mxu0 %v1880
    %2225 = vmatprep.subr.bf16.mxu0 %v1885
    %2226 = vmatpush1.bf16.msra.mxu0 %v1884
    %2227 = vmatprep.subr.bf16.mxu0 %v1889
    %2228 = vmatpush1.bf16.msra.mxu0 %v1888
    %2229 = vmatprep.subr.bf16.mxu0 %v1893
    %2230 = vmatpush1.bf16.msra.mxu0 %v1892
    %2231 = vmatprep.subr.bf16.mxu0 %v1897
    %2232 = vmatpush1.bf16.msra.mxu0 %v1896
    %2233 = vmatprep.mubr.bf16.mxu0 %v1131
    %2234 = vmatmul.mubr.bf16.gmra.mrb[0].mxu0 %v1130
    %v2235 = vpop.f32.mrb[0].mxu0
    %v2236 = vadd.f32 %v2193, %v2235
    %v2237 = vpop.f32.mrb[0].mxu0
    %v2238 = vadd.f32 %v2195, %v2237
    %v2239 = vpop.f32.mrb[0].mxu0
    %v2240 = vadd.f32 %v2197, %v2239
    %v2241 = vpop.f32.mrb[0].mxu0
    %v2242 = vadd.f32 %v2199, %v2241
    %2243 = vdwg.mxu0
    %2244 = vmatprep.subr.bf16.mxu0 %v1391
    %2245 = vmatpush1.bf16.msra.mxu0 %v1390
    %2246 = vmatprep.subr.bf16.mxu0 %v1395
    %2247 = vmatpush1.bf16.msra.mxu0 %v1394
    %2248 = vmatprep.subr.bf16.mxu0 %v1399
    %2249 = vmatpush1.bf16.msra.mxu0 %v1398
    %2250 = vmatprep.subr.bf16.mxu0 %v1403
    %2251 = vmatpush1.bf16.msra.mxu0 %v1402
    %2252 = vmatprep.subr.bf16.mxu0 %v1407
    %2253 = vmatpush1.bf16.msra.mxu0 %v1406
    %2254 = vmatprep.subr.bf16.mxu0 %v1411
    %2255 = vmatpush1.bf16.msra.mxu0 %v1410
    %2256 = vmatprep.subr.bf16.mxu0 %v1415
    %2257 = vmatpush1.bf16.msra.mxu0 %v1414
    %2258 = vmatprep.subr.bf16.mxu0 %v1419
    %2259 = vmatpush1.bf16.msra.mxu0 %v1418
    %2260 = vmatprep.subr.bf16.mxu0 %v1423
    %2261 = vmatpush1.bf16.msra.mxu0 %v1422
    %2262 = vmatprep.subr.bf16.mxu0 %v1427
    %2263 = vmatpush1.bf16.msra.mxu0 %v1426
    %2264 = vmatprep.subr.bf16.mxu0 %v1431
    %2265 = vmatpush1.bf16.msra.mxu0 %v1430
    %2266 = vmatprep.subr.bf16.mxu0 %v1435
    %2267 = vmatpush1.bf16.msra.mxu0 %v1434
    %2268 = vmatprep.subr.bf16.mxu0 %v1439
    %2269 = vmatpush1.bf16.msra.mxu0 %v1438
    %2270 = vmatprep.subr.bf16.mxu0 %v1443
    %2271 = vmatpush1.bf16.msra.mxu0 %v1442
    %2272 = vmatprep.subr.bf16.mxu0 %v1447
    %2273 = vmatpush1.bf16.msra.mxu0 %v1446
    %2274 = vmatprep.subr.bf16.mxu0 %v1451
    %2275 = vmatpush1.bf16.msra.mxu0 %v1450
    %2276 = vmatprep.mubr.bf16.mxu0 %v1117
    %2277 = vmatmul.mubr.bf16.gmra.mrb[0].mxu0 %v1116
    %v2278 = vpop.f32.mrb[0].mxu0
    %v2279 = vadd.f32 0.0, %v2278
    %v2280 = vpop.f32.mrb[0].mxu0
    %v2281 = vadd.f32 0.0, %v2280
    %v2282 = vpop.f32.mrb[0].mxu0
    %v2283 = vadd.f32 0.0, %v2282
    %v2284 = vpop.f32.mrb[0].mxu0
    %v2285 = vadd.f32 0.0, %v2284
    %2286 = vdwg.mxu0
    %2287 = vmatprep.subr.bf16.mxu0 %v1455
    %2288 = vmatpush1.bf16.msra.mxu0 %v1454
    %2289 = vmatprep.subr.bf16.mxu0 %v1459
    %2290 = vmatpush1.bf16.msra.mxu0 %v1458
    %2291 = vmatprep.subr.bf16.mxu0 %v1463
    %2292 = vmatpush1.bf16.msra.mxu0 %v1462
    %2293 = vmatprep.subr.bf16.mxu0 %v1467
    %2294 = vmatpush1.bf16.msra.mxu0 %v1466
    %2295 = vmatprep.subr.bf16.mxu0 %v1471
    %2296 = vmatpush1.bf16.msra.mxu0 %v1470
    %2297 = vmatprep.subr.bf16.mxu0 %v1475
    %2298 = vmatpush1.bf16.msra.mxu0 %v1474
    %2299 = vmatprep.subr.bf16.mxu0 %v1479
    %2300 = vmatpush1.bf16.msra.mxu0 %v1478
    %2301 = vmatprep.subr.bf16.mxu0 %v1483
    %2302 = vmatpush1.bf16.msra.mxu0 %v1482
    %2303 = vmatprep.subr.bf16.mxu0 %v1487
    %2304 = vmatpush1.bf16.msra.mxu0 %v1486
    %2305 = vmatprep.subr.bf16.mxu0 %v1491
    %2306 = vmatpush1.bf16.msra.mxu0 %v1490
    %2307 = vmatprep.subr.bf16.mxu0 %v1495
    %2308 = vmatpush1.bf16.msra.mxu0 %v1494
    %2309 = vmatprep.subr.bf16.mxu0 %v1499
    %2310 = vmatpush1.bf16.msra.mxu0 %v1498
    %2311 = vmatprep.subr.bf16.mxu0 %v1503
    %2312 = vmatpush1.bf16.msra.mxu0 %v1502
    %2313 = vmatprep.subr.bf16.mxu0 %v1507
    %2314 = vmatpush1.bf16.msra.mxu0 %v1506
    %2315 = vmatprep.subr.bf16.mxu0 %v1511
    %2316 = vmatpush1.bf16.msra.mxu0 %v1510
    %2317 = vmatprep.subr.bf16.mxu0 %v1515
    %2318 = vmatpush1.bf16.msra.mxu0 %v1514
    %2319 = vmatprep.mubr.bf16.mxu0 %v1119
    %2320 = vmatmul.mubr.bf16.gmra.mrb[0].mxu0 %v1118
    %v2321 = vpop.f32.mrb[0].mxu0
    %v2322 = vadd.f32 %v2279, %v2321
    %v2323 = vpop.f32.mrb[0].mxu0
    %v2324 = vadd.f32 %v2281, %v2323
    %v2325 = vpop.f32.mrb[0].mxu0
    %v2326 = vadd.f32 %v2283, %v2325
    %v2327 = vpop.f32.mrb[0].mxu0
    %v2328 = vadd.f32 %v2285, %v2327
    %2329 = vdwg.mxu0
    %2330 = vmatprep.subr.bf16.mxu0 %v1519
    %2331 = vmatpush1.bf16.msra.mxu0 %v1518
    %2332 = vmatprep.subr.bf16.mxu0 %v1523
    %2333 = vmatpush1.bf16.msra.mxu0 %v1522
    %2334 = vmatprep.subr.bf16.mxu0 %v1527
    %2335 = vmatpush1.bf16.msra.mxu0 %v1526
    %2336 = vmatprep.subr.bf16.mxu0 %v1531
    %2337 = vmatpush1.bf16.msra.mxu0 %v1530
    %2338 = vmatprep.subr.bf16.mxu0 %v1535
    %2339 = vmatpush1.bf16.msra.mxu0 %v1534
    %2340 = vmatprep.subr.bf16.mxu0 %v1539
    %2341 = vmatpush1.bf16.msra.mxu0 %v1538
    %2342 = vmatprep.subr.bf16.mxu0 %v1543
    %2343 = vmatpush1.bf16.msra.mxu0 %v1542
    %2344 = vmatprep.subr.bf16.mxu0 %v1547
    %2345 = vmatpush1.bf16.msra.mxu0 %v1546
    %2346 = vmatprep.subr.bf16.mxu0 %v1551
    %2347 = vmatpush1.bf16.msra.mxu0 %v1550
    %2348 = vmatprep.subr.bf16.mxu0 %v1555
    %2349 = vmatpush1.bf16.msra.mxu0 %v1554
    %2350 = vmatprep.subr.bf16.mxu0 %v1559
    %2351 = vmatpush1.bf16.msra.mxu0 %v1558
    %2352 = vmatprep.subr.bf16.mxu0 %v1563
    %2353 = vmatpush1.bf16.msra.mxu0 %v1562
    %2354 = vmatprep.subr.bf16.mxu0 %v1567
    %2355 = vmatpush1.bf16.msra.mxu0 %v1566
    %2356 = vmatprep.subr.bf16.mxu0 %v1571
    %2357 = vmatpush1.bf16.msra.mxu0 %v1570
    %2358 = vmatprep.subr.bf16.mxu0 %v1575
    %2359 = vmatpush1.bf16.msra.mxu0 %v1574
    %2360 = vmatprep.subr.bf16.mxu0 %v1579
    %2361 = vmatpush1.bf16.msra.mxu0 %v1578
    %2362 = vmatprep.mubr.bf16.mxu0 %v1121
    %2363 = vmatmul.mubr.bf16.gmra.mrb[0].mxu0 %v1120
    %v2364 = vpop.f32.mrb[0].mxu0
    %v2365 = vadd.f32 %v2322, %v2364
    %v2366 = vpop.f32.mrb[0].mxu0
    %v2367 = vadd.f32 %v2324, %v2366
    %v2368 = vpop.f32.mrb[0].mxu0
    %v2369 = vadd.f32 %v2326, %v2368
    %v2370 = vpop.f32.mrb[0].mxu0
    %v2371 = vadd.f32 %v2328, %v2370
    %2372 = vdwg.mxu0
    %2373 = vmatprep.subr.bf16.mxu0 %v1583
    %2374 = vmatpush1.bf16.msra.mxu0 %v1582
    %2375 = vmatprep.subr.bf16.mxu0 %v1587
    %2376 = vmatpush1.bf16.msra.mxu0 %v1586
    %2377 = vmatprep.subr.bf16.mxu0 %v1591
    %2378 = vmatpush1.bf16.msra.mxu0 %v1590
    %2379 = vmatprep.subr.bf16.mxu0 %v1595
    %2380 = vmatpush1.bf16.msra.mxu0 %v1594
    %2381 = vmatprep.subr.bf16.mxu0 %v1599
    %2382 = vmatpush1.bf16.msra.mxu0 %v1598
    %2383 = vmatprep.subr.bf16.mxu0 %v1603
    %2384 = vmatpush1.bf16.msra.mxu0 %v1602
    %2385 = vmatprep.subr.bf16.mxu0 %v1607
    %2386 = vmatpush1.bf16.msra.mxu0 %v1606
    %2387 = vmatprep.subr.bf16.mxu0 %v1611
    %2388 = vmatpush1.bf16.msra.mxu0 %v1610
    %2389 = vmatprep.subr.bf16.mxu0 %v1615
    %2390 = vmatpush1.bf16.msra.mxu0 %v1614
    %2391 = vmatprep.subr.bf16.mxu0 %v1619
    %2392 = vmatpush1.bf16.msra.mxu0 %v1618
    %2393 = vmatprep.subr.bf16.mxu0 %v1623
    %2394 = vmatpush1.bf16.msra.mxu0 %v1622
    %2395 = vmatprep.subr.bf16.mxu0 %v1627
    %2396 = vmatpush1.bf16.msra.mxu0 %v1626
    %2397 = vmatprep.subr.bf16.mxu0 %v1631
    %2398 = vmatpush1.bf16.msra.mxu0 %v1630
    %2399 = vmatprep.subr.bf16.mxu0 %v1635
    %2400 = vmatpush1.bf16.msra.mxu0 %v1634
    %2401 = vmatprep.subr.bf16.mxu0 %v1639
    %2402 = vmatpush1.bf16.msra.mxu0 %v1638
    %2403 = vmatprep.subr.bf16.mxu0 %v1643
    %2404 = vmatpush1.bf16.msra.mxu0 %v1642
    %2405 = vmatprep.mubr.bf16.mxu0 %v1123
    %2406 = vmatmul.mubr.bf16.gmra.mrb[0].mxu0 %v1122
    %v2407 = vpop.f32.mrb[0].mxu0
    %v2408 = vadd.f32 %v2365, %v2407
    %v2409 = vpop.f32.mrb[0].mxu0
    %v2410 = vadd.f32 %v2367, %v2409
    %v2411 = vpop.f32.mrb[0].mxu0
    %v2412 = vadd.f32 %v2369, %v2411
    %v2413 = vpop.f32.mrb[0].mxu0
    %v2414 = vadd.f32 %v2371, %v2413
    %2415 = vdwg.mxu0
    %2416 = vmatprep.subr.bf16.mxu0 %v1647
    %2417 = vmatpush1.bf16.msra.mxu0 %v1646
    %2418 = vmatprep.subr.bf16.mxu0 %v1651
    %2419 = vmatpush1.bf16.msra.mxu0 %v1650
    %2420 = vmatprep.subr.bf16.mxu0 %v1655
    %2421 = vmatpush1.bf16.msra.mxu0 %v1654
    %2422 = vmatprep.subr.bf16.mxu0 %v1659
    %2423 = vmatpush1.bf16.msra.mxu0 %v1658
    %2424 = vmatprep.subr.bf16.mxu0 %v1663
    %2425 = vmatpush1.bf16.msra.mxu0 %v1662
    %2426 = vmatprep.subr.bf16.mxu0 %v1667
    %2427 = vmatpush1.bf16.msra.mxu0 %v1666
    %2428 = vmatprep.subr.bf16.mxu0 %v1671
    %2429 = vmatpush1.bf16.msra.mxu0 %v1670
    %2430 = vmatprep.subr.bf16.mxu0 %v1675
    %2431 = vmatpush1.bf16.msra.mxu0 %v1674
    %2432 = vmatprep.subr.bf16.mxu0 %v1679
    %2433 = vmatpush1.bf16.msra.mxu0 %v1678
    %2434 = vmatprep.subr.bf16.mxu0 %v1683
    %2435 = vmatpush1.bf16.msra.mxu0 %v1682
    %2436 = vmatprep.subr.bf16.mxu0 %v1687
    %2437 = vmatpush1.bf16.msra.mxu0 %v1686
    %2438 = vmatprep.subr.bf16.mxu0 %v1691
    %2439 = vmatpush1.bf16.msra.mxu0 %v1690
    %2440 = vmatprep.subr.bf16.mxu0 %v1695
    %2441 = vmatpush1.bf16.msra.mxu0 %v1694
    %2442 = vmatprep.subr.bf16.mxu0 %v1699
    %2443 = vmatpush1.bf16.msra.mxu0 %v1698
    %2444 = vmatprep.subr.bf16.mxu0 %v1703
    %2445 = vmatpush1.bf16.msra.mxu0 %v1702
    %2446 = vmatprep.subr.bf16.mxu0 %v1707
    %2447 = vmatpush1.bf16.msra.mxu0 %v1706
    %2448 = vmatprep.mubr.bf16.mxu0 %v1125
    %2449 = vmatmul.mubr.bf16.gmra.mrb[0].mxu0 %v1124
    %v2450 = vpop.f32.mrb[0].mxu0
    %v2451 = vadd.f32 %v2408, %v2450
    %v2452 = vpop.f32.mrb[0].mxu0
    %v2453 = vadd.f32 %v2410, %v2452
    %v2454 = vpop.f32.mrb[0].mxu0
    %v2455 = vadd.f32 %v2412, %v2454
    %v2456 = vpop.f32.mrb[0].mxu0
    %v2457 = vadd.f32 %v2414, %v2456
    %2458 = vdwg.mxu0
    %2459 = vmatprep.subr.bf16.mxu0 %v1711
    %2460 = vmatpush1.bf16.msra.mxu0 %v1710
    %2461 = vmatprep.subr.bf16.mxu0 %v1715
    %2462 = vmatpush1.bf16.msra.mxu0 %v1714
    %2463 = vmatprep.subr.bf16.mxu0 %v1719
    %2464 = vmatpush1.bf16.msra.mxu0 %v1718
    %2465 = vmatprep.subr.bf16.mxu0 %v1723
    %2466 = vmatpush1.bf16.msra.mxu0 %v1722
    %2467 = vmatprep.subr.bf16.mxu0 %v1727
    %2468 = vmatpush1.bf16.msra.mxu0 %v1726
    %2469 = vmatprep.subr.bf16.mxu0 %v1731
    %2470 = vmatpush1.bf16.msra.mxu0 %v1730
    %2471 = vmatprep.subr.bf16.mxu0 %v1735
    %2472 = vmatpush1.bf16.msra.mxu0 %v1734
    %2473 = vmatprep.subr.bf16.mxu0 %v1739
    %2474 = vmatpush1.bf16.msra.mxu0 %v1738
    %2475 = vmatprep.subr.bf16.mxu0 %v1743
    %2476 = vmatpush1.bf16.msra.mxu0 %v1742
    %2477 = vmatprep.subr.bf16.mxu0 %v1747
    %2478 = vmatpush1.bf16.msra.mxu0 %v1746
    %2479 = vmatprep.subr.bf16.mxu0 %v1751
    %2480 = vmatpush1.bf16.msra.mxu0 %v1750
    %2481 = vmatprep.subr.bf16.mxu0 %v1755
    %2482 = vmatpush1.bf16.msra.mxu0 %v1754
    %2483 = vmatprep.subr.bf16.mxu0 %v1759
    %2484 = vmatpush1.bf16.msra.mxu0 %v1758
    %2485 = vmatprep.subr.bf16.mxu0 %v1763
    %2486 = vmatpush1.bf16.msra.mxu0 %v1762
    %2487 = vmatprep.subr.bf16.mxu0 %v1767
    %2488 = vmatpush1.bf16.msra.mxu0 %v1766
    %2489 = vmatprep.subr.bf16.mxu0 %v1771
    %2490 = vmatpush1.bf16.msra.mxu0 %v1770
    %2491 = vmatprep.mubr.bf16.mxu0 %v1127
    %2492 = vmatmul.mubr.bf16.gmra.mrb[0].mxu0 %v1126
    %v2493 = vpop.f32.mrb[0].mxu0
    %v2494 = vadd.f32 %v2451, %v2493
    %v2495 = vpop.f32.mrb[0].mxu0
    %v2496 = vadd.f32 %v2453, %v2495
    %v2497 = vpop.f32.mrb[0].mxu0
    %v2498 = vadd.f32 %v2455, %v2497
    %v2499 = vpop.f32.mrb[0].mxu0
    %v2500 = vadd.f32 %v2457, %v2499
    %2501 = vdwg.mxu0
    %2502 = vmatprep.subr.bf16.mxu0 %v1775
    %2503 = vmatpush1.bf16.msra.mxu0 %v1774
    %2504 = vmatprep.subr.bf16.mxu0 %v1779
    %2505 = vmatpush1.bf16.msra.mxu0 %v1778
    %2506 = vmatprep.subr.bf16.mxu0 %v1783
    %2507 = vmatpush1.bf16.msra.mxu0 %v1782
    %2508 = vmatprep.subr.bf16.mxu0 %v1787
    %2509 = vmatpush1.bf16.msra.mxu0 %v1786
    %2510 = vmatprep.subr.bf16.mxu0 %v1791
    %2511 = vmatpush1.bf16.msra.mxu0 %v1790
    %2512 = vmatprep.subr.bf16.mxu0 %v1795
    %2513 = vmatpush1.bf16.msra.mxu0 %v1794
    %2514 = vmatprep.subr.bf16.mxu0 %v1799
    %2515 = vmatpush1.bf16.msra.mxu0 %v1798
    %2516 = vmatprep.subr.bf16.mxu0 %v1803
    %2517 = vmatpush1.bf16.msra.mxu0 %v1802
    %2518 = vmatprep.subr.bf16.mxu0 %v1807
    %2519 = vmatpush1.bf16.msra.mxu0 %v1806
    %2520 = vmatprep.subr.bf16.mxu0 %v1811
    %2521 = vmatpush1.bf16.msra.mxu0 %v1810
    %2522 = vmatprep.subr.bf16.mxu0 %v1815
    %2523 = vmatpush1.bf16.msra.mxu0 %v1814
    %2524 = vmatprep.subr.bf16.mxu0 %v1819
    %2525 = vmatpush1.bf16.msra.mxu0 %v1818
    %2526 = vmatprep.subr.bf16.mxu0 %v1823
    %2527 = vmatpush1.bf16.msra.mxu0 %v1822
    %2528 = vmatprep.subr.bf16.mxu0 %v1827
    %2529 = vmatpush1.bf16.msra.mxu0 %v1826
    %2530 = vmatprep.subr.bf16.mxu0 %v1831
    %2531 = vmatpush1.bf16.msra.mxu0 %v1830
    %2532 = vmatprep.subr.bf16.mxu0 %v1835
    %2533 = vmatpush1.bf16.msra.mxu0 %v1834
    %2534 = vmatprep.mubr.bf16.mxu0 %v1129
    %2535 = vmatmul.mubr.bf16.gmra.mrb[0].mxu0 %v1128
    %v2536 = vpop.f32.mrb[0].mxu0
    %v2537 = vadd.f32 %v2494, %v2536
    %v2538 = vpop.f32.mrb[0].mxu0
    %v2539 = vadd.f32 %v2496, %v2538
    %v2540 = vpop.f32.mrb[0].mxu0
    %v2541 = vadd.f32 %v2498, %v2540
    %v2542 = vpop.f32.mrb[0].mxu0
    %v2543 = vadd.f32 %v2500, %v2542
    %2544 = vdwg.mxu0
    %2545 = vmatprep.subr.bf16.mxu0 %v1839
    %2546 = vmatpush1.bf16.msra.mxu0 %v1838
    %2547 = vmatprep.subr.bf16.mxu0 %v1843
    %2548 = vmatpush1.bf16.msra.mxu0 %v1842
    %2549 = vmatprep.subr.bf16.mxu0 %v1847
    %2550 = vmatpush1.bf16.msra.mxu0 %v1846
    %2551 = vmatprep.subr.bf16.mxu0 %v1851
    %2552 = vmatpush1.bf16.msra.mxu0 %v1850
    %2553 = vmatprep.subr.bf16.mxu0 %v1855
    %2554 = vmatpush1.bf16.msra.mxu0 %v1854
    %2555 = vmatprep.subr.bf16.mxu0 %v1859
    %2556 = vmatpush1.bf16.msra.mxu0 %v1858
    %2557 = vmatprep.subr.bf16.mxu0 %v1863
    %2558 = vmatpush1.bf16.msra.mxu0 %v1862
    %2559 = vmatprep.subr.bf16.mxu0 %v1867
    %2560 = vmatpush1.bf16.msra.mxu0 %v1866
    %2561 = vmatprep.subr.bf16.mxu0 %v1871
    %2562 = vmatpush1.bf16.msra.mxu0 %v1870
    %2563 = vmatprep.subr.bf16.mxu0 %v1875
    %2564 = vmatpush1.bf16.msra.mxu0 %v1874
    %2565 = vmatprep.subr.bf16.mxu0 %v1879
    %2566 = vmatpush1.bf16.msra.mxu0 %v1878
    %2567 = vmatprep.subr.bf16.mxu0 %v1883
    %2568 = vmatpush1.bf16.msra.mxu0 %v1882
    %2569 = vmatprep.subr.bf16.mxu0 %v1887
    %2570 = vmatpush1.bf16.msra.mxu0 %v1886
    %2571 = vmatprep.subr.bf16.mxu0 %v1891
    %2572 = vmatpush1.bf16.msra.mxu0 %v1890
    %2573 = vmatprep.subr.bf16.mxu0 %v1895
    %2574 = vmatpush1.bf16.msra.mxu0 %v1894
    %2575 = vmatprep.subr.bf16.mxu0 %v1899
    %2576 = vmatpush1.bf16.msra.mxu0 %v1898
    %2577 = vmatprep.mubr.bf16.mxu0 %v1131
    %2578 = vmatmul.mubr.bf16.gmra.mrb[0].mxu0 %v1130
    %v2579 = vpop.f32.mrb[0].mxu0
    %v2580 = vadd.f32 %v2537, %v2579
    %v2581 = vpop.f32.mrb[0].mxu0
    %v2582 = vadd.f32 %v2539, %v2581
    %v2583 = vpop.f32.mrb[0].mxu0
    %v2584 = vadd.f32 %v2541, %v2583
    %v2585 = vpop.f32.mrb[0].mxu0
    %v2586 = vadd.f32 %v2543, %v2585
    %2587 = vdwg.mxu0
    %v2588 = vld [vmem:[#allocation15] sm:$0xf]
    %v2590 = vlaneseq
    %v2591 = vshrl.u32 %v2590, 7
    %v2592 = vsub.s32 0, %v2591
    %v2593 = vrot.slane %v2588, %v2592
    %v2594 = vlaneseq
    %v2595 = vshrl.u32 %v2594, 7
    %v2596 = vsub.s32 1, %v2595
    %v2597 = vrot.slane %v2588, %v2596
    %v2598 = vlaneseq
    %v2599 = vshrl.u32 %v2598, 7
    %v2600 = vsub.s32 2, %v2599
    %v2601 = vrot.slane %v2588, %v2600
    %v2602 = vlaneseq
    %v2603 = vshrl.u32 %v2602, 7
    %v2604 = vsub.s32 3, %v2603
    %v2605 = vrot.slane %v2588, %v2604
    %v2610 = vmul.f32 %v2236, %v2593
    %v2611 = vmul.f32 %v2238, %v2597
    %v2612 = vmul.f32 %v2580, %v2601
    %v2613 = vmul.f32 %v2582, %v2605
    %v2614 = vmul.f32 %v2240, %v2593
    %v2615 = vmul.f32 %v2242, %v2597
    %v2616 = vmul.f32 %v2584, %v2601
    %v2617 = vmul.f32 %v2586, %v2605
    %v2622 = vcombine.low %v1017, %v1018
    %v2623 = vcombine.low %v1019, %v1020
    %v2625 = vunpack.c.l.s4 1966171168
    %v2626 = vunpack.c.0.s8 %v2625
    %v2627 = vlaneseq
    %v2628 = vshrl.u32 %v2627, 7
    %v2629 = vsub.s32 %v2626, %v2628
    %v2630 = vrot.slane %v2622, %v2629
    %v2632 = vunpack.c.l.s4 1966171168
    %v2633 = vunpack.c.0.s8 %v2632
    %v2634 = vlaneseq
    %v2635 = vshrl.u32 %v2634, 7
    %v2636 = vsub.s32 %v2633, %v2635
    %v2637 = vrot.slane %v2623, %v2636
    %v2638 = vcombine.low %v2630, %v2637
    %v2639 = vcombine.high %v2630, %v2637
    %v2641 = vunpack.c.l.s4 1966171168
    %v2642 = vunpack.c.0.s8 %v2641
    %v2643 = vlaneseq
    %v2644 = vshrl.u32 %v2643, 7
    %v2645 = vsub.s32 %v2642, %v2644
    %v2646 = vrot.slane %v2638, %v2645
    %v2648 = vunpack.c.l.s4 1966171168
    %v2649 = vunpack.c.0.s8 %v2648
    %v2650 = vlaneseq
    %v2651 = vshrl.u32 %v2650, 7
    %v2652 = vsub.s32 %v2649, %v2651
    %v2653 = vrot.slane %v2639, %v2652
    %v2654 = vlaneseq
    %v2655 = vshrl.u32 %v2654, 7
    %v2656 = vsub.s32 0, %v2655
    %v2657 = vrot.slane %v2646, %v2656
    %v2658 = vlaneseq
    %v2659 = vshrl.u32 %v2658, 7
    %v2660 = vsub.s32 1, %v2659
    %v2661 = vrot.slane %v2646, %v2660
    %v2662 = vlaneseq
    %v2663 = vshrl.u32 %v2662, 7
    %v2664 = vsub.s32 2, %v2663
    %v2665 = vrot.slane %v2646, %v2664
    %v2666 = vlaneseq
    %v2667 = vshrl.u32 %v2666, 7
    %v2668 = vsub.s32 3, %v2667
    %v2669 = vrot.slane %v2646, %v2668
    %v2670 = vlaneseq
    %v2671 = vshrl.u32 %v2670, 7
    %v2672 = vsub.s32 0, %v2671
    %v2673 = vrot.slane %v2653, %v2672
    %v2674 = vlaneseq
    %v2675 = vshrl.u32 %v2674, 7
    %v2676 = vsub.s32 1, %v2675
    %v2677 = vrot.slane %v2653, %v2676
    %v2678 = vlaneseq
    %v2679 = vshrl.u32 %v2678, 7
    %v2680 = vsub.s32 2, %v2679
    %v2681 = vrot.slane %v2653, %v2680
    %v2682 = vlaneseq
    %v2683 = vshrl.u32 %v2682, 7
    %v2684 = vsub.s32 3, %v2683
    %v2685 = vrot.slane %v2653, %v2684
    %v2694 = vadd.f32 %v2610, %v2657
    %v2695 = vadd.f32 %v2611, %v2661
    %v2696 = vadd.f32 %v2612, %v2665
    %v2697 = vadd.f32 %v2613, %v2669
    %v2698 = vadd.f32 %v2614, %v2673
    %v2699 = vadd.f32 %v2615, %v2677
    %v2700 = vadd.f32 %v2616, %v2681
    %v2701 = vadd.f32 %v2617, %v2685
    %v2702 = vtanh.pop %v2694
    %v2703 = vtanh.pop %v2695
    %v2704 = vtanh.pop %v2696
    %v2705 = vtanh.pop %v2697
    %v2706 = vtanh.pop %v2698
    %v2707 = vtanh.pop %v2699
    %v2708 = vtanh.pop %v2700
    %v2709 = vtanh.pop %v2701
    %v2710 = vld [vmem:[%s10] sm:$0xf]
    %v2712 = vlaneseq
    %v2713 = vshrl.u32 %v2712, 7
    %v2714 = vsub.s32 0, %v2713
    %v2715 = vrot.slane %v2710, %v2714
    %v2716 = vlaneseq
    %v2717 = vshrl.u32 %v2716, 7
    %v2718 = vsub.s32 1, %v2717
    %v2719 = vrot.slane %v2710, %v2718
    %v2720 = vlaneseq
    %v2721 = vshrl.u32 %v2720, 7
    %v2722 = vsub.s32 2, %v2721
    %v2723 = vrot.slane %v2710, %v2722
    %v2724 = vlaneseq
    %v2725 = vshrl.u32 %v2724, 7
    %v2726 = vsub.s32 3, %v2725
    %v2727 = vrot.slane %v2710, %v2726
    %v2732 = vmul.f32 %v2702, %v2715
    %v2733 = vmul.f32 %v2703, %v2719
    %v2734 = vmul.f32 %v2704, %v2723
    %v2735 = vmul.f32 %v2705, %v2727
    %v2736 = vmul.f32 %v2706, %v2715
    %v2737 = vmul.f32 %v2707, %v2719
    %v2738 = vmul.f32 %v2708, %v2723
    %v2739 = vmul.f32 %v2709, %v2727
    %v2740 = vadd.f32 %v2732, %v2733
    %v2741 = vadd.f32 %v2740, %v2734
    %v2742 = vadd.f32 %v2741, %v2735
    %2743 = vadd.xlane.f32.xlu0 %v2742
    %v2744 = vpop.xlane.xlu0 %2743
    %v2745 = vadd.f32 %v2736, %v2737
    %v2746 = vadd.f32 %v2745, %v2738
    %v2747 = vadd.f32 %v2746, %v2739
    %2748 = vadd.xlane.f32.xlu0 %v2747
    %v2749 = vpop.xlane.xlu0 %2748
    %v2750 = vstv %s1025
    %v2751 = vadd.f32 %v2744, %v2750
    %v2752 = vadd.f32 %v2749, %v2750
    %v2755 = vlaneseq
    %v2756 = vand.u32 %v2755, 127
    %v2757 = vlaneseq
    %v2758 = vshrl.u32 %v2757, 7
    %v2759 = vsub.s32 %v2756, %v2758
    %v2760 = vrot.slane %v2751, %v2759
    %v2761 = vlaneseq
    %v2762 = vshrl.u32 %v2761, 7
    %v2763 = vsub.s32 %v2756, %v2762
    %v2764 = vrot.slane %v2752, %v2763
    %vm2765 = vcmask 1041409
    %v2766 = vsel %vm2765, %v2764, %v2760
    %vm2768 = vcmask 58368
    %v2769 = vsel %vm2768, %v2766, -inf
    %2770 = vmax.xlane.f32.xlu0 %v2769
    %v2771 = vpop.xlane.xlu0 %2770
    %v2772 = vmax.f32 %v2771, 0.0
    %v2774 = vlaneseq
    %v2775 = vshrl.u32 %v2774, 7
    %v2776 = vsub.s32 0, %v2775
    %v2777 = vrot.slane %v2772, %v2776
    %v2778 = vlaneseq
    %v2779 = vshrl.u32 %v2778, 7
    %v2780 = vsub.s32 1, %v2779
    %v2781 = vrot.slane %v2772, %v2780
    %v2784 = vsub.f32 %v2751, %v2777
    %v2785 = vsub.f32 %v2752, %v2781
    %v2786 = vmul.f32 %v2784, 1.442695
    %v2787 = vpow.pop %v2786
    %v2788 = vmul.f32 %v2785, 1.442695
    %v2789 = vpow.pop %v2788
    %v2790 = vsub.f32 0.0, %v2772
    %v2791 = vmul.f32 %v2790, 1.442695
    %v2792 = vpow.pop %v2791
    %2795 = vset.pattern.permute.xlu0 0
    %2796 = vperm.xlu0 %2795, %v2787
    %v2797 = vpop.permute.xlu0 %2796
    %2798 = vset.pattern.permute.xlu0 0
    %2799 = vperm.xlu0 %2798, %v2789
    %v2800 = vpop.permute.xlu0 %2799
    %v2801 = vlaneseq
    %v2802 = vshrl.u32 %v2801, 7
    %v2803 = vsub.s32 %v2756, %v2802
    %v2804 = vrot.slane %v2797, %v2803
    %v2805 = vlaneseq
    %v2806 = vshrl.u32 %v2805, 7
    %v2807 = vsub.s32 %v2756, %v2806
    %v2808 = vrot.slane %v2800, %v2807
    %v2809 = vsel %vm2765, %v2808, %v2804
    %v2811 = vsel %vm2768, %v2809, 0.0
    %2812 = vadd.xlane.f32.xlu0 %v2811
    %v2813 = vpop.xlane.xlu0 %2812
    %v2814 = vadd.f32 %v2813, %v2792
    %v2815 = vrcp.pop %v2814
    %v2817 = vlaneseq
    %v2818 = vshrl.u32 %v2817, 7
    %v2819 = vsub.s32 0, %v2818
    %v2820 = vrot.slane %v2815, %v2819
    %v2821 = vlaneseq
    %v2822 = vshrl.u32 %v2821, 7
    %v2823 = vsub.s32 1, %v2822
    %v2824 = vrot.slane %v2815, %v2823
    %v2827 = vmul.f32 %v2787, %v2820
    %v2828 = vmul.f32 %v2789, %v2824
    %v2829 = vmul.f32 %v2792, %v2815
    %s2830 = smul.u32 2, 64
    %s2831 = smul.u32 %s2830, 16
    %s2832 = sshll.u32 %s2831, 4
    %2833 = dma.done %s142, %s2832
    %v2834 = vld [vmem:[#allocation3] sm:$0xff]
    %v2835 = vld [vmem:[#allocation3 + $0x8] sm:$0xff]
    %v2836 = vld [vmem:[#allocation3 + $0x10] sm:$0xff]
    %v2837 = vld [vmem:[#allocation3 + $0x18] sm:$0xff]
    %v2838 = vld [vmem:[#allocation3 + $0x20] sm:$0xff]
    %v2839 = vld [vmem:[#allocation3 + $0x28] sm:$0xff]
    %v2840 = vld [vmem:[#allocation3 + $0x30] sm:$0xff]
    %v2841 = vld [vmem:[#allocation3 + $0x38] sm:$0xff]
    %v2842 = vld [vmem:[#allocation3 + $0x40] sm:$0xff]
    %v2843 = vld [vmem:[#allocation3 + $0x48] sm:$0xff]
    %v2844 = vld [vmem:[#allocation3 + $0x50] sm:$0xff]
    %v2845 = vld [vmem:[#allocation3 + $0x58] sm:$0xff]
    %v2846 = vld [vmem:[#allocation3 + $0x60] sm:$0xff]
    %v2847 = vld [vmem:[#allocation3 + $0x68] sm:$0xff]
    %v2848 = vld [vmem:[#allocation3 + $0x70] sm:$0xff]
    %v2849 = vld [vmem:[#allocation3 + $0x78] sm:$0xff]
    %v2850 = vld [vmem:[#allocation3 + $0x80] sm:$0xff]
    %v2851 = vld [vmem:[#allocation3 + $0x88] sm:$0xff]
    %v2852 = vld [vmem:[#allocation3 + $0x90] sm:$0xff]
    %v2853 = vld [vmem:[#allocation3 + $0x98] sm:$0xff]
    %v2854 = vld [vmem:[#allocation3 + $0xa0] sm:$0xff]
    %v2855 = vld [vmem:[#allocation3 + $0xa8] sm:$0xff]
    %v2856 = vld [vmem:[#allocation3 + $0xb0] sm:$0xff]
    %v2857 = vld [vmem:[#allocation3 + $0xb8] sm:$0xff]
    %v2858 = vld [vmem:[#allocation3 + $0xc0] sm:$0xff]
    %v2859 = vld [vmem:[#allocation3 + $0xc8] sm:$0xff]
    %v2860 = vld [vmem:[#allocation3 + $0xd0] sm:$0xff]
    %v2861 = vld [vmem:[#allocation3 + $0xd8] sm:$0xff]
    %v2862 = vld [vmem:[#allocation3 + $0xe0] sm:$0xff]
    %v2863 = vld [vmem:[#allocation3 + $0xe8] sm:$0xff]
    %v2864 = vld [vmem:[#allocation3 + $0xf0] sm:$0xff]
    %v2865 = vld [vmem:[#allocation3 + $0xf8] sm:$0xff]
    %v2866 = vld [vmem:[#allocation3 + $0x100] sm:$0xff]
    %v2867 = vld [vmem:[#allocation3 + $0x108] sm:$0xff]
    %v2868 = vld [vmem:[#allocation3 + $0x110] sm:$0xff]
    %v2869 = vld [vmem:[#allocation3 + $0x118] sm:$0xff]
    %v2870 = vld [vmem:[#allocation3 + $0x120] sm:$0xff]
    %v2871 = vld [vmem:[#allocation3 + $0x128] sm:$0xff]
    %v2872 = vld [vmem:[#allocation3 + $0x130] sm:$0xff]
    %v2873 = vld [vmem:[#allocation3 + $0x138] sm:$0xff]
    %v2874 = vld [vmem:[#allocation3 + $0x140] sm:$0xff]
    %v2875 = vld [vmem:[#allocation3 + $0x148] sm:$0xff]
    %v2876 = vld [vmem:[#allocation3 + $0x150] sm:$0xff]
    %v2877 = vld [vmem:[#allocation3 + $0x158] sm:$0xff]
    %v2878 = vld [vmem:[#allocation3 + $0x160] sm:$0xff]
    %v2879 = vld [vmem:[#allocation3 + $0x168] sm:$0xff]
    %v2880 = vld [vmem:[#allocation3 + $0x170] sm:$0xff]
    %v2881 = vld [vmem:[#allocation3 + $0x178] sm:$0xff]
    %v2882 = vld [vmem:[#allocation3 + $0x180] sm:$0xff]
    %v2883 = vld [vmem:[#allocation3 + $0x188] sm:$0xff]
    %v2884 = vld [vmem:[#allocation3 + $0x190] sm:$0xff]
    %v2885 = vld [vmem:[#allocation3 + $0x198] sm:$0xff]
    %v2886 = vld [vmem:[#allocation3 + $0x1a0] sm:$0xff]
    %v2887 = vld [vmem:[#allocation3 + $0x1a8] sm:$0xff]
    %v2888 = vld [vmem:[#allocation3 + $0x1b0] sm:$0xff]
    %v2889 = vld [vmem:[#allocation3 + $0x1b8] sm:$0xff]
    %v2890 = vld [vmem:[#allocation3 + $0x1c0] sm:$0xff]
    %v2891 = vld [vmem:[#allocation3 + $0x1c8] sm:$0xff]
    %v2892 = vld [vmem:[#allocation3 + $0x1d0] sm:$0xff]
    %v2893 = vld [vmem:[#allocation3 + $0x1d8] sm:$0xff]
    %v2894 = vld [vmem:[#allocation3 + $0x1e0] sm:$0xff]
    %v2895 = vld [vmem:[#allocation3 + $0x1e8] sm:$0xff]
    %v2896 = vld [vmem:[#allocation3 + $0x1f0] sm:$0xff]
    %v2897 = vld [vmem:[#allocation3 + $0x1f8] sm:$0xff]
    %v2898 = vld [vmem:[#allocation3 + $0x200] sm:$0xff]
    %v2899 = vld [vmem:[#allocation3 + $0x208] sm:$0xff]
    %v2900 = vld [vmem:[#allocation3 + $0x210] sm:$0xff]
    %v2901 = vld [vmem:[#allocation3 + $0x218] sm:$0xff]
    %v2902 = vld [vmem:[#allocation3 + $0x220] sm:$0xff]
    %v2903 = vld [vmem:[#allocation3 + $0x228] sm:$0xff]
    %v2904 = vld [vmem:[#allocation3 + $0x230] sm:$0xff]
    %v2905 = vld [vmem:[#allocation3 + $0x238] sm:$0xff]
    %v2906 = vld [vmem:[#allocation3 + $0x240] sm:$0xff]
    %v2907 = vld [vmem:[#allocation3 + $0x248] sm:$0xff]
    %v2908 = vld [vmem:[#allocation3 + $0x250] sm:$0xff]
    %v2909 = vld [vmem:[#allocation3 + $0x258] sm:$0xff]
    %v2910 = vld [vmem:[#allocation3 + $0x260] sm:$0xff]
    %v2911 = vld [vmem:[#allocation3 + $0x268] sm:$0xff]
    %v2912 = vld [vmem:[#allocation3 + $0x270] sm:$0xff]
    %v2913 = vld [vmem:[#allocation3 + $0x278] sm:$0xff]
    %v2914 = vld [vmem:[#allocation3 + $0x280] sm:$0xff]
    %v2915 = vld [vmem:[#allocation3 + $0x288] sm:$0xff]
    %v2916 = vld [vmem:[#allocation3 + $0x290] sm:$0xff]
    %v2917 = vld [vmem:[#allocation3 + $0x298] sm:$0xff]
    %v2918 = vld [vmem:[#allocation3 + $0x2a0] sm:$0xff]
    %v2919 = vld [vmem:[#allocation3 + $0x2a8] sm:$0xff]
    %v2920 = vld [vmem:[#allocation3 + $0x2b0] sm:$0xff]
    %v2921 = vld [vmem:[#allocation3 + $0x2b8] sm:$0xff]
    %v2922 = vld [vmem:[#allocation3 + $0x2c0] sm:$0xff]
    %v2923 = vld [vmem:[#allocation3 + $0x2c8] sm:$0xff]
    %v2924 = vld [vmem:[#allocation3 + $0x2d0] sm:$0xff]
    %v2925 = vld [vmem:[#allocation3 + $0x2d8] sm:$0xff]
    %v2926 = vld [vmem:[#allocation3 + $0x2e0] sm:$0xff]
    %v2927 = vld [vmem:[#allocation3 + $0x2e8] sm:$0xff]
    %v2928 = vld [vmem:[#allocation3 + $0x2f0] sm:$0xff]
    %v2929 = vld [vmem:[#allocation3 + $0x2f8] sm:$0xff]
    %v2930 = vld [vmem:[#allocation3 + $0x300] sm:$0xff]
    %v2931 = vld [vmem:[#allocation3 + $0x308] sm:$0xff]
    %v2932 = vld [vmem:[#allocation3 + $0x310] sm:$0xff]
    %v2933 = vld [vmem:[#allocation3 + $0x318] sm:$0xff]
    %v2934 = vld [vmem:[#allocation3 + $0x320] sm:$0xff]
    %v2935 = vld [vmem:[#allocation3 + $0x328] sm:$0xff]
    %v2936 = vld [vmem:[#allocation3 + $0x330] sm:$0xff]
    %v2937 = vld [vmem:[#allocation3 + $0x338] sm:$0xff]
    %v2938 = vld [vmem:[#allocation3 + $0x340] sm:$0xff]
    %v2939 = vld [vmem:[#allocation3 + $0x348] sm:$0xff]
    %v2940 = vld [vmem:[#allocation3 + $0x350] sm:$0xff]
    %v2941 = vld [vmem:[#allocation3 + $0x358] sm:$0xff]
    %v2942 = vld [vmem:[#allocation3 + $0x360] sm:$0xff]
    %v2943 = vld [vmem:[#allocation3 + $0x368] sm:$0xff]
    %v2944 = vld [vmem:[#allocation3 + $0x370] sm:$0xff]
    %v2945 = vld [vmem:[#allocation3 + $0x378] sm:$0xff]
    %v2946 = vld [vmem:[#allocation3 + $0x380] sm:$0xff]
    %v2947 = vld [vmem:[#allocation3 + $0x388] sm:$0xff]
    %v2948 = vld [vmem:[#allocation3 + $0x390] sm:$0xff]
    %v2949 = vld [vmem:[#allocation3 + $0x398] sm:$0xff]
    %v2950 = vld [vmem:[#allocation3 + $0x3a0] sm:$0xff]
    %v2951 = vld [vmem:[#allocation3 + $0x3a8] sm:$0xff]
    %v2952 = vld [vmem:[#allocation3 + $0x3b0] sm:$0xff]
    %v2953 = vld [vmem:[#allocation3 + $0x3b8] sm:$0xff]
    %v2954 = vld [vmem:[#allocation3 + $0x3c0] sm:$0xff]
    %v2955 = vld [vmem:[#allocation3 + $0x3c8] sm:$0xff]
    %v2956 = vld [vmem:[#allocation3 + $0x3d0] sm:$0xff]
    %v2957 = vld [vmem:[#allocation3 + $0x3d8] sm:$0xff]
    %v2958 = vld [vmem:[#allocation3 + $0x3e0] sm:$0xff]
    %v2959 = vld [vmem:[#allocation3 + $0x3e8] sm:$0xff]
    %v2960 = vld [vmem:[#allocation3 + $0x3f0] sm:$0xff]
    %v2961 = vld [vmem:[#allocation3 + $0x3f8] sm:$0xff]
    %v2962 = vld [vmem:[#allocation3 + $0x400] sm:$0xff]
    %v2963 = vld [vmem:[#allocation3 + $0x408] sm:$0xff]
    %v2964 = vld [vmem:[#allocation3 + $0x410] sm:$0xff]
    %v2965 = vld [vmem:[#allocation3 + $0x418] sm:$0xff]
    %v2966 = vld [vmem:[#allocation3 + $0x420] sm:$0xff]
    %v2967 = vld [vmem:[#allocation3 + $0x428] sm:$0xff]
    %v2968 = vld [vmem:[#allocation3 + $0x430] sm:$0xff]
    %v2969 = vld [vmem:[#allocation3 + $0x438] sm:$0xff]
    %v2970 = vld [vmem:[#allocation3 + $0x440] sm:$0xff]
    %v2971 = vld [vmem:[#allocation3 + $0x448] sm:$0xff]
    %v2972 = vld [vmem:[#allocation3 + $0x450] sm:$0xff]
    %v2973 = vld [vmem:[#allocation3 + $0x458] sm:$0xff]
    %v2974 = vld [vmem:[#allocation3 + $0x460] sm:$0xff]
    %v2975 = vld [vmem:[#allocation3 + $0x468] sm:$0xff]
    %v2976 = vld [vmem:[#allocation3 + $0x470] sm:$0xff]
    %v2977 = vld [vmem:[#allocation3 + $0x478] sm:$0xff]
    %v2978 = vld [vmem:[#allocation3 + $0x480] sm:$0xff]
    %v2979 = vld [vmem:[#allocation3 + $0x488] sm:$0xff]
    %v2980 = vld [vmem:[#allocation3 + $0x490] sm:$0xff]
    %v2981 = vld [vmem:[#allocation3 + $0x498] sm:$0xff]
    %v2982 = vld [vmem:[#allocation3 + $0x4a0] sm:$0xff]
    %v2983 = vld [vmem:[#allocation3 + $0x4a8] sm:$0xff]
    %v2984 = vld [vmem:[#allocation3 + $0x4b0] sm:$0xff]
    %v2985 = vld [vmem:[#allocation3 + $0x4b8] sm:$0xff]
    %v2986 = vld [vmem:[#allocation3 + $0x4c0] sm:$0xff]
    %v2987 = vld [vmem:[#allocation3 + $0x4c8] sm:$0xff]
    %v2988 = vld [vmem:[#allocation3 + $0x4d0] sm:$0xff]
    %v2989 = vld [vmem:[#allocation3 + $0x4d8] sm:$0xff]
    %v2990 = vld [vmem:[#allocation3 + $0x4e0] sm:$0xff]
    %v2991 = vld [vmem:[#allocation3 + $0x4e8] sm:$0xff]
    %v2992 = vld [vmem:[#allocation3 + $0x4f0] sm:$0xff]
    %v2993 = vld [vmem:[#allocation3 + $0x4f8] sm:$0xff]
    %v2994 = vld [vmem:[#allocation3 + $0x500] sm:$0xff]
    %v2995 = vld [vmem:[#allocation3 + $0x508] sm:$0xff]
    %v2996 = vld [vmem:[#allocation3 + $0x510] sm:$0xff]
    %v2997 = vld [vmem:[#allocation3 + $0x518] sm:$0xff]
    %v2998 = vld [vmem:[#allocation3 + $0x520] sm:$0xff]
    %v2999 = vld [vmem:[#allocation3 + $0x528] sm:$0xff]
    %v3000 = vld [vmem:[#allocation3 + $0x530] sm:$0xff]
    %v3001 = vld [vmem:[#allocation3 + $0x538] sm:$0xff]
    %v3002 = vld [vmem:[#allocation3 + $0x540] sm:$0xff]
    %v3003 = vld [vmem:[#allocation3 + $0x548] sm:$0xff]
    %v3004 = vld [vmem:[#allocation3 + $0x550] sm:$0xff]
    %v3005 = vld [vmem:[#allocation3 + $0x558] sm:$0xff]
    %v3006 = vld [vmem:[#allocation3 + $0x560] sm:$0xff]
    %v3007 = vld [vmem:[#allocation3 + $0x568] sm:$0xff]
    %v3008 = vld [vmem:[#allocation3 + $0x570] sm:$0xff]
    %v3009 = vld [vmem:[#allocation3 + $0x578] sm:$0xff]
    %v3010 = vld [vmem:[#allocation3 + $0x580] sm:$0xff]
    %v3011 = vld [vmem:[#allocation3 + $0x588] sm:$0xff]
    %v3012 = vld [vmem:[#allocation3 + $0x590] sm:$0xff]
    %v3013 = vld [vmem:[#allocation3 + $0x598] sm:$0xff]
    %v3014 = vld [vmem:[#allocation3 + $0x5a0] sm:$0xff]
    %v3015 = vld [vmem:[#allocation3 + $0x5a8] sm:$0xff]
    %v3016 = vld [vmem:[#allocation3 + $0x5b0] sm:$0xff]
    %v3017 = vld [vmem:[#allocation3 + $0x5b8] sm:$0xff]
    %v3018 = vld [vmem:[#allocation3 + $0x5c0] sm:$0xff]
    %v3019 = vld [vmem:[#allocation3 + $0x5c8] sm:$0xff]
    %v3020 = vld [vmem:[#allocation3 + $0x5d0] sm:$0xff]
    %v3021 = vld [vmem:[#allocation3 + $0x5d8] sm:$0xff]
    %v3022 = vld [vmem:[#allocation3 + $0x5e0] sm:$0xff]
    %v3023 = vld [vmem:[#allocation3 + $0x5e8] sm:$0xff]
    %v3024 = vld [vmem:[#allocation3 + $0x5f0] sm:$0xff]
    %v3025 = vld [vmem:[#allocation3 + $0x5f8] sm:$0xff]
    %v3026 = vld [vmem:[#allocation3 + $0x600] sm:$0xff]
    %v3027 = vld [vmem:[#allocation3 + $0x608] sm:$0xff]
    %v3028 = vld [vmem:[#allocation3 + $0x610] sm:$0xff]
    %v3029 = vld [vmem:[#allocation3 + $0x618] sm:$0xff]
    %v3030 = vld [vmem:[#allocation3 + $0x620] sm:$0xff]
    %v3031 = vld [vmem:[#allocation3 + $0x628] sm:$0xff]
    %v3032 = vld [vmem:[#allocation3 + $0x630] sm:$0xff]
    %v3033 = vld [vmem:[#allocation3 + $0x638] sm:$0xff]
    %v3034 = vld [vmem:[#allocation3 + $0x640] sm:$0xff]
    %v3035 = vld [vmem:[#allocation3 + $0x648] sm:$0xff]
    %v3036 = vld [vmem:[#allocation3 + $0x650] sm:$0xff]
    %v3037 = vld [vmem:[#allocation3 + $0x658] sm:$0xff]
    %v3038 = vld [vmem:[#allocation3 + $0x660] sm:$0xff]
    %v3039 = vld [vmem:[#allocation3 + $0x668] sm:$0xff]
    %v3040 = vld [vmem:[#allocation3 + $0x670] sm:$0xff]
    %v3041 = vld [vmem:[#allocation3 + $0x678] sm:$0xff]
    %v3042 = vld [vmem:[#allocation3 + $0x680] sm:$0xff]
    %v3043 = vld [vmem:[#allocation3 + $0x688] sm:$0xff]
    %v3044 = vld [vmem:[#allocation3 + $0x690] sm:$0xff]
    %v3045 = vld [vmem:[#allocation3 + $0x698] sm:$0xff]
    %v3046 = vld [vmem:[#allocation3 + $0x6a0] sm:$0xff]
    %v3047 = vld [vmem:[#allocation3 + $0x6a8] sm:$0xff]
    %v3048 = vld [vmem:[#allocation3 + $0x6b0] sm:$0xff]
    %v3049 = vld [vmem:[#allocation3 + $0x6b8] sm:$0xff]
    %v3050 = vld [vmem:[#allocation3 + $0x6c0] sm:$0xff]
    %v3051 = vld [vmem:[#allocation3 + $0x6c8] sm:$0xff]
    %v3052 = vld [vmem:[#allocation3 + $0x6d0] sm:$0xff]
    %v3053 = vld [vmem:[#allocation3 + $0x6d8] sm:$0xff]
    %v3054 = vld [vmem:[#allocation3 + $0x6e0] sm:$0xff]
    %v3055 = vld [vmem:[#allocation3 + $0x6e8] sm:$0xff]
    %v3056 = vld [vmem:[#allocation3 + $0x6f0] sm:$0xff]
    %v3057 = vld [vmem:[#allocation3 + $0x6f8] sm:$0xff]
    %v3058 = vld [vmem:[#allocation3 + $0x700] sm:$0xff]
    %v3059 = vld [vmem:[#allocation3 + $0x708] sm:$0xff]
    %v3060 = vld [vmem:[#allocation3 + $0x710] sm:$0xff]
    %v3061 = vld [vmem:[#allocation3 + $0x718] sm:$0xff]
    %v3062 = vld [vmem:[#allocation3 + $0x720] sm:$0xff]
    %v3063 = vld [vmem:[#allocation3 + $0x728] sm:$0xff]
    %v3064 = vld [vmem:[#allocation3 + $0x730] sm:$0xff]
    %v3065 = vld [vmem:[#allocation3 + $0x738] sm:$0xff]
    %v3066 = vld [vmem:[#allocation3 + $0x740] sm:$0xff]
    %v3067 = vld [vmem:[#allocation3 + $0x748] sm:$0xff]
    %v3068 = vld [vmem:[#allocation3 + $0x750] sm:$0xff]
    %v3069 = vld [vmem:[#allocation3 + $0x758] sm:$0xff]
    %v3070 = vld [vmem:[#allocation3 + $0x760] sm:$0xff]
    %v3071 = vld [vmem:[#allocation3 + $0x768] sm:$0xff]
    %v3072 = vld [vmem:[#allocation3 + $0x770] sm:$0xff]
    %v3073 = vld [vmem:[#allocation3 + $0x778] sm:$0xff]
    %v3074 = vld [vmem:[#allocation3 + $0x780] sm:$0xff]
    %v3075 = vld [vmem:[#allocation3 + $0x788] sm:$0xff]
    %v3076 = vld [vmem:[#allocation3 + $0x790] sm:$0xff]
    %v3077 = vld [vmem:[#allocation3 + $0x798] sm:$0xff]
    %v3078 = vld [vmem:[#allocation3 + $0x7a0] sm:$0xff]
    %v3079 = vld [vmem:[#allocation3 + $0x7a8] sm:$0xff]
    %v3080 = vld [vmem:[#allocation3 + $0x7b0] sm:$0xff]
    %v3081 = vld [vmem:[#allocation3 + $0x7b8] sm:$0xff]
    %v3082 = vld [vmem:[#allocation3 + $0x7c0] sm:$0xff]
    %v3083 = vld [vmem:[#allocation3 + $0x7c8] sm:$0xff]
    %v3084 = vld [vmem:[#allocation3 + $0x7d0] sm:$0xff]
    %v3085 = vld [vmem:[#allocation3 + $0x7d8] sm:$0xff]
    %v3086 = vld [vmem:[#allocation3 + $0x7e0] sm:$0xff]
    %v3087 = vld [vmem:[#allocation3 + $0x7e8] sm:$0xff]
    %v3088 = vld [vmem:[#allocation3 + $0x7f0] sm:$0xff]
    %v3089 = vld [vmem:[#allocation3 + $0x7f8] sm:$0xff]
    %v3090 = vunpack.c.l.s8.bf16 %v2834
    %v3091 = vunpack.c.l.s8.bf16 %v2835
    %v3092 = vunpack.c.l.s8.bf16 %v2836
    %v3093 = vunpack.c.l.s8.bf16 %v2837
    %v3094 = vunpack.c.l.s8.bf16 %v2838
    %v3095 = vunpack.c.l.s8.bf16 %v2839
    %v3096 = vunpack.c.l.s8.bf16 %v2840
    %v3097 = vunpack.c.l.s8.bf16 %v2841
    %v3098 = vunpack.c.l.s8.bf16 %v2842
    %v3099 = vunpack.c.l.s8.bf16 %v2843
    %v3100 = vunpack.c.l.s8.bf16 %v2844
    %v3101 = vunpack.c.l.s8.bf16 %v2845
    %v3102 = vunpack.c.l.s8.bf16 %v2846
    %v3103 = vunpack.c.l.s8.bf16 %v2847
    %v3104 = vunpack.c.l.s8.bf16 %v2848
    %v3105 = vunpack.c.l.s8.bf16 %v2849
    %v3106 = vunpack.c.h.s8.bf16 %v2834
    %v3107 = vunpack.c.h.s8.bf16 %v2835
    %v3108 = vunpack.c.h.s8.bf16 %v2836
    %v3109 = vunpack.c.h.s8.bf16 %v2837
    %v3110 = vunpack.c.h.s8.bf16 %v2838
    %v3111 = vunpack.c.h.s8.bf16 %v2839
    %v3112 = vunpack.c.h.s8.bf16 %v2840
    %v3113 = vunpack.c.h.s8.bf16 %v2841
    %v3114 = vunpack.c.h.s8.bf16 %v2842
    %v3115 = vunpack.c.h.s8.bf16 %v2843
    %v3116 = vunpack.c.h.s8.bf16 %v2844
    %v3117 = vunpack.c.h.s8.bf16 %v2845
    %v3118 = vunpack.c.h.s8.bf16 %v2846
    %v3119 = vunpack.c.h.s8.bf16 %v2847
    %v3120 = vunpack.c.h.s8.bf16 %v2848
    %v3121 = vunpack.c.h.s8.bf16 %v2849
    %v3122 = vunpack.c.l.s8.bf16 %v2850
    %v3123 = vunpack.c.l.s8.bf16 %v2851
    %v3124 = vunpack.c.l.s8.bf16 %v2852
    %v3125 = vunpack.c.l.s8.bf16 %v2853
    %v3126 = vunpack.c.l.s8.bf16 %v2854
    %v3127 = vunpack.c.l.s8.bf16 %v2855
    %v3128 = vunpack.c.l.s8.bf16 %v2856
    %v3129 = vunpack.c.l.s8.bf16 %v2857
    %v3130 = vunpack.c.l.s8.bf16 %v2858
    %v3131 = vunpack.c.l.s8.bf16 %v2859
    %v3132 = vunpack.c.l.s8.bf16 %v2860
    %v3133 = vunpack.c.l.s8.bf16 %v2861
    %v3134 = vunpack.c.l.s8.bf16 %v2862
    %v3135 = vunpack.c.l.s8.bf16 %v2863
    %v3136 = vunpack.c.l.s8.bf16 %v2864
    %v3137 = vunpack.c.l.s8.bf16 %v2865
    %v3138 = vunpack.c.h.s8.bf16 %v2850
    %v3139 = vunpack.c.h.s8.bf16 %v2851
    %v3140 = vunpack.c.h.s8.bf16 %v2852
    %v3141 = vunpack.c.h.s8.bf16 %v2853
    %v3142 = vunpack.c.h.s8.bf16 %v2854
    %v3143 = vunpack.c.h.s8.bf16 %v2855
    %v3144 = vunpack.c.h.s8.bf16 %v2856
    %v3145 = vunpack.c.h.s8.bf16 %v2857
    %v3146 = vunpack.c.h.s8.bf16 %v2858
    %v3147 = vunpack.c.h.s8.bf16 %v2859
    %v3148 = vunpack.c.h.s8.bf16 %v2860
    %v3149 = vunpack.c.h.s8.bf16 %v2861
    %v3150 = vunpack.c.h.s8.bf16 %v2862
    %v3151 = vunpack.c.h.s8.bf16 %v2863
    %v3152 = vunpack.c.h.s8.bf16 %v2864
    %v3153 = vunpack.c.h.s8.bf16 %v2865
    %v3154 = vunpack.c.l.s8.bf16 %v2866
    %v3155 = vunpack.c.l.s8.bf16 %v2867
    %v3156 = vunpack.c.l.s8.bf16 %v2868
    %v3157 = vunpack.c.l.s8.bf16 %v2869
    %v3158 = vunpack.c.l.s8.bf16 %v2870
    %v3159 = vunpack.c.l.s8.bf16 %v2871
    %v3160 = vunpack.c.l.s8.bf16 %v2872
    %v3161 = vunpack.c.l.s8.bf16 %v2873
    %v3162 = vunpack.c.l.s8.bf16 %v2874
    %v3163 = vunpack.c.l.s8.bf16 %v2875
    %v3164 = vunpack.c.l.s8.bf16 %v2876
    %v3165 = vunpack.c.l.s8.bf16 %v2877
    %v3166 = vunpack.c.l.s8.bf16 %v2878
    %v3167 = vunpack.c.l.s8.bf16 %v2879
    %v3168 = vunpack.c.l.s8.bf16 %v2880
    %v3169 = vunpack.c.l.s8.bf16 %v2881
    %v3170 = vunpack.c.h.s8.bf16 %v2866
    %v3171 = vunpack.c.h.s8.bf16 %v2867
    %v3172 = vunpack.c.h.s8.bf16 %v2868
    %v3173 = vunpack.c.h.s8.bf16 %v2869
    %v3174 = vunpack.c.h.s8.bf16 %v2870
    %v3175 = vunpack.c.h.s8.bf16 %v2871
    %v3176 = vunpack.c.h.s8.bf16 %v2872
    %v3177 = vunpack.c.h.s8.bf16 %v2873
    %v3178 = vunpack.c.h.s8.bf16 %v2874
    %v3179 = vunpack.c.h.s8.bf16 %v2875
    %v3180 = vunpack.c.h.s8.bf16 %v2876
    %v3181 = vunpack.c.h.s8.bf16 %v2877
    %v3182 = vunpack.c.h.s8.bf16 %v2878
    %v3183 = vunpack.c.h.s8.bf16 %v2879
    %v3184 = vunpack.c.h.s8.bf16 %v2880
    %v3185 = vunpack.c.h.s8.bf16 %v2881
    %v3186 = vunpack.c.l.s8.bf16 %v2882
    %v3187 = vunpack.c.l.s8.bf16 %v2883
    %v3188 = vunpack.c.l.s8.bf16 %v2884
    %v3189 = vunpack.c.l.s8.bf16 %v2885
    %v3190 = vunpack.c.l.s8.bf16 %v2886
    %v3191 = vunpack.c.l.s8.bf16 %v2887
    %v3192 = vunpack.c.l.s8.bf16 %v2888
    %v3193 = vunpack.c.l.s8.bf16 %v2889
    %v3194 = vunpack.c.l.s8.bf16 %v2890
    %v3195 = vunpack.c.l.s8.bf16 %v2891
    %v3196 = vunpack.c.l.s8.bf16 %v2892
    %v3197 = vunpack.c.l.s8.bf16 %v2893
    %v3198 = vunpack.c.l.s8.bf16 %v2894
    %v3199 = vunpack.c.l.s8.bf16 %v2895
    %v3200 = vunpack.c.l.s8.bf16 %v2896
    %v3201 = vunpack.c.l.s8.bf16 %v2897
    %v3202 = vunpack.c.h.s8.bf16 %v2882
    %v3203 = vunpack.c.h.s8.bf16 %v2883
    %v3204 = vunpack.c.h.s8.bf16 %v2884
    %v3205 = vunpack.c.h.s8.bf16 %v2885
    %v3206 = vunpack.c.h.s8.bf16 %v2886
    %v3207 = vunpack.c.h.s8.bf16 %v2887
    %v3208 = vunpack.c.h.s8.bf16 %v2888
    %v3209 = vunpack.c.h.s8.bf16 %v2889
    %v3210 = vunpack.c.h.s8.bf16 %v2890
    %v3211 = vunpack.c.h.s8.bf16 %v2891
    %v3212 = vunpack.c.h.s8.bf16 %v2892
    %v3213 = vunpack.c.h.s8.bf16 %v2893
    %v3214 = vunpack.c.h.s8.bf16 %v2894
    %v3215 = vunpack.c.h.s8.bf16 %v2895
    %v3216 = vunpack.c.h.s8.bf16 %v2896
    %v3217 = vunpack.c.h.s8.bf16 %v2897
    %v3218 = vunpack.c.l.s8.bf16 %v2898
    %v3219 = vunpack.c.l.s8.bf16 %v2899
    %v3220 = vunpack.c.l.s8.bf16 %v2900
    %v3221 = vunpack.c.l.s8.bf16 %v2901
    %v3222 = vunpack.c.l.s8.bf16 %v2902
    %v3223 = vunpack.c.l.s8.bf16 %v2903
    %v3224 = vunpack.c.l.s8.bf16 %v2904
    %v3225 = vunpack.c.l.s8.bf16 %v2905
    %v3226 = vunpack.c.l.s8.bf16 %v2906
    %v3227 = vunpack.c.l.s8.bf16 %v2907
    %v3228 = vunpack.c.l.s8.bf16 %v2908
    %v3229 = vunpack.c.l.s8.bf16 %v2909
    %v3230 = vunpack.c.l.s8.bf16 %v2910
    %v3231 = vunpack.c.l.s8.bf16 %v2911
    %v3232 = vunpack.c.l.s8.bf16 %v2912
    %v3233 = vunpack.c.l.s8.bf16 %v2913
    %v3234 = vunpack.c.h.s8.bf16 %v2898
    %v3235 = vunpack.c.h.s8.bf16 %v2899
    %v3236 = vunpack.c.h.s8.bf16 %v2900
    %v3237 = vunpack.c.h.s8.bf16 %v2901
    %v3238 = vunpack.c.h.s8.bf16 %v2902
    %v3239 = vunpack.c.h.s8.bf16 %v2903
    %v3240 = vunpack.c.h.s8.bf16 %v2904
    %v3241 = vunpack.c.h.s8.bf16 %v2905
    %v3242 = vunpack.c.h.s8.bf16 %v2906
    %v3243 = vunpack.c.h.s8.bf16 %v2907
    %v3244 = vunpack.c.h.s8.bf16 %v2908
    %v3245 = vunpack.c.h.s8.bf16 %v2909
    %v3246 = vunpack.c.h.s8.bf16 %v2910
    %v3247 = vunpack.c.h.s8.bf16 %v2911
    %v3248 = vunpack.c.h.s8.bf16 %v2912
    %v3249 = vunpack.c.h.s8.bf16 %v2913
    %v3250 = vunpack.c.l.s8.bf16 %v2914
    %v3251 = vunpack.c.l.s8.bf16 %v2915
    %v3252 = vunpack.c.l.s8.bf16 %v2916
    %v3253 = vunpack.c.l.s8.bf16 %v2917
    %v3254 = vunpack.c.l.s8.bf16 %v2918
    %v3255 = vunpack.c.l.s8.bf16 %v2919
    %v3256 = vunpack.c.l.s8.bf16 %v2920
    %v3257 = vunpack.c.l.s8.bf16 %v2921
    %v3258 = vunpack.c.l.s8.bf16 %v2922
    %v3259 = vunpack.c.l.s8.bf16 %v2923
    %v3260 = vunpack.c.l.s8.bf16 %v2924
    %v3261 = vunpack.c.l.s8.bf16 %v2925
    %v3262 = vunpack.c.l.s8.bf16 %v2926
    %v3263 = vunpack.c.l.s8.bf16 %v2927
    %v3264 = vunpack.c.l.s8.bf16 %v2928
    %v3265 = vunpack.c.l.s8.bf16 %v2929
    %v3266 = vunpack.c.h.s8.bf16 %v2914
    %v3267 = vunpack.c.h.s8.bf16 %v2915
    %v3268 = vunpack.c.h.s8.bf16 %v2916
    %v3269 = vunpack.c.h.s8.bf16 %v2917
    %v3270 = vunpack.c.h.s8.bf16 %v2918
    %v3271 = vunpack.c.h.s8.bf16 %v2919
    %v3272 = vunpack.c.h.s8.bf16 %v2920
    %v3273 = vunpack.c.h.s8.bf16 %v2921
    %v3274 = vunpack.c.h.s8.bf16 %v2922
    %v3275 = vunpack.c.h.s8.bf16 %v2923
    %v3276 = vunpack.c.h.s8.bf16 %v2924
    %v3277 = vunpack.c.h.s8.bf16 %v2925
    %v3278 = vunpack.c.h.s8.bf16 %v2926
    %v3279 = vunpack.c.h.s8.bf16 %v2927
    %v3280 = vunpack.c.h.s8.bf16 %v2928
    %v3281 = vunpack.c.h.s8.bf16 %v2929
    %v3282 = vunpack.c.l.s8.bf16 %v2930
    %v3283 = vunpack.c.l.s8.bf16 %v2931
    %v3284 = vunpack.c.l.s8.bf16 %v2932
    %v3285 = vunpack.c.l.s8.bf16 %v2933
    %v3286 = vunpack.c.l.s8.bf16 %v2934
    %v3287 = vunpack.c.l.s8.bf16 %v2935
    %v3288 = vunpack.c.l.s8.bf16 %v2936
    %v3289 = vunpack.c.l.s8.bf16 %v2937
    %v3290 = vunpack.c.l.s8.bf16 %v2938
    %v3291 = vunpack.c.l.s8.bf16 %v2939
    %v3292 = vunpack.c.l.s8.bf16 %v2940
    %v3293 = vunpack.c.l.s8.bf16 %v2941
    %v3294 = vunpack.c.l.s8.bf16 %v2942
    %v3295 = vunpack.c.l.s8.bf16 %v2943
    %v3296 = vunpack.c.l.s8.bf16 %v2944
    %v3297 = vunpack.c.l.s8.bf16 %v2945
    %v3298 = vunpack.c.h.s8.bf16 %v2930
    %v3299 = vunpack.c.h.s8.bf16 %v2931
    %v3300 = vunpack.c.h.s8.bf16 %v2932
    %v3301 = vunpack.c.h.s8.bf16 %v2933
    %v3302 = vunpack.c.h.s8.bf16 %v2934
    %v3303 = vunpack.c.h.s8.bf16 %v2935
    %v3304 = vunpack.c.h.s8.bf16 %v2936
    %v3305 = vunpack.c.h.s8.bf16 %v2937
    %v3306 = vunpack.c.h.s8.bf16 %v2938
    %v3307 = vunpack.c.h.s8.bf16 %v2939
    %v3308 = vunpack.c.h.s8.bf16 %v2940
    %v3309 = vunpack.c.h.s8.bf16 %v2941
    %v3310 = vunpack.c.h.s8.bf16 %v2942
    %v3311 = vunpack.c.h.s8.bf16 %v2943
    %v3312 = vunpack.c.h.s8.bf16 %v2944
    %v3313 = vunpack.c.h.s8.bf16 %v2945
    %v3314 = vunpack.c.l.s8.bf16 %v2946
    %v3315 = vunpack.c.l.s8.bf16 %v2947
    %v3316 = vunpack.c.l.s8.bf16 %v2948
    %v3317 = vunpack.c.l.s8.bf16 %v2949
    %v3318 = vunpack.c.l.s8.bf16 %v2950
    %v3319 = vunpack.c.l.s8.bf16 %v2951
    %v3320 = vunpack.c.l.s8.bf16 %v2952
    %v3321 = vunpack.c.l.s8.bf16 %v2953
    %v3322 = vunpack.c.l.s8.bf16 %v2954
    %v3323 = vunpack.c.l.s8.bf16 %v2955
    %v3324 = vunpack.c.l.s8.bf16 %v2956
    %v3325 = vunpack.c.l.s8.bf16 %v2957
    %v3326 = vunpack.c.l.s8.bf16 %v2958
    %v3327 = vunpack.c.l.s8.bf16 %v2959
    %v3328 = vunpack.c.l.s8.bf16 %v2960
    %v3329 = vunpack.c.l.s8.bf16 %v2961
    %v3330 = vunpack.c.h.s8.bf16 %v2946
    %v3331 = vunpack.c.h.s8.bf16 %v2947
    %v3332 = vunpack.c.h.s8.bf16 %v2948
    %v3333 = vunpack.c.h.s8.bf16 %v2949
    %v3334 = vunpack.c.h.s8.bf16 %v2950
    %v3335 = vunpack.c.h.s8.bf16 %v2951
    %v3336 = vunpack.c.h.s8.bf16 %v2952
    %v3337 = vunpack.c.h.s8.bf16 %v2953
    %v3338 = vunpack.c.h.s8.bf16 %v2954
    %v3339 = vunpack.c.h.s8.bf16 %v2955
    %v3340 = vunpack.c.h.s8.bf16 %v2956
    %v3341 = vunpack.c.h.s8.bf16 %v2957
    %v3342 = vunpack.c.h.s8.bf16 %v2958
    %v3343 = vunpack.c.h.s8.bf16 %v2959
    %v3344 = vunpack.c.h.s8.bf16 %v2960
    %v3345 = vunpack.c.h.s8.bf16 %v2961
    %v3346 = vunpack.c.l.s8.bf16 %v2962
    %v3347 = vunpack.c.l.s8.bf16 %v2963
    %v3348 = vunpack.c.l.s8.bf16 %v2964
    %v3349 = vunpack.c.l.s8.bf16 %v2965
    %v3350 = vunpack.c.l.s8.bf16 %v2966
    %v3351 = vunpack.c.l.s8.bf16 %v2967
    %v3352 = vunpack.c.l.s8.bf16 %v2968
    %v3353 = vunpack.c.l.s8.bf16 %v2969
    %v3354 = vunpack.c.l.s8.bf16 %v2970
    %v3355 = vunpack.c.l.s8.bf16 %v2971
    %v3356 = vunpack.c.l.s8.bf16 %v2972
    %v3357 = vunpack.c.l.s8.bf16 %v2973
    %v3358 = vunpack.c.l.s8.bf16 %v2974
    %v3359 = vunpack.c.l.s8.bf16 %v2975
    %v3360 = vunpack.c.l.s8.bf16 %v2976
    %v3361 = vunpack.c.l.s8.bf16 %v2977
    %v3362 = vunpack.c.h.s8.bf16 %v2962
    %v3363 = vunpack.c.h.s8.bf16 %v2963
    %v3364 = vunpack.c.h.s8.bf16 %v2964
    %v3365 = vunpack.c.h.s8.bf16 %v2965
    %v3366 = vunpack.c.h.s8.bf16 %v2966
    %v3367 = vunpack.c.h.s8.bf16 %v2967
    %v3368 = vunpack.c.h.s8.bf16 %v2968
    %v3369 = vunpack.c.h.s8.bf16 %v2969
    %v3370 = vunpack.c.h.s8.bf16 %v2970
    %v3371 = vunpack.c.h.s8.bf16 %v2971
    %v3372 = vunpack.c.h.s8.bf16 %v2972
    %v3373 = vunpack.c.h.s8.bf16 %v2973
    %v3374 = vunpack.c.h.s8.bf16 %v2974
    %v3375 = vunpack.c.h.s8.bf16 %v2975
    %v3376 = vunpack.c.h.s8.bf16 %v2976
    %v3377 = vunpack.c.h.s8.bf16 %v2977
    %v3378 = vunpack.c.l.s8.bf16 %v2978
    %v3379 = vunpack.c.l.s8.bf16 %v2979
    %v3380 = vunpack.c.l.s8.bf16 %v2980
    %v3381 = vunpack.c.l.s8.bf16 %v2981
    %v3382 = vunpack.c.l.s8.bf16 %v2982
    %v3383 = vunpack.c.l.s8.bf16 %v2983
    %v3384 = vunpack.c.l.s8.bf16 %v2984
    %v3385 = vunpack.c.l.s8.bf16 %v2985
    %v3386 = vunpack.c.l.s8.bf16 %v2986
    %v3387 = vunpack.c.l.s8.bf16 %v2987
    %v3388 = vunpack.c.l.s8.bf16 %v2988
    %v3389 = vunpack.c.l.s8.bf16 %v2989
    %v3390 = vunpack.c.l.s8.bf16 %v2990
    %v3391 = vunpack.c.l.s8.bf16 %v2991
    %v3392 = vunpack.c.l.s8.bf16 %v2992
    %v3393 = vunpack.c.l.s8.bf16 %v2993
    %v3394 = vunpack.c.h.s8.bf16 %v2978
    %v3395 = vunpack.c.h.s8.bf16 %v2979
    %v3396 = vunpack.c.h.s8.bf16 %v2980
    %v3397 = vunpack.c.h.s8.bf16 %v2981
    %v3398 = vunpack.c.h.s8.bf16 %v2982
    %v3399 = vunpack.c.h.s8.bf16 %v2983
    %v3400 = vunpack.c.h.s8.bf16 %v2984
    %v3401 = vunpack.c.h.s8.bf16 %v2985
    %v3402 = vunpack.c.h.s8.bf16 %v2986
    %v3403 = vunpack.c.h.s8.bf16 %v2987
    %v3404 = vunpack.c.h.s8.bf16 %v2988
    %v3405 = vunpack.c.h.s8.bf16 %v2989
    %v3406 = vunpack.c.h.s8.bf16 %v2990
    %v3407 = vunpack.c.h.s8.bf16 %v2991
    %v3408 = vunpack.c.h.s8.bf16 %v2992
    %v3409 = vunpack.c.h.s8.bf16 %v2993
    %v3410 = vunpack.c.l.s8.bf16 %v2994
    %v3411 = vunpack.c.l.s8.bf16 %v2995
    %v3412 = vunpack.c.l.s8.bf16 %v2996
    %v3413 = vunpack.c.l.s8.bf16 %v2997
    %v3414 = vunpack.c.l.s8.bf16 %v2998
    %v3415 = vunpack.c.l.s8.bf16 %v2999
    %v3416 = vunpack.c.l.s8.bf16 %v3000
    %v3417 = vunpack.c.l.s8.bf16 %v3001
    %v3418 = vunpack.c.l.s8.bf16 %v3002
    %v3419 = vunpack.c.l.s8.bf16 %v3003
    %v3420 = vunpack.c.l.s8.bf16 %v3004
    %v3421 = vunpack.c.l.s8.bf16 %v3005
    %v3422 = vunpack.c.l.s8.bf16 %v3006
    %v3423 = vunpack.c.l.s8.bf16 %v3007
    %v3424 = vunpack.c.l.s8.bf16 %v3008
    %v3425 = vunpack.c.l.s8.bf16 %v3009
    %v3426 = vunpack.c.h.s8.bf16 %v2994
    %v3427 = vunpack.c.h.s8.bf16 %v2995
    %v3428 = vunpack.c.h.s8.bf16 %v2996
    %v3429 = vunpack.c.h.s8.bf16 %v2997
    %v3430 = vunpack.c.h.s8.bf16 %v2998
    %v3431 = vunpack.c.h.s8.bf16 %v2999
    %v3432 = vunpack.c.h.s8.bf16 %v3000
    %v3433 = vunpack.c.h.s8.bf16 %v3001
    %v3434 = vunpack.c.h.s8.bf16 %v3002
    %v3435 = vunpack.c.h.s8.bf16 %v3003
    %v3436 = vunpack.c.h.s8.bf16 %v3004
    %v3437 = vunpack.c.h.s8.bf16 %v3005
    %v3438 = vunpack.c.h.s8.bf16 %v3006
    %v3439 = vunpack.c.h.s8.bf16 %v3007
    %v3440 = vunpack.c.h.s8.bf16 %v3008
    %v3441 = vunpack.c.h.s8.bf16 %v3009
    %v3442 = vunpack.c.l.s8.bf16 %v3010
    %v3443 = vunpack.c.l.s8.bf16 %v3011
    %v3444 = vunpack.c.l.s8.bf16 %v3012
    %v3445 = vunpack.c.l.s8.bf16 %v3013
    %v3446 = vunpack.c.l.s8.bf16 %v3014
    %v3447 = vunpack.c.l.s8.bf16 %v3015
    %v3448 = vunpack.c.l.s8.bf16 %v3016
    %v3449 = vunpack.c.l.s8.bf16 %v3017
    %v3450 = vunpack.c.l.s8.bf16 %v3018
    %v3451 = vunpack.c.l.s8.bf16 %v3019
    %v3452 = vunpack.c.l.s8.bf16 %v3020
    %v3453 = vunpack.c.l.s8.bf16 %v3021
    %v3454 = vunpack.c.l.s8.bf16 %v3022
    %v3455 = vunpack.c.l.s8.bf16 %v3023
    %v3456 = vunpack.c.l.s8.bf16 %v3024
    %v3457 = vunpack.c.l.s8.bf16 %v3025
    %v3458 = vunpack.c.h.s8.bf16 %v3010
    %v3459 = vunpack.c.h.s8.bf16 %v3011
    %v3460 = vunpack.c.h.s8.bf16 %v3012
    %v3461 = vunpack.c.h.s8.bf16 %v3013
    %v3462 = vunpack.c.h.s8.bf16 %v3014
    %v3463 = vunpack.c.h.s8.bf16 %v3015
    %v3464 = vunpack.c.h.s8.bf16 %v3016
    %v3465 = vunpack.c.h.s8.bf16 %v3017
    %v3466 = vunpack.c.h.s8.bf16 %v3018
    %v3467 = vunpack.c.h.s8.bf16 %v3019
    %v3468 = vunpack.c.h.s8.bf16 %v3020
    %v3469 = vunpack.c.h.s8.bf16 %v3021
    %v3470 = vunpack.c.h.s8.bf16 %v3022
    %v3471 = vunpack.c.h.s8.bf16 %v3023
    %v3472 = vunpack.c.h.s8.bf16 %v3024
    %v3473 = vunpack.c.h.s8.bf16 %v3025
    %v3474 = vunpack.c.l.s8.bf16 %v3026
    %v3475 = vunpack.c.l.s8.bf16 %v3027
    %v3476 = vunpack.c.l.s8.bf16 %v3028
    %v3477 = vunpack.c.l.s8.bf16 %v3029
    %v3478 = vunpack.c.l.s8.bf16 %v3030
    %v3479 = vunpack.c.l.s8.bf16 %v3031
    %v3480 = vunpack.c.l.s8.bf16 %v3032
    %v3481 = vunpack.c.l.s8.bf16 %v3033
    %v3482 = vunpack.c.l.s8.bf16 %v3034
    %v3483 = vunpack.c.l.s8.bf16 %v3035
    %v3484 = vunpack.c.l.s8.bf16 %v3036
    %v3485 = vunpack.c.l.s8.bf16 %v3037
    %v3486 = vunpack.c.l.s8.bf16 %v3038
    %v3487 = vunpack.c.l.s8.bf16 %v3039
    %v3488 = vunpack.c.l.s8.bf16 %v3040
    %v3489 = vunpack.c.l.s8.bf16 %v3041
    %v3490 = vunpack.c.h.s8.bf16 %v3026
    %v3491 = vunpack.c.h.s8.bf16 %v3027
    %v3492 = vunpack.c.h.s8.bf16 %v3028
    %v3493 = vunpack.c.h.s8.bf16 %v3029
    %v3494 = vunpack.c.h.s8.bf16 %v3030
    %v3495 = vunpack.c.h.s8.bf16 %v3031
    %v3496 = vunpack.c.h.s8.bf16 %v3032
    %v3497 = vunpack.c.h.s8.bf16 %v3033
    %v3498 = vunpack.c.h.s8.bf16 %v3034
    %v3499 = vunpack.c.h.s8.bf16 %v3035
    %v3500 = vunpack.c.h.s8.bf16 %v3036
    %v3501 = vunpack.c.h.s8.bf16 %v3037
    %v3502 = vunpack.c.h.s8.bf16 %v3038
    %v3503 = vunpack.c.h.s8.bf16 %v3039
    %v3504 = vunpack.c.h.s8.bf16 %v3040
    %v3505 = vunpack.c.h.s8.bf16 %v3041
    %v3506 = vunpack.c.l.s8.bf16 %v3042
    %v3507 = vunpack.c.l.s8.bf16 %v3043
    %v3508 = vunpack.c.l.s8.bf16 %v3044
    %v3509 = vunpack.c.l.s8.bf16 %v3045
    %v3510 = vunpack.c.l.s8.bf16 %v3046
    %v3511 = vunpack.c.l.s8.bf16 %v3047
    %v3512 = vunpack.c.l.s8.bf16 %v3048
    %v3513 = vunpack.c.l.s8.bf16 %v3049
    %v3514 = vunpack.c.l.s8.bf16 %v3050
    %v3515 = vunpack.c.l.s8.bf16 %v3051
    %v3516 = vunpack.c.l.s8.bf16 %v3052
    %v3517 = vunpack.c.l.s8.bf16 %v3053
    %v3518 = vunpack.c.l.s8.bf16 %v3054
    %v3519 = vunpack.c.l.s8.bf16 %v3055
    %v3520 = vunpack.c.l.s8.bf16 %v3056
    %v3521 = vunpack.c.l.s8.bf16 %v3057
    %v3522 = vunpack.c.h.s8.bf16 %v3042
    %v3523 = vunpack.c.h.s8.bf16 %v3043
    %v3524 = vunpack.c.h.s8.bf16 %v3044
    %v3525 = vunpack.c.h.s8.bf16 %v3045
    %v3526 = vunpack.c.h.s8.bf16 %v3046
    %v3527 = vunpack.c.h.s8.bf16 %v3047
    %v3528 = vunpack.c.h.s8.bf16 %v3048
    %v3529 = vunpack.c.h.s8.bf16 %v3049
    %v3530 = vunpack.c.h.s8.bf16 %v3050
    %v3531 = vunpack.c.h.s8.bf16 %v3051
    %v3532 = vunpack.c.h.s8.bf16 %v3052
    %v3533 = vunpack.c.h.s8.bf16 %v3053
    %v3534 = vunpack.c.h.s8.bf16 %v3054
    %v3535 = vunpack.c.h.s8.bf16 %v3055
    %v3536 = vunpack.c.h.s8.bf16 %v3056
    %v3537 = vunpack.c.h.s8.bf16 %v3057
    %v3538 = vunpack.c.l.s8.bf16 %v3058
    %v3539 = vunpack.c.l.s8.bf16 %v3059
    %v3540 = vunpack.c.l.s8.bf16 %v3060
    %v3541 = vunpack.c.l.s8.bf16 %v3061
    %v3542 = vunpack.c.l.s8.bf16 %v3062
    %v3543 = vunpack.c.l.s8.bf16 %v3063
    %v3544 = vunpack.c.l.s8.bf16 %v3064
    %v3545 = vunpack.c.l.s8.bf16 %v3065
    %v3546 = vunpack.c.l.s8.bf16 %v3066
    %v3547 = vunpack.c.l.s8.bf16 %v3067
    %v3548 = vunpack.c.l.s8.bf16 %v3068
    %v3549 = vunpack.c.l.s8.bf16 %v3069
    %v3550 = vunpack.c.l.s8.bf16 %v3070
    %v3551 = vunpack.c.l.s8.bf16 %v3071
    %v3552 = vunpack.c.l.s8.bf16 %v3072
    %v3553 = vunpack.c.l.s8.bf16 %v3073
    %v3554 = vunpack.c.h.s8.bf16 %v3058
    %v3555 = vunpack.c.h.s8.bf16 %v3059
    %v3556 = vunpack.c.h.s8.bf16 %v3060
    %v3557 = vunpack.c.h.s8.bf16 %v3061
    %v3558 = vunpack.c.h.s8.bf16 %v3062
    %v3559 = vunpack.c.h.s8.bf16 %v3063
    %v3560 = vunpack.c.h.s8.bf16 %v3064
    %v3561 = vunpack.c.h.s8.bf16 %v3065
    %v3562 = vunpack.c.h.s8.bf16 %v3066
    %v3563 = vunpack.c.h.s8.bf16 %v3067
    %v3564 = vunpack.c.h.s8.bf16 %v3068
    %v3565 = vunpack.c.h.s8.bf16 %v3069
    %v3566 = vunpack.c.h.s8.bf16 %v3070
    %v3567 = vunpack.c.h.s8.bf16 %v3071
    %v3568 = vunpack.c.h.s8.bf16 %v3072
    %v3569 = vunpack.c.h.s8.bf16 %v3073
    %v3570 = vunpack.c.l.s8.bf16 %v3074
    %v3571 = vunpack.c.l.s8.bf16 %v3075
    %v3572 = vunpack.c.l.s8.bf16 %v3076
    %v3573 = vunpack.c.l.s8.bf16 %v3077
    %v3574 = vunpack.c.l.s8.bf16 %v3078
    %v3575 = vunpack.c.l.s8.bf16 %v3079
    %v3576 = vunpack.c.l.s8.bf16 %v3080
    %v3577 = vunpack.c.l.s8.bf16 %v3081
    %v3578 = vunpack.c.l.s8.bf16 %v3082
    %v3579 = vunpack.c.l.s8.bf16 %v3083
    %v3580 = vunpack.c.l.s8.bf16 %v3084
    %v3581 = vunpack.c.l.s8.bf16 %v3085
    %v3582 = vunpack.c.l.s8.bf16 %v3086
    %v3583 = vunpack.c.l.s8.bf16 %v3087
    %v3584 = vunpack.c.l.s8.bf16 %v3088
    %v3585 = vunpack.c.l.s8.bf16 %v3089
    %v3586 = vunpack.c.h.s8.bf16 %v3074
    %v3587 = vunpack.c.h.s8.bf16 %v3075
    %v3588 = vunpack.c.h.s8.bf16 %v3076
    %v3589 = vunpack.c.h.s8.bf16 %v3077
    %v3590 = vunpack.c.h.s8.bf16 %v3078
    %v3591 = vunpack.c.h.s8.bf16 %v3079
    %v3592 = vunpack.c.h.s8.bf16 %v3080
    %v3593 = vunpack.c.h.s8.bf16 %v3081
    %v3594 = vunpack.c.h.s8.bf16 %v3082
    %v3595 = vunpack.c.h.s8.bf16 %v3083
    %v3596 = vunpack.c.h.s8.bf16 %v3084
    %v3597 = vunpack.c.h.s8.bf16 %v3085
    %v3598 = vunpack.c.h.s8.bf16 %v3086
    %v3599 = vunpack.c.h.s8.bf16 %v3087
    %v3600 = vunpack.c.h.s8.bf16 %v3088
    %v3601 = vunpack.c.h.s8.bf16 %v3089
    %3602 = vmatprep.subr.bf16.mxu0 %v3091
    %3603 = vmatpush1.bf16.msra.mxu0 %v3090
    %3604 = vmatprep.subr.bf16.mxu0 %v3107
    %3605 = vmatpush1.bf16.msra.mxu0 %v3106
    %3606 = vmatprep.subr.bf16.mxu0 %v3123
    %3607 = vmatpush1.bf16.msra.mxu0 %v3122
    %3608 = vmatprep.subr.bf16.mxu0 %v3139
    %3609 = vmatpush1.bf16.msra.mxu0 %v3138
    %3610 = vmatprep.subr.bf16.mxu0 %v3155
    %3611 = vmatpush1.bf16.msra.mxu0 %v3154
    %3612 = vmatprep.subr.bf16.mxu0 %v3171
    %3613 = vmatpush1.bf16.msra.mxu0 %v3170
    %3614 = vmatprep.subr.bf16.mxu0 %v3187
    %3615 = vmatpush1.bf16.msra.mxu0 %v3186
    %3616 = vmatprep.subr.bf16.mxu0 %v3203
    %3617 = vmatpush1.bf16.msra.mxu0 %v3202
    %3618 = vmatprep.subr.bf16.mxu0 %v3219
    %3619 = vmatpush1.bf16.msra.mxu0 %v3218
    %3620 = vmatprep.subr.bf16.mxu0 %v3235
    %3621 = vmatpush1.bf16.msra.mxu0 %v3234
    %3622 = vmatprep.subr.bf16.mxu0 %v3251
    %3623 = vmatpush1.bf16.msra.mxu0 %v3250
    %3624 = vmatprep.subr.bf16.mxu0 %v3267
    %3625 = vmatpush1.bf16.msra.mxu0 %v3266
    %3626 = vmatprep.subr.bf16.mxu0 %v3283
    %3627 = vmatpush1.bf16.msra.mxu0 %v3282
    %3628 = vmatprep.subr.bf16.mxu0 %v3299
    %3629 = vmatpush1.bf16.msra.mxu0 %v3298
    %3630 = vmatprep.subr.bf16.mxu0 %v3315
    %3631 = vmatpush1.bf16.msra.mxu0 %v3314
    %3632 = vmatprep.subr.bf16.mxu0 %v3331
    %3633 = vmatpush1.bf16.msra.mxu0 %v3330
    %3634 = vmatprep.mubr.bf16.mxu0 %v1109
    %3635 = vmatmul.mubr.bf16.gmra.mrb[0].mxu0 %v1108
    %v3636 = vpop.f32.mrb[0].mxu0
    %v3637 = vadd.f32 0.0, %v3636
    %v3638 = vpop.f32.mrb[0].mxu0
    %v3639 = vadd.f32 0.0, %v3638
    %v3640 = vpop.f32.mrb[0].mxu0
    %v3641 = vpop.f32.mrb[0].mxu0
    %3642 = vdwg.mxu0
    %3643 = vmatprep.subr.bf16.mxu0 %v3347
    %3644 = vmatpush1.bf16.msra.mxu0 %v3346
    %3645 = vmatprep.subr.bf16.mxu0 %v3363
    %3646 = vmatpush1.bf16.msra.mxu0 %v3362
    %3647 = vmatprep.subr.bf16.mxu0 %v3379
    %3648 = vmatpush1.bf16.msra.mxu0 %v3378
    %3649 = vmatprep.subr.bf16.mxu0 %v3395
    %3650 = vmatpush1.bf16.msra.mxu0 %v3394
    %3651 = vmatprep.subr.bf16.mxu0 %v3411
    %3652 = vmatpush1.bf16.msra.mxu0 %v3410
    %3653 = vmatprep.subr.bf16.mxu0 %v3427
    %3654 = vmatpush1.bf16.msra.mxu0 %v3426
    %3655 = vmatprep.subr.bf16.mxu0 %v3443
    %3656 = vmatpush1.bf16.msra.mxu0 %v3442
    %3657 = vmatprep.subr.bf16.mxu0 %v3459
    %3658 = vmatpush1.bf16.msra.mxu0 %v3458
    %3659 = vmatprep.subr.bf16.mxu0 %v3475
    %3660 = vmatpush1.bf16.msra.mxu0 %v3474
    %3661 = vmatprep.subr.bf16.mxu0 %v3491
    %3662 = vmatpush1.bf16.msra.mxu0 %v3490
    %3663 = vmatprep.subr.bf16.mxu0 %v3507
    %3664 = vmatpush1.bf16.msra.mxu0 %v3506
    %3665 = vmatprep.subr.bf16.mxu0 %v3523
    %3666 = vmatpush1.bf16.msra.mxu0 %v3522
    %3667 = vmatprep.subr.bf16.mxu0 %v3539
    %3668 = vmatpush1.bf16.msra.mxu0 %v3538
    %3669 = vmatprep.subr.bf16.mxu0 %v3555
    %3670 = vmatpush1.bf16.msra.mxu0 %v3554
    %3671 = vmatprep.subr.bf16.mxu0 %v3571
    %3672 = vmatpush1.bf16.msra.mxu0 %v3570
    %3673 = vmatprep.subr.bf16.mxu0 %v3587
    %3674 = vmatpush1.bf16.msra.mxu0 %v3586
    %3675 = vmatprep.mubr.bf16.mxu0 %v1111
    %3676 = vmatmul.mubr.bf16.gmra.mrb[0].mxu0 %v1110
    %v3677 = vpop.f32.mrb[0].mxu0
    %v3678 = vadd.f32 %v3637, %v3677
    %v3679 = vpop.f32.mrb[0].mxu0
    %v3680 = vadd.f32 %v3639, %v3679
    %v3681 = vpop.f32.mrb[0].mxu0
    %v3682 = vpop.f32.mrb[0].mxu0
    %3683 = vdwg.mxu0
    %3684 = vmatprep.subr.bf16.mxu0 %v3093
    %3685 = vmatpush1.bf16.msra.mxu0 %v3092
    %3686 = vmatprep.subr.bf16.mxu0 %v3109
    %3687 = vmatpush1.bf16.msra.mxu0 %v3108
    %3688 = vmatprep.subr.bf16.mxu0 %v3125
    %3689 = vmatpush1.bf16.msra.mxu0 %v3124
    %3690 = vmatprep.subr.bf16.mxu0 %v3141
    %3691 = vmatpush1.bf16.msra.mxu0 %v3140
    %3692 = vmatprep.subr.bf16.mxu0 %v3157
    %3693 = vmatpush1.bf16.msra.mxu0 %v3156
    %3694 = vmatprep.subr.bf16.mxu0 %v3173
    %3695 = vmatpush1.bf16.msra.mxu0 %v3172
    %3696 = vmatprep.subr.bf16.mxu0 %v3189
    %3697 = vmatpush1.bf16.msra.mxu0 %v3188
    %3698 = vmatprep.subr.bf16.mxu0 %v3205
    %3699 = vmatpush1.bf16.msra.mxu0 %v3204
    %3700 = vmatprep.subr.bf16.mxu0 %v3221
    %3701 = vmatpush1.bf16.msra.mxu0 %v3220
    %3702 = vmatprep.subr.bf16.mxu0 %v3237
    %3703 = vmatpush1.bf16.msra.mxu0 %v3236
    %3704 = vmatprep.subr.bf16.mxu0 %v3253
    %3705 = vmatpush1.bf16.msra.mxu0 %v3252
    %3706 = vmatprep.subr.bf16.mxu0 %v3269
    %3707 = vmatpush1.bf16.msra.mxu0 %v3268
    %3708 = vmatprep.subr.bf16.mxu0 %v3285
    %3709 = vmatpush1.bf16.msra.mxu0 %v3284
    %3710 = vmatprep.subr.bf16.mxu0 %v3301
    %3711 = vmatpush1.bf16.msra.mxu0 %v3300
    %3712 = vmatprep.subr.bf16.mxu0 %v3317
    %3713 = vmatpush1.bf16.msra.mxu0 %v3316
    %3714 = vmatprep.subr.bf16.mxu0 %v3333
    %3715 = vmatpush1.bf16.msra.mxu0 %v3332
    %3716 = vmatprep.mubr.bf16.mxu0 %v1109
    %3717 = vmatmul.mubr.bf16.gmra.mrb[0].mxu0 %v1108
    %v3718 = vpop.f32.mrb[0].mxu0
    %v3719 = vadd.f32 0.0, %v3718
    %v3720 = vpop.f32.mrb[0].mxu0
    %v3721 = vadd.f32 0.0, %v3720
    %v3722 = vpop.f32.mrb[0].mxu0
    %v3723 = vpop.f32.mrb[0].mxu0
    %3724 = vdwg.mxu0
    %3725 = vmatprep.subr.bf16.mxu0 %v3349
    %3726 = vmatpush1.bf16.msra.mxu0 %v3348
    %3727 = vmatprep.subr.bf16.mxu0 %v3365
    %3728 = vmatpush1.bf16.msra.mxu0 %v3364
    %3729 = vmatprep.subr.bf16.mxu0 %v3381
    %3730 = vmatpush1.bf16.msra.mxu0 %v3380
    %3731 = vmatprep.subr.bf16.mxu0 %v3397
    %3732 = vmatpush1.bf16.msra.mxu0 %v3396
    %3733 = vmatprep.subr.bf16.mxu0 %v3413
    %3734 = vmatpush1.bf16.msra.mxu0 %v3412
    %3735 = vmatprep.subr.bf16.mxu0 %v3429
    %3736 = vmatpush1.bf16.msra.mxu0 %v3428
    %3737 = vmatprep.subr.bf16.mxu0 %v3445
    %3738 = vmatpush1.bf16.msra.mxu0 %v3444
    %3739 = vmatprep.subr.bf16.mxu0 %v3461
    %3740 = vmatpush1.bf16.msra.mxu0 %v3460
    %3741 = vmatprep.subr.bf16.mxu0 %v3477
    %3742 = vmatpush1.bf16.msra.mxu0 %v3476
    %3743 = vmatprep.subr.bf16.mxu0 %v3493
    %3744 = vmatpush1.bf16.msra.mxu0 %v3492
    %3745 = vmatprep.subr.bf16.mxu0 %v3509
    %3746 = vmatpush1.bf16.msra.mxu0 %v3508
    %3747 = vmatprep.subr.bf16.mxu0 %v3525
    %3748 = vmatpush1.bf16.msra.mxu0 %v3524
    %3749 = vmatprep.subr.bf16.mxu0 %v3541
    %3750 = vmatpush1.bf16.msra.mxu0 %v3540
    %3751 = vmatprep.subr.bf16.mxu0 %v3557
    %3752 = vmatpush1.bf16.msra.mxu0 %v3556
    %3753 = vmatprep.subr.bf16.mxu0 %v3573
    %3754 = vmatpush1.bf16.msra.mxu0 %v3572
    %3755 = vmatprep.subr.bf16.mxu0 %v3589
    %3756 = vmatpush1.bf16.msra.mxu0 %v3588
    %3757 = vmatprep.mubr.bf16.mxu0 %v1111
    %3758 = vmatmul.mubr.bf16.gmra.mrb[0].mxu0 %v1110
    %v3759 = vpop.f32.mrb[0].mxu0
    %v3760 = vadd.f32 %v3719, %v3759
    %v3761 = vpop.f32.mrb[0].mxu0
    %v3762 = vadd.f32 %v3721, %v3761
    %v3763 = vpop.f32.mrb[0].mxu0
    %v3764 = vpop.f32.mrb[0].mxu0
    %3765 = vdwg.mxu0
    %3766 = vmatprep.subr.bf16.mxu0 %v3095
    %3767 = vmatpush1.bf16.msra.mxu0 %v3094
    %3768 = vmatprep.subr.bf16.mxu0 %v3111
    %3769 = vmatpush1.bf16.msra.mxu0 %v3110
    %3770 = vmatprep.subr.bf16.mxu0 %v3127
    %3771 = vmatpush1.bf16.msra.mxu0 %v3126
    %3772 = vmatprep.subr.bf16.mxu0 %v3143
    %3773 = vmatpush1.bf16.msra.mxu0 %v3142
    %3774 = vmatprep.subr.bf16.mxu0 %v3159
    %3775 = vmatpush1.bf16.msra.mxu0 %v3158
    %3776 = vmatprep.subr.bf16.mxu0 %v3175
    %3777 = vmatpush1.bf16.msra.mxu0 %v3174
    %3778 = vmatprep.subr.bf16.mxu0 %v3191
    %3779 = vmatpush1.bf16.msra.mxu0 %v3190
    %3780 = vmatprep.subr.bf16.mxu0 %v3207
    %3781 = vmatpush1.bf16.msra.mxu0 %v3206
    %3782 = vmatprep.subr.bf16.mxu0 %v3223
    %3783 = vmatpush1.bf16.msra.mxu0 %v3222
    %3784 = vmatprep.subr.bf16.mxu0 %v3239
    %3785 = vmatpush1.bf16.msra.mxu0 %v3238
    %3786 = vmatprep.subr.bf16.mxu0 %v3255
    %3787 = vmatpush1.bf16.msra.mxu0 %v3254
    %3788 = vmatprep.subr.bf16.mxu0 %v3271
    %3789 = vmatpush1.bf16.msra.mxu0 %v3270
    %3790 = vmatprep.subr.bf16.mxu0 %v3287
    %3791 = vmatpush1.bf16.msra.mxu0 %v3286
    %3792 = vmatprep.subr.bf16.mxu0 %v3303
    %3793 = vmatpush1.bf16.msra.mxu0 %v3302
    %3794 = vmatprep.subr.bf16.mxu0 %v3319
    %3795 = vmatpush1.bf16.msra.mxu0 %v3318
    %3796 = vmatprep.subr.bf16.mxu0 %v3335
    %3797 = vmatpush1.bf16.msra.mxu0 %v3334
    %3798 = vmatprep.mubr.bf16.mxu0 %v1109
    %3799 = vmatmul.mubr.bf16.gmra.mrb[0].mxu0 %v1108
    %v3800 = vpop.f32.mrb[0].mxu0
    %v3801 = vadd.f32 0.0, %v3800
    %v3802 = vpop.f32.mrb[0].mxu0
    %v3803 = vadd.f32 0.0, %v3802
    %v3804 = vpop.f32.mrb[0].mxu0
    %v3805 = vpop.f32.mrb[0].mxu0
    %3806 = vdwg.mxu0
    %3807 = vmatprep.subr.bf16.mxu0 %v3351
    %3808 = vmatpush1.bf16.msra.mxu0 %v3350
    %3809 = vmatprep.subr.bf16.mxu0 %v3367
    %3810 = vmatpush1.bf16.msra.mxu0 %v3366
    %3811 = vmatprep.subr.bf16.mxu0 %v3383
    %3812 = vmatpush1.bf16.msra.mxu0 %v3382
    %3813 = vmatprep.subr.bf16.mxu0 %v3399
    %3814 = vmatpush1.bf16.msra.mxu0 %v3398
    %3815 = vmatprep.subr.bf16.mxu0 %v3415
    %3816 = vmatpush1.bf16.msra.mxu0 %v3414
    %3817 = vmatprep.subr.bf16.mxu0 %v3431
    %3818 = vmatpush1.bf16.msra.mxu0 %v3430
    %3819 = vmatprep.subr.bf16.mxu0 %v3447
    %3820 = vmatpush1.bf16.msra.mxu0 %v3446
    %3821 = vmatprep.subr.bf16.mxu0 %v3463
    %3822 = vmatpush1.bf16.msra.mxu0 %v3462
    %3823 = vmatprep.subr.bf16.mxu0 %v3479
    %3824 = vmatpush1.bf16.msra.mxu0 %v3478
    %3825 = vmatprep.subr.bf16.mxu0 %v3495
    %3826 = vmatpush1.bf16.msra.mxu0 %v3494
    %3827 = vmatprep.subr.bf16.mxu0 %v3511
    %3828 = vmatpush1.bf16.msra.mxu0 %v3510
    %3829 = vmatprep.subr.bf16.mxu0 %v3527
    %3830 = vmatpush1.bf16.msra.mxu0 %v3526
    %3831 = vmatprep.subr.bf16.mxu0 %v3543
    %3832 = vmatpush1.bf16.msra.mxu0 %v3542
    %3833 = vmatprep.subr.bf16.mxu0 %v3559
    %3834 = vmatpush1.bf16.msra.mxu0 %v3558
    %3835 = vmatprep.subr.bf16.mxu0 %v3575
    %3836 = vmatpush1.bf16.msra.mxu0 %v3574
    %3837 = vmatprep.subr.bf16.mxu0 %v3591
    %3838 = vmatpush1.bf16.msra.mxu0 %v3590
    %3839 = vmatprep.mubr.bf16.mxu0 %v1111
    %3840 = vmatmul.mubr.bf16.gmra.mrb[0].mxu0 %v1110
    %v3841 = vpop.f32.mrb[0].mxu0
    %v3842 = vadd.f32 %v3801, %v3841
    %v3843 = vpop.f32.mrb[0].mxu0
    %v3844 = vadd.f32 %v3803, %v3843
    %v3845 = vpop.f32.mrb[0].mxu0
    %v3846 = vpop.f32.mrb[0].mxu0
    %3847 = vdwg.mxu0
    %3848 = vmatprep.subr.bf16.mxu0 %v3097
    %3849 = vmatpush1.bf16.msra.mxu0 %v3096
    %3850 = vmatprep.subr.bf16.mxu0 %v3113
    %3851 = vmatpush1.bf16.msra.mxu0 %v3112
    %3852 = vmatprep.subr.bf16.mxu0 %v3129
    %3853 = vmatpush1.bf16.msra.mxu0 %v3128
    %3854 = vmatprep.subr.bf16.mxu0 %v3145
    %3855 = vmatpush1.bf16.msra.mxu0 %v3144
    %3856 = vmatprep.subr.bf16.mxu0 %v3161
    %3857 = vmatpush1.bf16.msra.mxu0 %v3160
    %3858 = vmatprep.subr.bf16.mxu0 %v3177
    %3859 = vmatpush1.bf16.msra.mxu0 %v3176
    %3860 = vmatprep.subr.bf16.mxu0 %v3193
    %3861 = vmatpush1.bf16.msra.mxu0 %v3192
    %3862 = vmatprep.subr.bf16.mxu0 %v3209
    %3863 = vmatpush1.bf16.msra.mxu0 %v3208
    %3864 = vmatprep.subr.bf16.mxu0 %v3225
    %3865 = vmatpush1.bf16.msra.mxu0 %v3224
    %3866 = vmatprep.subr.bf16.mxu0 %v3241
    %3867 = vmatpush1.bf16.msra.mxu0 %v3240
    %3868 = vmatprep.subr.bf16.mxu0 %v3257
    %3869 = vmatpush1.bf16.msra.mxu0 %v3256
    %3870 = vmatprep.subr.bf16.mxu0 %v3273
    %3871 = vmatpush1.bf16.msra.mxu0 %v3272
    %3872 = vmatprep.subr.bf16.mxu0 %v3289
    %3873 = vmatpush1.bf16.msra.mxu0 %v3288
    %3874 = vmatprep.subr.bf16.mxu0 %v3305
    %3875 = vmatpush1.bf16.msra.mxu0 %v3304
    %3876 = vmatprep.subr.bf16.mxu0 %v3321
    %3877 = vmatpush1.bf16.msra.mxu0 %v3320
    %3878 = vmatprep.subr.bf16.mxu0 %v3337
    %3879 = vmatpush1.bf16.msra.mxu0 %v3336
    %3880 = vmatprep.mubr.bf16.mxu0 %v1109
    %3881 = vmatmul.mubr.bf16.gmra.mrb[0].mxu0 %v1108
    %v3882 = vpop.f32.mrb[0].mxu0
    %v3883 = vadd.f32 0.0, %v3882
    %v3884 = vpop.f32.mrb[0].mxu0
    %v3885 = vadd.f32 0.0, %v3884
    %v3886 = vpop.f32.mrb[0].mxu0
    %v3887 = vpop.f32.mrb[0].mxu0
    %3888 = vdwg.mxu0
    %3889 = vmatprep.subr.bf16.mxu0 %v3353
    %3890 = vmatpush1.bf16.msra.mxu0 %v3352
    %3891 = vmatprep.subr.bf16.mxu0 %v3369
    %3892 = vmatpush1.bf16.msra.mxu0 %v3368
    %3893 = vmatprep.subr.bf16.mxu0 %v3385
    %3894 = vmatpush1.bf16.msra.mxu0 %v3384
    %3895 = vmatprep.subr.bf16.mxu0 %v3401
    %3896 = vmatpush1.bf16.msra.mxu0 %v3400
    %3897 = vmatprep.subr.bf16.mxu0 %v3417
    %3898 = vmatpush1.bf16.msra.mxu0 %v3416
    %3899 = vmatprep.subr.bf16.mxu0 %v3433
    %3900 = vmatpush1.bf16.msra.mxu0 %v3432
    %3901 = vmatprep.subr.bf16.mxu0 %v3449
    %3902 = vmatpush1.bf16.msra.mxu0 %v3448
    %3903 = vmatprep.subr.bf16.mxu0 %v3465
    %3904 = vmatpush1.bf16.msra.mxu0 %v3464
    %3905 = vmatprep.subr.bf16.mxu0 %v3481
    %3906 = vmatpush1.bf16.msra.mxu0 %v3480
    %3907 = vmatprep.subr.bf16.mxu0 %v3497
    %3908 = vmatpush1.bf16.msra.mxu0 %v3496
    %3909 = vmatprep.subr.bf16.mxu0 %v3513
    %3910 = vmatpush1.bf16.msra.mxu0 %v3512
    %3911 = vmatprep.subr.bf16.mxu0 %v3529
    %3912 = vmatpush1.bf16.msra.mxu0 %v3528
    %3913 = vmatprep.subr.bf16.mxu0 %v3545
    %3914 = vmatpush1.bf16.msra.mxu0 %v3544
    %3915 = vmatprep.subr.bf16.mxu0 %v3561
    %3916 = vmatpush1.bf16.msra.mxu0 %v3560
    %3917 = vmatprep.subr.bf16.mxu0 %v3577
    %3918 = vmatpush1.bf16.msra.mxu0 %v3576
    %3919 = vmatprep.subr.bf16.mxu0 %v3593
    %3920 = vmatpush1.bf16.msra.mxu0 %v3592
    %3921 = vmatprep.mubr.bf16.mxu0 %v1111
    %3922 = vmatmul.mubr.bf16.gmra.mrb[0].mxu0 %v1110
    %v3923 = vpop.f32.mrb[0].mxu0
    %v3924 = vadd.f32 %v3883, %v3923
    %v3925 = vpop.f32.mrb[0].mxu0
    %v3926 = vadd.f32 %v3885, %v3925
    %v3927 = vpop.f32.mrb[0].mxu0
    %v3928 = vpop.f32.mrb[0].mxu0
    %3929 = vdwg.mxu0
    %3930 = vmatprep.subr.bf16.mxu0 %v3099
    %3931 = vmatpush1.bf16.msra.mxu0 %v3098
    %3932 = vmatprep.subr.bf16.mxu0 %v3115
    %3933 = vmatpush1.bf16.msra.mxu0 %v3114
    %3934 = vmatprep.subr.bf16.mxu0 %v3131
    %3935 = vmatpush1.bf16.msra.mxu0 %v3130
    %3936 = vmatprep.subr.bf16.mxu0 %v3147
    %3937 = vmatpush1.bf16.msra.mxu0 %v3146
    %3938 = vmatprep.subr.bf16.mxu0 %v3163
    %3939 = vmatpush1.bf16.msra.mxu0 %v3162
    %3940 = vmatprep.subr.bf16.mxu0 %v3179
    %3941 = vmatpush1.bf16.msra.mxu0 %v3178
    %3942 = vmatprep.subr.bf16.mxu0 %v3195
    %3943 = vmatpush1.bf16.msra.mxu0 %v3194
    %3944 = vmatprep.subr.bf16.mxu0 %v3211
    %3945 = vmatpush1.bf16.msra.mxu0 %v3210
    %3946 = vmatprep.subr.bf16.mxu0 %v3227
    %3947 = vmatpush1.bf16.msra.mxu0 %v3226
    %3948 = vmatprep.subr.bf16.mxu0 %v3243
    %3949 = vmatpush1.bf16.msra.mxu0 %v3242
    %3950 = vmatprep.subr.bf16.mxu0 %v3259
    %3951 = vmatpush1.bf16.msra.mxu0 %v3258
    %3952 = vmatprep.subr.bf16.mxu0 %v3275
    %3953 = vmatpush1.bf16.msra.mxu0 %v3274
    %3954 = vmatprep.subr.bf16.mxu0 %v3291
    %3955 = vmatpush1.bf16.msra.mxu0 %v3290
    %3956 = vmatprep.subr.bf16.mxu0 %v3307
    %3957 = vmatpush1.bf16.msra.mxu0 %v3306
    %3958 = vmatprep.subr.bf16.mxu0 %v3323
    %3959 = vmatpush1.bf16.msra.mxu0 %v3322
    %3960 = vmatprep.subr.bf16.mxu0 %v3339
    %3961 = vmatpush1.bf16.msra.mxu0 %v3338
    %3962 = vmatprep.mubr.bf16.mxu0 %v1109
    %3963 = vmatmul.mubr.bf16.gmra.mrb[0].mxu0 %v1108
    %v3964 = vpop.f32.mrb[0].mxu0
    %v3965 = vadd.f32 0.0, %v3964
    %v3966 = vpop.f32.mrb[0].mxu0
    %v3967 = vadd.f32 0.0, %v3966
    %v3968 = vpop.f32.mrb[0].mxu0
    %v3969 = vpop.f32.mrb[0].mxu0
    %3970 = vdwg.mxu0
    %3971 = vmatprep.subr.bf16.mxu0 %v3355
    %3972 = vmatpush1.bf16.msra.mxu0 %v3354
    %3973 = vmatprep.subr.bf16.mxu0 %v3371
    %3974 = vmatpush1.bf16.msra.mxu0 %v3370
    %3975 = vmatprep.subr.bf16.mxu0 %v3387
    %3976 = vmatpush1.bf16.msra.mxu0 %v3386
    %3977 = vmatprep.subr.bf16.mxu0 %v3403
    %3978 = vmatpush1.bf16.msra.mxu0 %v3402
    %3979 = vmatprep.subr.bf16.mxu0 %v3419
    %3980 = vmatpush1.bf16.msra.mxu0 %v3418
    %3981 = vmatprep.subr.bf16.mxu0 %v3435
    %3982 = vmatpush1.bf16.msra.mxu0 %v3434
    %3983 = vmatprep.subr.bf16.mxu0 %v3451
    %3984 = vmatpush1.bf16.msra.mxu0 %v3450
    %3985 = vmatprep.subr.bf16.mxu0 %v3467
    %3986 = vmatpush1.bf16.msra.mxu0 %v3466
    %3987 = vmatprep.subr.bf16.mxu0 %v3483
    %3988 = vmatpush1.bf16.msra.mxu0 %v3482
    %3989 = vmatprep.subr.bf16.mxu0 %v3499
    %3990 = vmatpush1.bf16.msra.mxu0 %v3498
    %3991 = vmatprep.subr.bf16.mxu0 %v3515
    %3992 = vmatpush1.bf16.msra.mxu0 %v3514
    %3993 = vmatprep.subr.bf16.mxu0 %v3531
    %3994 = vmatpush1.bf16.msra.mxu0 %v3530
    %3995 = vmatprep.subr.bf16.mxu0 %v3547
    %3996 = vmatpush1.bf16.msra.mxu0 %v3546
    %3997 = vmatprep.subr.bf16.mxu0 %v3563
    %3998 = vmatpush1.bf16.msra.mxu0 %v3562
    %3999 = vmatprep.subr.bf16.mxu0 %v3579
    %4000 = vmatpush1.bf16.msra.mxu0 %v3578
    %4001 = vmatprep.subr.bf16.mxu0 %v3595
    %4002 = vmatpush1.bf16.msra.mxu0 %v3594
    %4003 = vmatprep.mubr.bf16.mxu0 %v1111
    %4004 = vmatmul.mubr.bf16.gmra.mrb[0].mxu0 %v1110
    %v4005 = vpop.f32.mrb[0].mxu0
    %v4006 = vadd.f32 %v3965, %v4005
    %v4007 = vpop.f32.mrb[0].mxu0
    %v4008 = vadd.f32 %v3967, %v4007
    %v4009 = vpop.f32.mrb[0].mxu0
    %v4010 = vpop.f32.mrb[0].mxu0
    %4011 = vdwg.mxu0
    %4012 = vmatprep.subr.bf16.mxu0 %v3101
    %4013 = vmatpush1.bf16.msra.mxu0 %v3100
    %4014 = vmatprep.subr.bf16.mxu0 %v3117
    %4015 = vmatpush1.bf16.msra.mxu0 %v3116
    %4016 = vmatprep.subr.bf16.mxu0 %v3133
    %4017 = vmatpush1.bf16.msra.mxu0 %v3132
    %4018 = vmatprep.subr.bf16.mxu0 %v3149
    %4019 = vmatpush1.bf16.msra.mxu0 %v3148
    %4020 = vmatprep.subr.bf16.mxu0 %v3165
    %4021 = vmatpush1.bf16.msra.mxu0 %v3164
    %4022 = vmatprep.subr.bf16.mxu0 %v3181
    %4023 = vmatpush1.bf16.msra.mxu0 %v3180
    %4024 = vmatprep.subr.bf16.mxu0 %v3197
    %4025 = vmatpush1.bf16.msra.mxu0 %v3196
    %4026 = vmatprep.subr.bf16.mxu0 %v3213
    %4027 = vmatpush1.bf16.msra.mxu0 %v3212
    %4028 = vmatprep.subr.bf16.mxu0 %v3229
    %4029 = vmatpush1.bf16.msra.mxu0 %v3228
    %4030 = vmatprep.subr.bf16.mxu0 %v3245
    %4031 = vmatpush1.bf16.msra.mxu0 %v3244
    %4032 = vmatprep.subr.bf16.mxu0 %v3261
    %4033 = vmatpush1.bf16.msra.mxu0 %v3260
    %4034 = vmatprep.subr.bf16.mxu0 %v3277
    %4035 = vmatpush1.bf16.msra.mxu0 %v3276
    %4036 = vmatprep.subr.bf16.mxu0 %v3293
    %4037 = vmatpush1.bf16.msra.mxu0 %v3292
    %4038 = vmatprep.subr.bf16.mxu0 %v3309
    %4039 = vmatpush1.bf16.msra.mxu0 %v3308
    %4040 = vmatprep.subr.bf16.mxu0 %v3325
    %4041 = vmatpush1.bf16.msra.mxu0 %v3324
    %4042 = vmatprep.subr.bf16.mxu0 %v3341
    %4043 = vmatpush1.bf16.msra.mxu0 %v3340
    %4044 = vmatprep.mubr.bf16.mxu0 %v1109
    %4045 = vmatmul.mubr.bf16.gmra.mrb[0].mxu0 %v1108
    %v4046 = vpop.f32.mrb[0].mxu0
    %v4047 = vadd.f32 0.0, %v4046
    %v4048 = vpop.f32.mrb[0].mxu0
    %v4049 = vadd.f32 0.0, %v4048
    %v4050 = vpop.f32.mrb[0].mxu0
    %v4051 = vpop.f32.mrb[0].mxu0
    %4052 = vdwg.mxu0
    %4053 = vmatprep.subr.bf16.mxu0 %v3357
    %4054 = vmatpush1.bf16.msra.mxu0 %v3356
    %4055 = vmatprep.subr.bf16.mxu0 %v3373
    %4056 = vmatpush1.bf16.msra.mxu0 %v3372
    %4057 = vmatprep.subr.bf16.mxu0 %v3389
    %4058 = vmatpush1.bf16.msra.mxu0 %v3388
    %4059 = vmatprep.subr.bf16.mxu0 %v3405
    %4060 = vmatpush1.bf16.msra.mxu0 %v3404
    %4061 = vmatprep.subr.bf16.mxu0 %v3421
    %4062 = vmatpush1.bf16.msra.mxu0 %v3420
    %4063 = vmatprep.subr.bf16.mxu0 %v3437
    %4064 = vmatpush1.bf16.msra.mxu0 %v3436
    %4065 = vmatprep.subr.bf16.mxu0 %v3453
    %4066 = vmatpush1.bf16.msra.mxu0 %v3452
    %4067 = vmatprep.subr.bf16.mxu0 %v3469
    %4068 = vmatpush1.bf16.msra.mxu0 %v3468
    %4069 = vmatprep.subr.bf16.mxu0 %v3485
    %4070 = vmatpush1.bf16.msra.mxu0 %v3484
    %4071 = vmatprep.subr.bf16.mxu0 %v3501
    %4072 = vmatpush1.bf16.msra.mxu0 %v3500
    %4073 = vmatprep.subr.bf16.mxu0 %v3517
    %4074 = vmatpush1.bf16.msra.mxu0 %v3516
    %4075 = vmatprep.subr.bf16.mxu0 %v3533
    %4076 = vmatpush1.bf16.msra.mxu0 %v3532
    %4077 = vmatprep.subr.bf16.mxu0 %v3549
    %4078 = vmatpush1.bf16.msra.mxu0 %v3548
    %4079 = vmatprep.subr.bf16.mxu0 %v3565
    %4080 = vmatpush1.bf16.msra.mxu0 %v3564
    %4081 = vmatprep.subr.bf16.mxu0 %v3581
    %4082 = vmatpush1.bf16.msra.mxu0 %v3580
    %4083 = vmatprep.subr.bf16.mxu0 %v3597
    %4084 = vmatpush1.bf16.msra.mxu0 %v3596
    %4085 = vmatprep.mubr.bf16.mxu0 %v1111
    %4086 = vmatmul.mubr.bf16.gmra.mrb[0].mxu0 %v1110
    %v4087 = vpop.f32.mrb[0].mxu0
    %v4088 = vadd.f32 %v4047, %v4087
    %v4089 = vpop.f32.mrb[0].mxu0
    %v4090 = vadd.f32 %v4049, %v4089
    %v4091 = vpop.f32.mrb[0].mxu0
    %v4092 = vpop.f32.mrb[0].mxu0
    %4093 = vdwg.mxu0
    %4094 = vmatprep.subr.bf16.mxu0 %v3103
    %4095 = vmatpush1.bf16.msra.mxu0 %v3102
    %4096 = vmatprep.subr.bf16.mxu0 %v3119
    %4097 = vmatpush1.bf16.msra.mxu0 %v3118
    %4098 = vmatprep.subr.bf16.mxu0 %v3135
    %4099 = vmatpush1.bf16.msra.mxu0 %v3134
    %4100 = vmatprep.subr.bf16.mxu0 %v3151
    %4101 = vmatpush1.bf16.msra.mxu0 %v3150
    %4102 = vmatprep.subr.bf16.mxu0 %v3167
    %4103 = vmatpush1.bf16.msra.mxu0 %v3166
    %4104 = vmatprep.subr.bf16.mxu0 %v3183
    %4105 = vmatpush1.bf16.msra.mxu0 %v3182
    %4106 = vmatprep.subr.bf16.mxu0 %v3199
    %4107 = vmatpush1.bf16.msra.mxu0 %v3198
    %4108 = vmatprep.subr.bf16.mxu0 %v3215
    %4109 = vmatpush1.bf16.msra.mxu0 %v3214
    %4110 = vmatprep.subr.bf16.mxu0 %v3231
    %4111 = vmatpush1.bf16.msra.mxu0 %v3230
    %4112 = vmatprep.subr.bf16.mxu0 %v3247
    %4113 = vmatpush1.bf16.msra.mxu0 %v3246
    %4114 = vmatprep.subr.bf16.mxu0 %v3263
    %4115 = vmatpush1.bf16.msra.mxu0 %v3262
    %4116 = vmatprep.subr.bf16.mxu0 %v3279
    %4117 = vmatpush1.bf16.msra.mxu0 %v3278
    %4118 = vmatprep.subr.bf16.mxu0 %v3295
    %4119 = vmatpush1.bf16.msra.mxu0 %v3294
    %4120 = vmatprep.subr.bf16.mxu0 %v3311
    %4121 = vmatpush1.bf16.msra.mxu0 %v3310
    %4122 = vmatprep.subr.bf16.mxu0 %v3327
    %4123 = vmatpush1.bf16.msra.mxu0 %v3326
    %4124 = vmatprep.subr.bf16.mxu0 %v3343
    %4125 = vmatpush1.bf16.msra.mxu0 %v3342
    %4126 = vmatprep.mubr.bf16.mxu0 %v1109
    %4127 = vmatmul.mubr.bf16.gmra.mrb[0].mxu0 %v1108
    %v4128 = vpop.f32.mrb[0].mxu0
    %v4129 = vadd.f32 0.0, %v4128
    %v4130 = vpop.f32.mrb[0].mxu0
    %v4131 = vadd.f32 0.0, %v4130
    %v4132 = vpop.f32.mrb[0].mxu0
    %v4133 = vpop.f32.mrb[0].mxu0
    %4134 = vdwg.mxu0
    %4135 = vmatprep.subr.bf16.mxu0 %v3359
    %4136 = vmatpush1.bf16.msra.mxu0 %v3358
    %4137 = vmatprep.subr.bf16.mxu0 %v3375
    %4138 = vmatpush1.bf16.msra.mxu0 %v3374
    %4139 = vmatprep.subr.bf16.mxu0 %v3391
    %4140 = vmatpush1.bf16.msra.mxu0 %v3390
    %4141 = vmatprep.subr.bf16.mxu0 %v3407
    %4142 = vmatpush1.bf16.msra.mxu0 %v3406
    %4143 = vmatprep.subr.bf16.mxu0 %v3423
    %4144 = vmatpush1.bf16.msra.mxu0 %v3422
    %4145 = vmatprep.subr.bf16.mxu0 %v3439
    %4146 = vmatpush1.bf16.msra.mxu0 %v3438
    %4147 = vmatprep.subr.bf16.mxu0 %v3455
    %4148 = vmatpush1.bf16.msra.mxu0 %v3454
    %4149 = vmatprep.subr.bf16.mxu0 %v3471
    %4150 = vmatpush1.bf16.msra.mxu0 %v3470
    %4151 = vmatprep.subr.bf16.mxu0 %v3487
    %4152 = vmatpush1.bf16.msra.mxu0 %v3486
    %4153 = vmatprep.subr.bf16.mxu0 %v3503
    %4154 = vmatpush1.bf16.msra.mxu0 %v3502
    %4155 = vmatprep.subr.bf16.mxu0 %v3519
    %4156 = vmatpush1.bf16.msra.mxu0 %v3518
    %4157 = vmatprep.subr.bf16.mxu0 %v3535
    %4158 = vmatpush1.bf16.msra.mxu0 %v3534
    %4159 = vmatprep.subr.bf16.mxu0 %v3551
    %4160 = vmatpush1.bf16.msra.mxu0 %v3550
    %4161 = vmatprep.subr.bf16.mxu0 %v3567
    %4162 = vmatpush1.bf16.msra.mxu0 %v3566
    %4163 = vmatprep.subr.bf16.mxu0 %v3583
    %4164 = vmatpush1.bf16.msra.mxu0 %v3582
    %4165 = vmatprep.subr.bf16.mxu0 %v3599
    %4166 = vmatpush1.bf16.msra.mxu0 %v3598
    %4167 = vmatprep.mubr.bf16.mxu0 %v1111
    %4168 = vmatmul.mubr.bf16.gmra.mrb[0].mxu0 %v1110
    %v4169 = vpop.f32.mrb[0].mxu0
    %v4170 = vadd.f32 %v4129, %v4169
    %v4171 = vpop.f32.mrb[0].mxu0
    %v4172 = vadd.f32 %v4131, %v4171
    %v4173 = vpop.f32.mrb[0].mxu0
    %v4174 = vpop.f32.mrb[0].mxu0
    %4175 = vdwg.mxu0
    %4176 = vmatprep.subr.bf16.mxu0 %v3105
    %4177 = vmatpush1.bf16.msra.mxu0 %v3104
    %4178 = vmatprep.subr.bf16.mxu0 %v3121
    %4179 = vmatpush1.bf16.msra.mxu0 %v3120
    %4180 = vmatprep.subr.bf16.mxu0 %v3137
    %4181 = vmatpush1.bf16.msra.mxu0 %v3136
    %4182 = vmatprep.subr.bf16.mxu0 %v3153
    %4183 = vmatpush1.bf16.msra.mxu0 %v3152
    %4184 = vmatprep.subr.bf16.mxu0 %v3169
    %4185 = vmatpush1.bf16.msra.mxu0 %v3168
    %4186 = vmatprep.subr.bf16.mxu0 %v3185
    %4187 = vmatpush1.bf16.msra.mxu0 %v3184
    %4188 = vmatprep.subr.bf16.mxu0 %v3201
    %4189 = vmatpush1.bf16.msra.mxu0 %v3200
    %4190 = vmatprep.subr.bf16.mxu0 %v3217
    %4191 = vmatpush1.bf16.msra.mxu0 %v3216
    %4192 = vmatprep.subr.bf16.mxu0 %v3233
    %4193 = vmatpush1.bf16.msra.mxu0 %v3232
    %4194 = vmatprep.subr.bf16.mxu0 %v3249
    %4195 = vmatpush1.bf16.msra.mxu0 %v3248
    %4196 = vmatprep.subr.bf16.mxu0 %v3265
    %4197 = vmatpush1.bf16.msra.mxu0 %v3264
    %4198 = vmatprep.subr.bf16.mxu0 %v3281
    %4199 = vmatpush1.bf16.msra.mxu0 %v3280
    %4200 = vmatprep.subr.bf16.mxu0 %v3297
    %4201 = vmatpush1.bf16.msra.mxu0 %v3296
    %4202 = vmatprep.subr.bf16.mxu0 %v3313
    %4203 = vmatpush1.bf16.msra.mxu0 %v3312
    %4204 = vmatprep.subr.bf16.mxu0 %v3329
    %4205 = vmatpush1.bf16.msra.mxu0 %v3328
    %4206 = vmatprep.subr.bf16.mxu0 %v3345
    %4207 = vmatpush1.bf16.msra.mxu0 %v3344
    %4208 = vmatprep.mubr.bf16.mxu0 %v1109
    %4209 = vmatmul.mubr.bf16.gmra.mrb[0].mxu0 %v1108
    %v4210 = vpop.f32.mrb[0].mxu0
    %v4211 = vadd.f32 0.0, %v4210
    %v4212 = vpop.f32.mrb[0].mxu0
    %v4213 = vadd.f32 0.0, %v4212
    %v4214 = vpop.f32.mrb[0].mxu0
    %v4215 = vpop.f32.mrb[0].mxu0
    %4216 = vdwg.mxu0
    %4217 = vmatprep.subr.bf16.mxu0 %v3361
    %4218 = vmatpush1.bf16.msra.mxu0 %v3360
    %4219 = vmatprep.subr.bf16.mxu0 %v3377
    %4220 = vmatpush1.bf16.msra.mxu0 %v3376
    %4221 = vmatprep.subr.bf16.mxu0 %v3393
    %4222 = vmatpush1.bf16.msra.mxu0 %v3392
    %4223 = vmatprep.subr.bf16.mxu0 %v3409
    %4224 = vmatpush1.bf16.msra.mxu0 %v3408
    %4225 = vmatprep.subr.bf16.mxu0 %v3425
    %4226 = vmatpush1.bf16.msra.mxu0 %v3424
    %4227 = vmatprep.subr.bf16.mxu0 %v3441
    %4228 = vmatpush1.bf16.msra.mxu0 %v3440
    %4229 = vmatprep.subr.bf16.mxu0 %v3457
    %4230 = vmatpush1.bf16.msra.mxu0 %v3456
    %4231 = vmatprep.subr.bf16.mxu0 %v3473
    %4232 = vmatpush1.bf16.msra.mxu0 %v3472
    %4233 = vmatprep.subr.bf16.mxu0 %v3489
    %4234 = vmatpush1.bf16.msra.mxu0 %v3488
    %4235 = vmatprep.subr.bf16.mxu0 %v3505
    %4236 = vmatpush1.bf16.msra.mxu0 %v3504
    %4237 = vmatprep.subr.bf16.mxu0 %v3521
    %4238 = vmatpush1.bf16.msra.mxu0 %v3520
    %4239 = vmatprep.subr.bf16.mxu0 %v3537
    %4240 = vmatpush1.bf16.msra.mxu0 %v3536
    %4241 = vmatprep.subr.bf16.mxu0 %v3553
    %4242 = vmatpush1.bf16.msra.mxu0 %v3552
    %4243 = vmatprep.subr.bf16.mxu0 %v3569
    %4244 = vmatpush1.bf16.msra.mxu0 %v3568
    %4245 = vmatprep.subr.bf16.mxu0 %v3585
    %4246 = vmatpush1.bf16.msra.mxu0 %v3584
    %4247 = vmatprep.subr.bf16.mxu0 %v3601
    %4248 = vmatpush1.bf16.msra.mxu0 %v3600
    %4249 = vmatprep.mubr.bf16.mxu0 %v1111
    %4250 = vmatmul.mubr.bf16.gmra.mrb[0].mxu0 %v1110
    %v4251 = vpop.f32.mrb[0].mxu0
    %v4252 = vadd.f32 %v4211, %v4251
    %v4253 = vpop.f32.mrb[0].mxu0
    %v4254 = vadd.f32 %v4213, %v4253
    %v4255 = vpop.f32.mrb[0].mxu0
    %v4256 = vpop.f32.mrb[0].mxu0
    %4257 = vdwg.mxu0
    %v4258 = vld [vmem:[%s8] sm:$0xff]
    %v4259 = vld [vmem:[%s8 + $0x8] sm:$0xff]
    %v4262 = vlaneseq
    %v4263 = vshrl.u32 %v4262, 7
    %v4264 = vsub.s32 0, %v4263
    %v4265 = vrot.slane %v4258, %v4264
    %v4266 = vlaneseq
    %v4267 = vshrl.u32 %v4266, 7
    %v4268 = vsub.s32 1, %v4267
    %v4269 = vrot.slane %v4258, %v4268
    %v4270 = vlaneseq
    %v4271 = vshrl.u32 %v4270, 7
    %v4272 = vsub.s32 2, %v4271
    %v4273 = vrot.slane %v4258, %v4272
    %v4274 = vlaneseq
    %v4275 = vshrl.u32 %v4274, 7
    %v4276 = vsub.s32 3, %v4275
    %v4277 = vrot.slane %v4258, %v4276
    %v4278 = vlaneseq
    %v4279 = vshrl.u32 %v4278, 7
    %v4280 = vsub.s32 4, %v4279
    %v4281 = vrot.slane %v4258, %v4280
    %v4282 = vlaneseq
    %v4283 = vshrl.u32 %v4282, 7
    %v4284 = vsub.s32 5, %v4283
    %v4285 = vrot.slane %v4258, %v4284
    %v4286 = vlaneseq
    %v4287 = vshrl.u32 %v4286, 7
    %v4288 = vsub.s32 6, %v4287
    %v4289 = vrot.slane %v4258, %v4288
    %v4290 = vlaneseq
    %v4291 = vshrl.u32 %v4290, 7
    %v4292 = vsub.s32 7, %v4291
    %v4293 = vrot.slane %v4258, %v4292
    %v4294 = vlaneseq
    %v4295 = vshrl.u32 %v4294, 7
    %v4296 = vsub.s32 0, %v4295
    %v4297 = vrot.slane %v4259, %v4296
    %v4298 = vlaneseq
    %v4299 = vshrl.u32 %v4298, 7
    %v4300 = vsub.s32 1, %v4299
    %v4301 = vrot.slane %v4259, %v4300
    %v4302 = vlaneseq
    %v4303 = vshrl.u32 %v4302, 7
    %v4304 = vsub.s32 2, %v4303
    %v4305 = vrot.slane %v4259, %v4304
    %v4306 = vlaneseq
    %v4307 = vshrl.u32 %v4306, 7
    %v4308 = vsub.s32 3, %v4307
    %v4309 = vrot.slane %v4259, %v4308
    %v4310 = vlaneseq
    %v4311 = vshrl.u32 %v4310, 7
    %v4312 = vsub.s32 4, %v4311
    %v4313 = vrot.slane %v4259, %v4312
    %v4314 = vlaneseq
    %v4315 = vshrl.u32 %v4314, 7
    %v4316 = vsub.s32 5, %v4315
    %v4317 = vrot.slane %v4259, %v4316
    %v4318 = vlaneseq
    %v4319 = vshrl.u32 %v4318, 7
    %v4320 = vsub.s32 6, %v4319
    %v4321 = vrot.slane %v4259, %v4320
    %v4322 = vlaneseq
    %v4323 = vshrl.u32 %v4322, 7
    %v4324 = vsub.s32 7, %v4323
    %v4325 = vrot.slane %v4259, %v4324
    %v4342 = vmul.f32 %v3678, %v4265
    %v4343 = vmul.f32 %v3680, %v4269
    %v4344 = vmul.f32 %v3760, %v4273
    %v4345 = vmul.f32 %v3762, %v4277
    %v4346 = vmul.f32 %v3842, %v4281
    %v4347 = vmul.f32 %v3844, %v4285
    %v4348 = vmul.f32 %v3924, %v4289
    %v4349 = vmul.f32 %v3926, %v4293
    %v4350 = vmul.f32 %v4006, %v4297
    %v4351 = vmul.f32 %v4008, %v4301
    %v4352 = vmul.f32 %v4088, %v4305
    %v4353 = vmul.f32 %v4090, %v4309
    %v4354 = vmul.f32 %v4170, %v4313
    %v4355 = vmul.f32 %v4172, %v4317
    %v4356 = vmul.f32 %v4252, %v4321
    %v4357 = vmul.f32 %v4254, %v4325
    %v4358 = vld [vmem:[%s9] sm:$0xff]
    %v4359 = vld [vmem:[%s9 + $0x8] sm:$0xff]
    %v4362 = vlaneseq
    %v4363 = vshrl.u32 %v4362, 7
    %v4364 = vsub.s32 0, %v4363
    %v4365 = vrot.slane %v4358, %v4364
    %v4366 = vlaneseq
    %v4367 = vshrl.u32 %v4366, 7
    %v4368 = vsub.s32 1, %v4367
    %v4369 = vrot.slane %v4358, %v4368
    %v4370 = vlaneseq
    %v4371 = vshrl.u32 %v4370, 7
    %v4372 = vsub.s32 2, %v4371
    %v4373 = vrot.slane %v4358, %v4372
    %v4374 = vlaneseq
    %v4375 = vshrl.u32 %v4374, 7
    %v4376 = vsub.s32 3, %v4375
    %v4377 = vrot.slane %v4358, %v4376
    %v4378 = vlaneseq
    %v4379 = vshrl.u32 %v4378, 7
    %v4380 = vsub.s32 4, %v4379
    %v4381 = vrot.slane %v4358, %v4380
    %v4382 = vlaneseq
    %v4383 = vshrl.u32 %v4382, 7
    %v4384 = vsub.s32 5, %v4383
    %v4385 = vrot.slane %v4358, %v4384
    %v4386 = vlaneseq
    %v4387 = vshrl.u32 %v4386, 7
    %v4388 = vsub.s32 6, %v4387
    %v4389 = vrot.slane %v4358, %v4388
    %v4390 = vlaneseq
    %v4391 = vshrl.u32 %v4390, 7
    %v4392 = vsub.s32 7, %v4391
    %v4393 = vrot.slane %v4358, %v4392
    %v4394 = vlaneseq
    %v4395 = vshrl.u32 %v4394, 7
    %v4396 = vsub.s32 0, %v4395
    %v4397 = vrot.slane %v4359, %v4396
    %v4398 = vlaneseq
    %v4399 = vshrl.u32 %v4398, 7
    %v4400 = vsub.s32 1, %v4399
    %v4401 = vrot.slane %v4359, %v4400
    %v4402 = vlaneseq
    %v4403 = vshrl.u32 %v4402, 7
    %v4404 = vsub.s32 2, %v4403
    %v4405 = vrot.slane %v4359, %v4404
    %v4406 = vlaneseq
    %v4407 = vshrl.u32 %v4406, 7
    %v4408 = vsub.s32 3, %v4407
    %v4409 = vrot.slane %v4359, %v4408
    %v4410 = vlaneseq
    %v4411 = vshrl.u32 %v4410, 7
    %v4412 = vsub.s32 4, %v4411
    %v4413 = vrot.slane %v4359, %v4412
    %v4414 = vlaneseq
    %v4415 = vshrl.u32 %v4414, 7
    %v4416 = vsub.s32 5, %v4415
    %v4417 = vrot.slane %v4359, %v4416
    %v4418 = vlaneseq
    %v4419 = vshrl.u32 %v4418, 7
    %v4420 = vsub.s32 6, %v4419
    %v4421 = vrot.slane %v4359, %v4420
    %v4422 = vlaneseq
    %v4423 = vshrl.u32 %v4422, 7
    %v4424 = vsub.s32 7, %v4423
    %v4425 = vrot.slane %v4359, %v4424
    %v4442 = vadd.f32 %v4342, %v4365
    %v4443 = vadd.f32 %v4343, %v4369
    %v4444 = vadd.f32 %v4344, %v4373
    %v4445 = vadd.f32 %v4345, %v4377
    %v4446 = vadd.f32 %v4346, %v4381
    %v4447 = vadd.f32 %v4347, %v4385
    %v4448 = vadd.f32 %v4348, %v4389
    %v4449 = vadd.f32 %v4349, %v4393
    %v4450 = vadd.f32 %v4350, %v4397
    %v4451 = vadd.f32 %v4351, %v4401
    %v4452 = vadd.f32 %v4352, %v4405
    %v4453 = vadd.f32 %v4353, %v4409
    %v4454 = vadd.f32 %v4354, %v4413
    %v4455 = vadd.f32 %v4355, %v4417
    %v4456 = vadd.f32 %v4356, %v4421
    %v4457 = vadd.f32 %v4357, %v4425
    %4459 = vset.pattern.permute.xlu0 0
    %4460 = vperm.xlu0 %4459, %v2827
    %v4461 = vpop.permute.xlu0 %4460
    %4464 = vset.pattern.permute.xlu0 0
    %4465 = vperm.xlu0 %4464, %v2828
    %v4466 = vpop.permute.xlu0 %4465
    %v4468 = vmul.f32 %v4461, %v154
    %v4469 = vmul.f32 %v4461, %v155
    %v4470 = vmul.f32 %v4461, %v156
    %v4471 = vmul.f32 %v4461, %v157
    %v4472 = vmul.f32 %v4461, %v158
    %v4473 = vmul.f32 %v4461, %v159
    %v4474 = vmul.f32 %v4461, %v160
    %v4475 = vmul.f32 %v4461, %v161
    %v4476 = vmul.f32 %v4461, %v162
    %v4477 = vmul.f32 %v4461, %v163
    %v4478 = vmul.f32 %v4461, %v164
    %v4479 = vmul.f32 %v4461, %v165
    %v4480 = vmul.f32 %v4461, %v166
    %v4481 = vmul.f32 %v4461, %v167
    %v4482 = vmul.f32 %v4461, %v168
    %v4483 = vmul.f32 %v4461, %v169
    %v4484 = vmul.f32 %v4466, %v170
    %v4485 = vmul.f32 %v4466, %v171
    %v4486 = vmul.f32 %v4466, %v172
    %v4487 = vmul.f32 %v4466, %v173
    %v4488 = vmul.f32 %v4466, %v174
    %v4489 = vmul.f32 %v4466, %v175
    %v4490 = vmul.f32 %v4466, %v176
    %v4491 = vmul.f32 %v4466, %v177
    %v4492 = vmul.f32 %v4466, %v178
    %v4493 = vmul.f32 %v4466, %v179
    %v4494 = vmul.f32 %v4466, %v180
    %v4495 = vmul.f32 %v4466, %v181
    %v4496 = vmul.f32 %v4466, %v182
    %v4497 = vmul.f32 %v4466, %v183
    %v4498 = vmul.f32 %v4466, %v184
    %v4499 = vmul.f32 %v4466, %v185
    %v4500 = vrot.slane %v4468, 4
    %v4501 = vadd.f32 %v4468, %v4500
    %v4502 = vrot.slane %v4501, 2
    %v4503 = vadd.f32 %v4501, %v4502
    %v4504 = vrot.slane %v4503, 1
    %v4505 = vadd.f32 %v4503, %v4504
    %v4506 = vrot.slane %v4469, 4
    %v4507 = vadd.f32 %v4469, %v4506
    %v4508 = vrot.slane %v4507, 2
    %v4509 = vadd.f32 %v4507, %v4508
    %v4510 = vrot.slane %v4509, 1
    %v4511 = vadd.f32 %v4509, %v4510
    %v4512 = vrot.slane %v4470, 4
    %v4513 = vadd.f32 %v4470, %v4512
    %v4514 = vrot.slane %v4513, 2
    %v4515 = vadd.f32 %v4513, %v4514
    %v4516 = vrot.slane %v4515, 1
    %v4517 = vadd.f32 %v4515, %v4516
    %v4518 = vrot.slane %v4471, 4
    %v4519 = vadd.f32 %v4471, %v4518
    %v4520 = vrot.slane %v4519, 2
    %v4521 = vadd.f32 %v4519, %v4520
    %v4522 = vrot.slane %v4521, 1
    %v4523 = vadd.f32 %v4521, %v4522
    %v4524 = vrot.slane %v4472, 4
    %v4525 = vadd.f32 %v4472, %v4524
    %v4526 = vrot.slane %v4525, 2
    %v4527 = vadd.f32 %v4525, %v4526
    %v4528 = vrot.slane %v4527, 1
    %v4529 = vadd.f32 %v4527, %v4528
    %v4530 = vrot.slane %v4473, 4
    %v4531 = vadd.f32 %v4473, %v4530
    %v4532 = vrot.slane %v4531, 2
    %v4533 = vadd.f32 %v4531, %v4532
    %v4534 = vrot.slane %v4533, 1
    %v4535 = vadd.f32 %v4533, %v4534
    %v4536 = vrot.slane %v4474, 4
    %v4537 = vadd.f32 %v4474, %v4536
    %v4538 = vrot.slane %v4537, 2
    %v4539 = vadd.f32 %v4537, %v4538
    %v4540 = vrot.slane %v4539, 1
    %v4541 = vadd.f32 %v4539, %v4540
    %v4542 = vrot.slane %v4475, 4
    %v4543 = vadd.f32 %v4475, %v4542
    %v4544 = vrot.slane %v4543, 2
    %v4545 = vadd.f32 %v4543, %v4544
    %v4546 = vrot.slane %v4545, 1
    %v4547 = vadd.f32 %v4545, %v4546
    %v4548 = vrot.slane %v4476, 4
    %v4549 = vadd.f32 %v4476, %v4548
    %v4550 = vrot.slane %v4549, 2
    %v4551 = vadd.f32 %v4549, %v4550
    %v4552 = vrot.slane %v4551, 1
    %v4553 = vadd.f32 %v4551, %v4552
    %v4554 = vrot.slane %v4477, 4
    %v4555 = vadd.f32 %v4477, %v4554
    %v4556 = vrot.slane %v4555, 2
    %v4557 = vadd.f32 %v4555, %v4556
    %v4558 = vrot.slane %v4557, 1
    %v4559 = vadd.f32 %v4557, %v4558
    %v4560 = vrot.slane %v4478, 4
    %v4561 = vadd.f32 %v4478, %v4560
    %v4562 = vrot.slane %v4561, 2
    %v4563 = vadd.f32 %v4561, %v4562
    %v4564 = vrot.slane %v4563, 1
    %v4565 = vadd.f32 %v4563, %v4564
    %v4566 = vrot.slane %v4479, 4
    %v4567 = vadd.f32 %v4479, %v4566
    %v4568 = vrot.slane %v4567, 2
    %v4569 = vadd.f32 %v4567, %v4568
    %v4570 = vrot.slane %v4569, 1
    %v4571 = vadd.f32 %v4569, %v4570
    %v4572 = vrot.slane %v4480, 4
    %v4573 = vadd.f32 %v4480, %v4572
    %v4574 = vrot.slane %v4573, 2
    %v4575 = vadd.f32 %v4573, %v4574
    %v4576 = vrot.slane %v4575, 1
    %v4577 = vadd.f32 %v4575, %v4576
    %v4578 = vrot.slane %v4481, 4
    %v4579 = vadd.f32 %v4481, %v4578
    %v4580 = vrot.slane %v4579, 2
    %v4581 = vadd.f32 %v4579, %v4580
    %v4582 = vrot.slane %v4581, 1
    %v4583 = vadd.f32 %v4581, %v4582
    %v4584 = vrot.slane %v4482, 4
    %v4585 = vadd.f32 %v4482, %v4584
    %v4586 = vrot.slane %v4585, 2
    %v4587 = vadd.f32 %v4585, %v4586
    %v4588 = vrot.slane %v4587, 1
    %v4589 = vadd.f32 %v4587, %v4588
    %v4590 = vrot.slane %v4483, 4
    %v4591 = vadd.f32 %v4483, %v4590
    %v4592 = vrot.slane %v4591, 2
    %v4593 = vadd.f32 %v4591, %v4592
    %v4594 = vrot.slane %v4593, 1
    %v4595 = vadd.f32 %v4593, %v4594
    %v4596 = vrot.slane %v4484, 4
    %v4597 = vadd.f32 %v4484, %v4596
    %v4598 = vrot.slane %v4597, 2
    %v4599 = vadd.f32 %v4597, %v4598
    %v4600 = vrot.slane %v4599, 1
    %v4601 = vadd.f32 %v4599, %v4600
    %v4602 = vrot.slane %v4485, 4
    %v4603 = vadd.f32 %v4485, %v4602
    %v4604 = vrot.slane %v4603, 2
    %v4605 = vadd.f32 %v4603, %v4604
    %v4606 = vrot.slane %v4605, 1
    %v4607 = vadd.f32 %v4605, %v4606
    %v4608 = vrot.slane %v4486, 4
    %v4609 = vadd.f32 %v4486, %v4608
    %v4610 = vrot.slane %v4609, 2
    %v4611 = vadd.f32 %v4609, %v4610
    %v4612 = vrot.slane %v4611, 1
    %v4613 = vadd.f32 %v4611, %v4612
    %v4614 = vrot.slane %v4487, 4
    %v4615 = vadd.f32 %v4487, %v4614
    %v4616 = vrot.slane %v4615, 2
    %v4617 = vadd.f32 %v4615, %v4616
    %v4618 = vrot.slane %v4617, 1
    %v4619 = vadd.f32 %v4617, %v4618
    %v4620 = vrot.slane %v4488, 4
    %v4621 = vadd.f32 %v4488, %v4620
    %v4622 = vrot.slane %v4621, 2
    %v4623 = vadd.f32 %v4621, %v4622
    %v4624 = vrot.slane %v4623, 1
    %v4625 = vadd.f32 %v4623, %v4624
    %v4626 = vrot.slane %v4489, 4
    %v4627 = vadd.f32 %v4489, %v4626
    %v4628 = vrot.slane %v4627, 2
    %v4629 = vadd.f32 %v4627, %v4628
    %v4630 = vrot.slane %v4629, 1
    %v4631 = vadd.f32 %v4629, %v4630
    %v4632 = vrot.slane %v4490, 4
    %v4633 = vadd.f32 %v4490, %v4632
    %v4634 = vrot.slane %v4633, 2
    %v4635 = vadd.f32 %v4633, %v4634
    %v4636 = vrot.slane %v4635, 1
    %v4637 = vadd.f32 %v4635, %v4636
    %v4638 = vrot.slane %v4491, 4
    %v4639 = vadd.f32 %v4491, %v4638
    %v4640 = vrot.slane %v4639, 2
    %v4641 = vadd.f32 %v4639, %v4640
    %v4642 = vrot.slane %v4641, 1
    %v4643 = vadd.f32 %v4641, %v4642
    %v4644 = vrot.slane %v4492, 4
    %v4645 = vadd.f32 %v4492, %v4644
    %v4646 = vrot.slane %v4645, 2
    %v4647 = vadd.f32 %v4645, %v4646
    %v4648 = vrot.slane %v4647, 1
    %v4649 = vadd.f32 %v4647, %v4648
    %v4650 = vrot.slane %v4493, 4
    %v4651 = vadd.f32 %v4493, %v4650
    %v4652 = vrot.slane %v4651, 2
    %v4653 = vadd.f32 %v4651, %v4652
    %v4654 = vrot.slane %v4653, 1
    %v4655 = vadd.f32 %v4653, %v4654
    %v4656 = vrot.slane %v4494, 4
    %v4657 = vadd.f32 %v4494, %v4656
    %v4658 = vrot.slane %v4657, 2
    %v4659 = vadd.f32 %v4657, %v4658
    %v4660 = vrot.slane %v4659, 1
    %v4661 = vadd.f32 %v4659, %v4660
    %v4662 = vrot.slane %v4495, 4
    %v4663 = vadd.f32 %v4495, %v4662
    %v4664 = vrot.slane %v4663, 2
    %v4665 = vadd.f32 %v4663, %v4664
    %v4666 = vrot.slane %v4665, 1
    %v4667 = vadd.f32 %v4665, %v4666
    %v4668 = vrot.slane %v4496, 4
    %v4669 = vadd.f32 %v4496, %v4668
    %v4670 = vrot.slane %v4669, 2
    %v4671 = vadd.f32 %v4669, %v4670
    %v4672 = vrot.slane %v4671, 1
    %v4673 = vadd.f32 %v4671, %v4672
    %v4674 = vrot.slane %v4497, 4
    %v4675 = vadd.f32 %v4497, %v4674
    %v4676 = vrot.slane %v4675, 2
    %v4677 = vadd.f32 %v4675, %v4676
    %v4678 = vrot.slane %v4677, 1
    %v4679 = vadd.f32 %v4677, %v4678
    %v4680 = vrot.slane %v4498, 4
    %v4681 = vadd.f32 %v4498, %v4680
    %v4682 = vrot.slane %v4681, 2
    %v4683 = vadd.f32 %v4681, %v4682
    %v4684 = vrot.slane %v4683, 1
    %v4685 = vadd.f32 %v4683, %v4684
    %v4686 = vrot.slane %v4499, 4
    %v4687 = vadd.f32 %v4499, %v4686
    %v4688 = vrot.slane %v4687, 2
    %v4689 = vadd.f32 %v4687, %v4688
    %v4690 = vrot.slane %v4689, 1
    %v4691 = vadd.f32 %v4689, %v4690
    %v4692 = vmul.f32 %v2829, %v4442
    %v4693 = vmul.f32 %v2829, %v4443
    %v4694 = vmul.f32 %v2829, %v4444
    %v4695 = vmul.f32 %v2829, %v4445
    %v4696 = vmul.f32 %v2829, %v4446
    %v4697 = vmul.f32 %v2829, %v4447
    %v4698 = vmul.f32 %v2829, %v4448
    %v4699 = vmul.f32 %v2829, %v4449
    %v4700 = vmul.f32 %v2829, %v4450
    %v4701 = vmul.f32 %v2829, %v4451
    %v4702 = vmul.f32 %v2829, %v4452
    %v4703 = vmul.f32 %v2829, %v4453
    %v4704 = vmul.f32 %v2829, %v4454
    %v4705 = vmul.f32 %v2829, %v4455
    %v4706 = vmul.f32 %v2829, %v4456
    %v4707 = vmul.f32 %v2829, %v4457
    %v4724 = vrot.slane %v4692, 1
    %v4725 = vrot.slane %v4693, 1
    %v4726 = vrot.slane %v4694, 1
    %v4727 = vrot.slane %v4695, 1
    %v4728 = vrot.slane %v4696, 1
    %v4729 = vrot.slane %v4697, 1
    %v4730 = vrot.slane %v4698, 1
    %v4731 = vrot.slane %v4699, 1
    %v4732 = vrot.slane %v4700, 1
    %v4733 = vrot.slane %v4701, 1
    %v4734 = vrot.slane %v4702, 1
    %v4735 = vrot.slane %v4703, 1
    %v4736 = vrot.slane %v4704, 1
    %v4737 = vrot.slane %v4705, 1
    %v4738 = vrot.slane %v4706, 1
    %v4739 = vrot.slane %v4707, 1
    %v4772 = vadd.f32 %v4505, %v4692
    %v4773 = vadd.f32 %v4511, %v4693
    %v4774 = vadd.f32 %v4517, %v4694
    %v4775 = vadd.f32 %v4523, %v4695
    %v4776 = vadd.f32 %v4529, %v4696
    %v4777 = vadd.f32 %v4535, %v4697
    %v4778 = vadd.f32 %v4541, %v4698
    %v4779 = vadd.f32 %v4547, %v4699
    %v4780 = vadd.f32 %v4553, %v4700
    %v4781 = vadd.f32 %v4559, %v4701
    %v4782 = vadd.f32 %v4565, %v4702
    %v4783 = vadd.f32 %v4571, %v4703
    %v4784 = vadd.f32 %v4577, %v4704
    %v4785 = vadd.f32 %v4583, %v4705
    %v4786 = vadd.f32 %v4589, %v4706
    %v4787 = vadd.f32 %v4595, %v4707
    %v4788 = vadd.f32 %v4601, %v4724
    %v4789 = vadd.f32 %v4607, %v4725
    %v4790 = vadd.f32 %v4613, %v4726
    %v4791 = vadd.f32 %v4619, %v4727
    %v4792 = vadd.f32 %v4625, %v4728
    %v4793 = vadd.f32 %v4631, %v4729
    %v4794 = vadd.f32 %v4637, %v4730
    %v4795 = vadd.f32 %v4643, %v4731
    %v4796 = vadd.f32 %v4649, %v4732
    %v4797 = vadd.f32 %v4655, %v4733
    %v4798 = vadd.f32 %v4661, %v4734
    %v4799 = vadd.f32 %v4667, %v4735
    %v4800 = vadd.f32 %v4673, %v4736
    %v4801 = vadd.f32 %v4679, %v4737
    %v4802 = vadd.f32 %v4685, %v4738
    %v4803 = vadd.f32 %v4691, %v4739
    %v4836 = vcombine.low %v4772, %v4773
    %v4837 = vcombine.low %v4774, %v4775
    %v4839 = vunpack.c.l.s4 1983009808
    %v4840 = vunpack.c.0.s8 %v4839
    %v4841 = vlaneseq
    %v4842 = vshrl.u32 %v4841, 7
    %v4843 = vsub.s32 %v4840, %v4842
    %v4844 = vrot.slane %v4836, %v4843
    %v4846 = vunpack.c.l.s4 1983009808
    %v4847 = vunpack.c.0.s8 %v4846
    %v4848 = vlaneseq
    %v4849 = vshrl.u32 %v4848, 7
    %v4850 = vsub.s32 %v4847, %v4849
    %v4851 = vrot.slane %v4837, %v4850
    %v4852 = vcombine.low %v4844, %v4851
    %v4853 = vcombine.low %v4776, %v4777
    %v4854 = vcombine.low %v4778, %v4779
    %v4856 = vunpack.c.l.s4 1983009808
    %v4857 = vunpack.c.0.s8 %v4856
    %v4858 = vlaneseq
    %v4859 = vshrl.u32 %v4858, 7
    %v4860 = vsub.s32 %v4857, %v4859
    %v4861 = vrot.slane %v4853, %v4860
    %v4863 = vunpack.c.l.s4 1983009808
    %v4864 = vunpack.c.0.s8 %v4863
    %v4865 = vlaneseq
    %v4866 = vshrl.u32 %v4865, 7
    %v4867 = vsub.s32 %v4864, %v4866
    %v4868 = vrot.slane %v4854, %v4867
    %v4869 = vcombine.low %v4861, %v4868
    %v4870 = vcombine.low %v4780, %v4781
    %v4871 = vcombine.low %v4782, %v4783
    %v4873 = vunpack.c.l.s4 1983009808
    %v4874 = vunpack.c.0.s8 %v4873
    %v4875 = vlaneseq
    %v4876 = vshrl.u32 %v4875, 7
    %v4877 = vsub.s32 %v4874, %v4876
    %v4878 = vrot.slane %v4870, %v4877
    %v4880 = vunpack.c.l.s4 1983009808
    %v4881 = vunpack.c.0.s8 %v4880
    %v4882 = vlaneseq
    %v4883 = vshrl.u32 %v4882, 7
    %v4884 = vsub.s32 %v4881, %v4883
    %v4885 = vrot.slane %v4871, %v4884
    %v4886 = vcombine.low %v4878, %v4885
    %v4887 = vcombine.low %v4784, %v4785
    %v4888 = vcombine.low %v4786, %v4787
    %v4890 = vunpack.c.l.s4 1983009808
    %v4891 = vunpack.c.0.s8 %v4890
    %v4892 = vlaneseq
    %v4893 = vshrl.u32 %v4892, 7
    %v4894 = vsub.s32 %v4891, %v4893
    %v4895 = vrot.slane %v4887, %v4894
    %v4897 = vunpack.c.l.s4 1983009808
    %v4898 = vunpack.c.0.s8 %v4897
    %v4899 = vlaneseq
    %v4900 = vshrl.u32 %v4899, 7
    %v4901 = vsub.s32 %v4898, %v4900
    %v4902 = vrot.slane %v4888, %v4901
    %v4903 = vcombine.low %v4895, %v4902
    %v4904 = vcombine.low %v4788, %v4789
    %v4905 = vcombine.low %v4790, %v4791
    %v4907 = vunpack.c.l.s4 1983009808
    %v4908 = vunpack.c.0.s8 %v4907
    %v4909 = vlaneseq
    %v4910 = vshrl.u32 %v4909, 7
    %v4911 = vsub.s32 %v4908, %v4910
    %v4912 = vrot.slane %v4904, %v4911
    %v4914 = vunpack.c.l.s4 1983009808
    %v4915 = vunpack.c.0.s8 %v4914
    %v4916 = vlaneseq
    %v4917 = vshrl.u32 %v4916, 7
    %v4918 = vsub.s32 %v4915, %v4917
    %v4919 = vrot.slane %v4905, %v4918
    %v4920 = vcombine.low %v4912, %v4919
    %v4921 = vcombine.low %v4792, %v4793
    %v4922 = vcombine.low %v4794, %v4795
    %v4924 = vunpack.c.l.s4 1983009808
    %v4925 = vunpack.c.0.s8 %v4924
    %v4926 = vlaneseq
    %v4927 = vshrl.u32 %v4926, 7
    %v4928 = vsub.s32 %v4925, %v4927
    %v4929 = vrot.slane %v4921, %v4928
    %v4931 = vunpack.c.l.s4 1983009808
    %v4932 = vunpack.c.0.s8 %v4931
    %v4933 = vlaneseq
    %v4934 = vshrl.u32 %v4933, 7
    %v4935 = vsub.s32 %v4932, %v4934
    %v4936 = vrot.slane %v4922, %v4935
    %v4937 = vcombine.low %v4929, %v4936
    %v4938 = vcombine.low %v4796, %v4797
    %v4939 = vcombine.low %v4798, %v4799
    %v4941 = vunpack.c.l.s4 1983009808
    %v4942 = vunpack.c.0.s8 %v4941
    %v4943 = vlaneseq
    %v4944 = vshrl.u32 %v4943, 7
    %v4945 = vsub.s32 %v4942, %v4944
    %v4946 = vrot.slane %v4938, %v4945
    %v4948 = vunpack.c.l.s4 1983009808
    %v4949 = vunpack.c.0.s8 %v4948
    %v4950 = vlaneseq
    %v4951 = vshrl.u32 %v4950, 7
    %v4952 = vsub.s32 %v4949, %v4951
    %v4953 = vrot.slane %v4939, %v4952
    %v4954 = vcombine.low %v4946, %v4953
    %v4955 = vcombine.low %v4800, %v4801
    %v4956 = vcombine.low %v4802, %v4803
    %v4958 = vunpack.c.l.s4 1983009808
    %v4959 = vunpack.c.0.s8 %v4958
    %v4960 = vlaneseq
    %v4961 = vshrl.u32 %v4960, 7
    %v4962 = vsub.s32 %v4959, %v4961
    %v4963 = vrot.slane %v4955, %v4962
    %v4965 = vunpack.c.l.s4 1983009808
    %v4966 = vunpack.c.0.s8 %v4965
    %v4967 = vlaneseq
    %v4968 = vshrl.u32 %v4967, 7
    %v4969 = vsub.s32 %v4966, %v4968
    %v4970 = vrot.slane %v4956, %v4969
    %v4971 = vcombine.low %v4963, %v4970
    %vm4972 = vcmask 1044484
    %v4973 = vsel %vm4972, %v4852, %v4852
    %vm4974 = vcmask 1046534
    %v4975 = vsel %vm4974, %v4852, %v4973
    %v4976 = vrot.slane %v4920, 7
    %v4977 = vsel %vm2765, %v4976, %v4975
    %vm4978 = vcmask 1043459
    %v4979 = vsel %vm4978, %v4976, %v4977
    %vm4980 = vcmask 1045509
    %v4981 = vsel %vm4980, %v4976, %v4979
    %vm4982 = vcmask 1047559
    %v4983 = vsel %vm4982, %v4976, %v4981
    %v4984 = vsel %vm4972, %v4869, %v4869
    %v4985 = vsel %vm4974, %v4869, %v4984
    %v4986 = vrot.slane %v4937, 7
    %v4987 = vsel %vm2765, %v4986, %v4985
    %v4988 = vsel %vm4978, %v4986, %v4987
    %v4989 = vsel %vm4980, %v4986, %v4988
    %v4990 = vsel %vm4982, %v4986, %v4989
    %v4991 = vsel %vm4972, %v4886, %v4886
    %v4992 = vsel %vm4974, %v4886, %v4991
    %v4993 = vrot.slane %v4954, 7
    %v4994 = vsel %vm2765, %v4993, %v4992
    %v4995 = vsel %vm4978, %v4993, %v4994
    %v4996 = vsel %vm4980, %v4993, %v4995
    %v4997 = vsel %vm4982, %v4993, %v4996
    %v4998 = vsel %vm4972, %v4903, %v4903
    %v4999 = vsel %vm4974, %v4903, %v4998
    %v5000 = vrot.slane %v4971, 7
    %v5001 = vsel %vm2765, %v5000, %v4999
    %v5002 = vsel %vm4978, %v5000, %v5001
    %v5003 = vsel %vm4980, %v5000, %v5002
    %v5004 = vsel %vm4982, %v5000, %v5003
    %5009 = vst [vmem:[#allocation18] sm:$0xff] %v4983
    %5010 = vst [vmem:[#allocation18 + $0x8] sm:$0xff] %v4990
    %5011 = vst [vmem:[#allocation18 + $0x10] sm:$0xff] %v4997
    %5012 = vst [vmem:[#allocation18 + $0x18] sm:$0xff] %v5004
    %v5013 = vlaneseq
    %v5014 = vshrl.u32 %v5013, 7
    %v5015 = vsub.s32 %v2756, %v5014
    %v5016 = vrot.slane %v4461, %v5015
    %v5017 = vlaneseq
    %v5018 = vshrl.u32 %v5017, 7
    %v5019 = vsub.s32 %v2756, %v5018
    %v5020 = vrot.slane %v4466, %v5019
    %v5021 = vsel %vm2765, %v5020, %v5016
    %5023 = vst.msk [vmem:[#allocation19] sm:$0x3] %vm2768, %v5021
    // Predicated region
    $region82: #{tpu_custom_call.1} parent=1 // pred_check
      _
    $region83: #{tpu_custom_call.1} parent=1 // pred_check_branch
      %5025 = sbr.rel (0) target = $region85
    $region84: #{tpu_custom_call.1} parent=1 // pred_region
      %s5027 = ssub.s32 512, 512
      %5028 = vsyncadd [#allocation7], %s5027
      %s5030 = sshll.u32 [#allocation18], 4
      %s5031 = int_to_ptr.vmem [resolvable:$true] %s5030
      %5033 = dma.vmem_to_hbm [thread:$0]  %s5031, 512, %s13, [#allocation7]
    $region85: #{tpu_custom_call.1} parent=1 // pred_fallthru
      _
    // Predicated region
    $region86: #{tpu_custom_call.1} parent=1 // pred_check
      _
    $region87: #{tpu_custom_call.1} parent=1 // pred_check_branch
      %5035 = sbr.rel (0) target = $region89
    $region88: #{tpu_custom_call.1} parent=1 // pred_region
      %s5037 = ssub.s32 32, 32
      %5038 = vsyncadd [#allocation20], %s5037
      %s5040 = sshll.u32 [#allocation19], 4
      %s5041 = int_to_ptr.vmem [resolvable:$true] %s5040
      %5043 = dma.vmem_to_hbm [thread:$0]  %s5041, 32, %s14, [#allocation20]
    $region89: #{tpu_custom_call.1} parent=1 // pred_fallthru
      _
    // Predicated region
    $region90: #{tpu_custom_call.1} parent=1 // pred_check
      _
    $region91: #{tpu_custom_call.1} parent=1 // pred_check_branch
      %5045 = sbr.rel (0) target = $region93
    $region92: #{tpu_custom_call.1} parent=1 // pred_region
      %5046 = dma.done [#allocation7], 512
    $region93: #{tpu_custom_call.1} parent=1 // pred_fallthru
      _
    // Predicated region
    $region94: #{tpu_custom_call.1} parent=1 // pred_check
      _
    $region95: #{tpu_custom_call.1} parent=1 // pred_check_branch
      %5048 = sbr.rel (0) target = $region97
    $region96: #{tpu_custom_call.1} parent=1 // pred_region
      %5049 = dma.done [#allocation20], 32
    $region97: #{tpu_custom_call.1} parent=1 // pred_fallthru
      _
    %5050 = vsyncpa [#allocation6], 1
    %5051 = vsyncpa [#allocation10], 1
    %5052 = vsyncpa [#allocation13], 1
    %5053 = vsyncpa [#allocation16], 1
    %5054 = vsyncpa [#allocation7], 1
    %5055 = vsyncpa [#allocation20], 1
    %5056 = vsyncpa [#allocation8], 1
  %5057 = vsyncmov [#allocation4]
  %s5058 = vpop.sfrf %5057
  %p5059 = scmp.eq.s32.totalorder %s5058, 0
  %p5060 = pneg %p5059
  %5062 = shalt.err (%p5060)
  %s5063 = scalar_lea.sflag [#allocation4], 1
  %5064 = vsyncmov %s5063
  %s5065 = vpop.sfrf %5064
  %p5066 = scmp.eq.s32.totalorder %s5065, 0
  %p5067 = pneg %p5066
  %5069 = shalt.err (%p5067)

</llo_original>
